<compile_context>
chip_gen: v7x
topology: tpu7x:2x2x1
jax: 0.10.0
libtpu: 0.0.40
codegen_flags: <defaults>
</compile_context>

<pallas_src>
import functools

import numpy as np
import jax
import jax.numpy as jnp
from jax.experimental import pallas as pl
from jax.experimental.pallas import tpu as pltpu

# ---- Config (the PyTorch module pulls these from `Config`) -------------------
LATENT_DIM = 3
RESOLUTION = 16          # input spatial resolution
IMG_N_CHANNELS = 3       # image channels
VAE_CHANNELS = (4, 8)    # config.vae_channels
DEEP_SPREAD = False      # config.deep_spread
LEAKY_SLOPE = 0.01       # nn.LeakyReLU default negative_slope

CONV_NECK_LEN = RESOLUTION // 2 ** len(VAE_CHANNELS)
CONV_NECK_DIM = VAE_CHANNELS[-1] * CONV_NECK_LEN ** 2

LAT_PAD = 8              # latent dim zero-padded to a sublane-friendly width
IMG_DIM = IMG_N_CHANNELS * RESOLUTION * RESOLUTION

# Static per-layer activation schedule of the fused kernel:
#   encoder convs -> (fcMu|fcVar + reparameterize) -> fcBeforeDecode ->
#   decoder ConvT's -> final ConvT -> final Conv (+ tanh)
ACTS = (("leaky_relu",) * len(VAE_CHANNELS)
        + ("reparam", "none")
        + ("leaky_relu",) * (len(VAE_CHANNELS) - 1)
        + ("leaky_relu", "tanh"))
# TODO(synk): deep_spread=True (Linear(3,8)+LeakyReLU+Linear(8,neck)) is not
# wired; the config used here (and in the reference init) is deep_spread=False.


# ---------------------------- Fused Pallas kernel ----------------------------
def _vae_fused_kernel(*refs, acts):
    """refs = (x, eps, w0, b0, ..., w{L-1}, b{L-1}, recon, mu, log_var, z).

    Every layer is one lane-dense MXU matmul (B, K) @ (K, N) + (1, N) followed
    by its activation on the VPU/EUP.  All intermediates stay in VMEM/vregs;
    the only HBM traffic is the operand DMA-in and the output DMA-out that
    pallas_call itself performs.
    """
    n_layers = len(acts)
    x_ref, eps_ref = refs[0], refs[1]
    w_refs = refs[2:2 + 2 * n_layers:2]
    b_refs = refs[3:2 + 2 * n_layers:2]
    recon_ref, mu_ref, logvar_ref, z_ref = refs[2 + 2 * n_layers:]

    h = x_ref[...]
    for w_ref, b_ref, act in zip(w_refs, b_refs, acts):
        a = jnp.dot(h, w_ref[...], preferred_element_type=jnp.float32) + b_ref[...]
        if act == "leaky_relu":
            h = jnp.where(a >= 0, a, LEAKY_SLOPE * a)
        elif act == "tanh":
            h = jnp.tanh(a)
        elif act == "reparam":
            # `a` is (B, 2*LAT_PAD) packed as [mu | 0-pad | log_var | 0-pad].
            mu_p = a[:, :LAT_PAD]
            logvar_p = a[:, LAT_PAD:2 * LAT_PAD]
            z_p = mu_p + eps_ref[...] * jnp.exp(0.5 * logvar_p)
            mu_ref[...] = mu_p[:, :LATENT_DIM]
            logvar_ref[...] = logvar_p[:, :LATENT_DIM]
            z_ref[...] = z_p[:, :LATENT_DIM]
            h = z_p                      # zero-padded latent feeds the decoder
        else:  # "none"  (fcBeforeDecode has no activation when deep_spread=False)
            h = a
    recon_ref[...] = h.astype(recon_ref.dtype)


def vae_forward(packed, x, eps):
    """x: (B, C, H, W) NCHW, eps: (B, LATENT_DIM). Returns (recon, mu, log_var, z)."""
    B = x.shape[0]
    x_flat = x.reshape(B, -1).astype(jnp.float32)               # NCHW flatten (metadata only)
    eps_p = jnp.pad(eps.astype(jnp.float32),
                    ((0, 0), (0, LAT_PAD - LATENT_DIM)))        # (B, LAT_PAD)

    vmem = pl.BlockSpec(memory_space=pltpu.MemorySpace.VMEM)
    n_in = 2 + len(packed)
    # For large batches, add a grid over the row axis (blocks of 256-512 rows,
    # dimension_semantics=("parallel",)) so v7x's 2 TCs split the work; at B=2
    # a single grid-less invocation is optimal.
    recon_flat, mu, log_var, z = pl.pallas_call(
        functools.partial(_vae_fused_kernel, acts=ACTS),
        out_shape=(jax.ShapeDtypeStruct((B, IMG_DIM), jnp.float32),
                   jax.ShapeDtypeStruct((B, LATENT_DIM), jnp.float32),
                   jax.ShapeDtypeStruct((B, LATENT_DIM), jnp.float32),
                   jax.ShapeDtypeStruct((B, LATENT_DIM), jnp.float32)),
        in_specs=[vmem] * n_in,
        out_specs=(vmem, vmem, vmem, vmem),
        compiler_params=pltpu.CompilerParams(vmem_limit_bytes=32 * 1024 * 1024),
    )(x_flat, eps_p, *packed)

    recon = recon_flat.reshape(B, IMG_N_CHANNELS, RESOLUTION, RESOLUTION)
    return recon, mu, log_var, z


# ----------------- init-time weight folding (numpy, not traced) ---------------
def _conv2d_dense(w, b, H, W, stride, padding):
    """nn.Conv2d(w:(Cout,Cin,k,k)) -> dense (Cin*H*W, Cout*Ho*Wo) matmul operand
    acting on the NCHW-flattened feature vector, plus flattened bias."""
    Cout, Cin, k, _ = w.shape
    Ho = (H + 2 * padding - k) // stride + 1
    Wo = (W + 2 * padding - k) // stride + 1
    A = np.zeros((Cout, Ho, Wo, Cin, H, W), np.float32)
    for i in range(k):
        for j in range(k):
            for ho in range(Ho):
                h_in = stride * ho + i - padding
                if h_in < 0 or h_in >= H:
                    continue
                for wo in range(Wo):
                    w_in = stride * wo + j - padding
                    if w_in < 0 or w_in >= W:
                        continue
                    A[:, ho, wo, :, h_in, w_in] += w[:, :, i, j]
    Wd = A.reshape(Cout * Ho * Wo, Cin * H * W).T.copy()
    bias = np.repeat(np.asarray(b, np.float32), Ho * Wo)
    return Wd, bias, Ho, Wo


def _convT2d_dense(w, b, H, W, stride, padding, output_padding):
    """nn.ConvTranspose2d(w:(Cin,Cout,k,k)) -> dense (Cin*H*W, Cout*Ho*Wo) operand."""
    Cin, Cout, k, _ = w.shape
    Ho = (H - 1) * stride - 2 * padding + k + output_padding
    Wo = (W - 1) * stride - 2 * padding + k + output_padding
    A = np.zeros((Cout, Ho, Wo, Cin, H, W), np.float32)
    for i in range(k):
        for j in range(k):
            for h_in in range(H):
                oh = stride * h_in + i - padding
                if oh < 0 or oh >= Ho:
                    continue
                for w_in in range(W):
                    ow = stride * w_in + j - padding
                    if ow < 0 or ow >= Wo:
                        continue
                    A[:, oh, ow, :, h_in, w_in] += w[:, :, i, j].T
    Wd = A.reshape(Cout * Ho * Wo, Cin * H * W).T.copy()
    bias = np.repeat(np.asarray(b, np.float32), Ho * Wo)
    return Wd, bias, Ho, Wo


def pack_params(params):
    """Fold every layer into a lane-dense (K, N) weight + (1, N) bias operand.
    Runs once at init; nothing here executes per forward pass."""
    packed = []

    def add(wd, bd):
        packed.append(jnp.asarray(wd, jnp.float32))
        packed.append(jnp.asarray(bd, jnp.float32).reshape(1, -1))

    # encoder convs (stride 2, pad 1)
    h = w = RESOLUTION
    for layer in params["encoder"]:
        Wd, bd, h, w = _conv2d_dense(np.asarray(layer["w"]), np.asarray(layer["b"]),
                                     h, w, stride=2, padding=1)
        add(Wd, bd)

    # fcMu + fcVar fused into one matmul; each half padded LATENT_DIM -> LAT_PAD
    w_mu = np.asarray(params["fcMu"]["w"], np.float32)      # (LATENT_DIM, neck)
    w_var = np.asarray(params["fcVar"]["w"], np.float32)
    Wmv = np.zeros((CONV_NECK_DIM, 2 * LAT_PAD), np.float32)
    Wmv[:, :LATENT_DIM] = w_mu.T
    Wmv[:, LAT_PAD:LAT_PAD + LATENT_DIM] = w_var.T
    bmv = np.zeros((2 * LAT_PAD,), np.float32)
    bmv[:LATENT_DIM] = np.asarray(params["fcMu"]["b"], np.float32)
    bmv[LAT_PAD:LAT_PAD + LATENT_DIM] = np.asarray(params["fcVar"]["b"], np.float32)
    add(Wmv, bmv)

    # fcBeforeDecode: K padded LATENT_DIM -> LAT_PAD (extra rows are zero)
    w_fd = np.asarray(params["fcBeforeDecode"]["w"], np.float32)   # (neck, LATENT_DIM)
    Wfd = np.zeros((LAT_PAD, CONV_NECK_DIM), np.float32)
    Wfd[:LATENT_DIM, :] = w_fd.T
    add(Wfd, np.asarray(params["fcBeforeDecode"]["b"], np.float32))

    # decoder ConvTranspose layers (stride 2, pad 1, output_pad 1)
    h = w = CONV_NECK_LEN
    for layer in params["decoder"]:
        Wd, bd, h, w = _convT2d_dense(np.asarray(layer["w"]), np.asarray(layer["b"]),
                                      h, w, stride=2, padding=1, output_padding=1)
        add(Wd, bd)

    # final ConvTranspose + final Conv (tanh applied in-kernel)
    Wd, bd, h, w = _convT2d_dense(np.asarray(params["final_convT"]["w"]),
                                  np.asarray(params["final_convT"]["b"]),
                                  h, w, stride=2, padding=1, output_padding=1)
    add(Wd, bd)
    Wd, bd, h, w = _conv2d_dense(np.asarray(params["final_conv"]["w"]),
                                 np.asarray(params["final_conv"]["b"]),
                                 h, w, stride=1, padding=1)
    add(Wd, bd)

    assert len(packed) == 2 * len(ACTS)
    assert (h, w) == (RESOLUTION, RESOLUTION)
    return tuple(packed)


# ------------------------------ Parameters -----------------------------------
def init_params(key):
    keys = list(jax.random.split(key, 64))
    it = iter(keys)

    def nrm(shape, scale=0.05):
        return jax.random.normal(next(it), shape, jnp.float32) * scale

    params = {}
    enc = []
    last_c = IMG_N_CHANNELS
    for c in VAE_CHANNELS:
        enc.append({"w": nrm((c, last_c, 3, 3)), "b": nrm((c,))})
        last_c = c
    params["encoder"] = enc
    params["fcMu"] = {"w": nrm((LATENT_DIM, CONV_NECK_DIM)), "b": nrm((LATENT_DIM,))}
    params["fcVar"] = {"w": nrm((LATENT_DIM, CONV_NECK_DIM)), "b": nrm((LATENT_DIM,))}
    # deep_spread == False -> single Linear(LATENT_DIM, conv_neck_dim)
    params["fcBeforeDecode"] = {"w": nrm((CONV_NECK_DIM, LATENT_DIM)),
                                "b": nrm((CONV_NECK_DIM,))}
    dec = []
    for c0, c1 in zip(VAE_CHANNELS[:0:-1], VAE_CHANNELS[-2::-1]):
        dec.append({"w": nrm((c0, c1, 3, 3)), "b": nrm((c1,))})  # ConvT: (in, out, k, k)
    params["decoder"] = dec
    c0 = VAE_CHANNELS[0]
    params["final_convT"] = {"w": nrm((c0, c0, 3, 3)), "b": nrm((c0,))}
    params["final_conv"] = {"w": nrm((IMG_N_CHANNELS, c0, 3, 3)),
                            "b": nrm((IMG_N_CHANNELS,))}
    return params


# ---------------------------------- main --------------------------------------
if __name__ == "__main__":
    key = jax.random.PRNGKey(0)
    k_params, k_x, k_eps = jax.random.split(key, 3)
    params = init_params(k_params)
    packed = pack_params(params)          # one-time numpy weight folding

    batch = 2
    x = jax.random.normal(k_x, (batch, IMG_N_CHANNELS, RESOLUTION, RESOLUTION),
                          jnp.float32)
    eps = jax.random.normal(k_eps, (batch, LATENT_DIM), jnp.float32)

    fwd = jax.jit(vae_forward)
    recon, mu, log_var, z = fwd(packed, x, eps)
    jax.block_until_ready((recon, mu, log_var, z))

    assert recon.shape == (batch, IMG_N_CHANNELS, RESOLUTION, RESOLUTION)
    assert mu.shape == (batch, LATENT_DIM)
    assert log_var.shape == (batch, LATENT_DIM)
    assert z.shape == (batch, LATENT_DIM)
    assert bool(jnp.isfinite(recon).all())
    assert bool(jnp.isfinite(z).all())
    print("KERNEL_OK")
</pallas_src>

<mosaic_0001>
module attributes {stable_mosaic.version = 11 : i64} {
  func.func @_vae_fused_kernel(%arg0: memref<2x768xf32, #tpu.memory_space<vmem>>, %arg1: memref<2x8xf32, #tpu.memory_space<vmem>>, %arg2: memref<768x256xf32, #tpu.memory_space<vmem>>, %arg3: memref<1x256xf32, #tpu.memory_space<vmem>>, %arg4: memref<256x128xf32, #tpu.memory_space<vmem>>, %arg5: memref<1x128xf32, #tpu.memory_space<vmem>>, %arg6: memref<128x16xf32, #tpu.memory_space<vmem>>, %arg7: memref<1x16xf32, #tpu.memory_space<vmem>>, %arg8: memref<8x128xf32, #tpu.memory_space<vmem>>, %arg9: memref<1x128xf32, #tpu.memory_space<vmem>>, %arg10: memref<128x256xf32, #tpu.memory_space<vmem>>, %arg11: memref<1x256xf32, #tpu.memory_space<vmem>>, %arg12: memref<256x1024xf32, #tpu.memory_space<vmem>>, %arg13: memref<1x1024xf32, #tpu.memory_space<vmem>>, %arg14: memref<1024x768xf32, #tpu.memory_space<vmem>>, %arg15: memref<1x768xf32, #tpu.memory_space<vmem>>, %arg16: memref<2x768xf32, #tpu.memory_space<vmem>>, %arg17: memref<2x3xf32, #tpu.memory_space<vmem>>, %arg18: memref<2x3xf32, #tpu.memory_space<vmem>>, %arg19: memref<2x3xf32, #tpu.memory_space<vmem>>) attributes {dimension_semantics = [], scalar_prefetch = 0 : i64, scratch_operands = 0 : i64, tpu.core_type = #tpu.core_type<tc>} {
    %c0 = arith.constant 0 : index
    %c0_0 = arith.constant 0 : index
    %0 = vector.load %arg0[%c0, %c0_0] : memref<2x768xf32, #tpu.memory_space<vmem>>, vector<2x768xf32>
    %c0_1 = arith.constant 0 : index
    %c0_2 = arith.constant 0 : index
    %1 = vector.load %arg2[%c0_1, %c0_2] : memref<768x256xf32, #tpu.memory_space<vmem>>, vector<768x256xf32>
    %cst = arith.constant dense<0.000000e+00> : vector<2x256xf32>
    %2 = tpu.matmul %0, %1, %cst {dimension_numbers = #tpu.dot_dimension_numbers<[1], [0], [0], [1], [0, 0, 1, 1], [], []>} : vector<2x768xf32>, vector<768x256xf32>, vector<2x256xf32> -> vector<2x256xf32>
    %c0_3 = arith.constant 0 : index
    %c0_4 = arith.constant 0 : index
    %3 = vector.load %arg3[%c0_3, %c0_4] : memref<1x256xf32, #tpu.memory_space<vmem>>, vector<1x256xf32>
    %4 = vector.broadcast %3 : vector<1x256xf32> to vector<2x256xf32>
    %5 = arith.addf %2, %4 : vector<2x256xf32>
    %cst_5 = arith.constant 0.000000e+00 : f32
    %6 = vector.broadcast %cst_5 : f32 to vector<2x256xf32>
    %7 = arith.cmpf oge, %5, %6 : vector<2x256xf32>
    %cst_6 = arith.constant 0.00999999977 : f32
    %8 = vector.broadcast %cst_6 : f32 to vector<2x256xf32>
    %9 = arith.mulf %8, %5 : vector<2x256xf32>
    %10 = arith.select %7, %5, %9 : vector<2x256xi1>, vector<2x256xf32>
    %c0_7 = arith.constant 0 : index
    %c0_8 = arith.constant 0 : index
    %11 = vector.load %arg4[%c0_7, %c0_8] : memref<256x128xf32, #tpu.memory_space<vmem>>, vector<256x128xf32>
    %cst_9 = arith.constant dense<0.000000e+00> : vector<2x128xf32>
    %12 = tpu.matmul %10, %11, %cst_9 {dimension_numbers = #tpu.dot_dimension_numbers<[1], [0], [0], [1], [0, 0, 1, 1], [], []>} : vector<2x256xf32>, vector<256x128xf32>, vector<2x128xf32> -> vector<2x128xf32>
    %c0_10 = arith.constant 0 : index
    %c0_11 = arith.constant 0 : index
    %13 = vector.load %arg5[%c0_10, %c0_11] : memref<1x128xf32, #tpu.memory_space<vmem>>, vector<1x128xf32>
    %14 = vector.broadcast %13 : vector<1x128xf32> to vector<2x128xf32>
    %15 = arith.addf %12, %14 : vector<2x128xf32>
    %cst_12 = arith.constant 0.000000e+00 : f32
    %16 = vector.broadcast %cst_12 : f32 to vector<2x128xf32>
    %17 = arith.cmpf oge, %15, %16 : vector<2x128xf32>
    %cst_13 = arith.constant 0.00999999977 : f32
    %18 = vector.broadcast %cst_13 : f32 to vector<2x128xf32>
    %19 = arith.mulf %18, %15 : vector<2x128xf32>
    %20 = arith.select %17, %15, %19 : vector<2x128xi1>, vector<2x128xf32>
    %c0_14 = arith.constant 0 : index
    %c0_15 = arith.constant 0 : index
    %21 = vector.load %arg6[%c0_14, %c0_15] : memref<128x16xf32, #tpu.memory_space<vmem>>, vector<128x16xf32>
    %cst_16 = arith.constant dense<0.000000e+00> : vector<2x16xf32>
    %22 = tpu.matmul %20, %21, %cst_16 {dimension_numbers = #tpu.dot_dimension_numbers<[1], [0], [0], [1], [0, 0, 1, 1], [], []>} : vector<2x128xf32>, vector<128x16xf32>, vector<2x16xf32> -> vector<2x16xf32>
    %c0_17 = arith.constant 0 : index
    %c0_18 = arith.constant 0 : index
    %23 = vector.load %arg7[%c0_17, %c0_18] : memref<1x16xf32, #tpu.memory_space<vmem>>, vector<1x16xf32>
    %24 = vector.broadcast %23 : vector<1x16xf32> to vector<2x16xf32>
    %25 = arith.addf %22, %24 : vector<2x16xf32>
    %26 = vector.extract_strided_slice %25 {offsets = [0, 0], sizes = [2, 8], strides = [1, 1]} : vector<2x16xf32> to vector<2x8xf32>
    %27 = vector.extract_strided_slice %25 {offsets = [0, 8], sizes = [2, 8], strides = [1, 1]} : vector<2x16xf32> to vector<2x8xf32>
    %c0_19 = arith.constant 0 : index
    %c0_20 = arith.constant 0 : index
    %28 = vector.load %arg1[%c0_19, %c0_20] : memref<2x8xf32, #tpu.memory_space<vmem>>, vector<2x8xf32>
    %cst_21 = arith.constant 5.000000e-01 : f32
    %29 = vector.broadcast %cst_21 : f32 to vector<2x8xf32>
    %30 = arith.mulf %29, %27 : vector<2x8xf32>
    %31 = math.exp %30 : vector<2x8xf32>
    %32 = arith.mulf %28, %31 : vector<2x8xf32>
    %33 = arith.addf %26, %32 : vector<2x8xf32>
    %34 = vector.extract_strided_slice %26 {offsets = [0, 0], sizes = [2, 3], strides = [1, 1]} : vector<2x8xf32> to vector<2x3xf32>
    %c0_22 = arith.constant 0 : index
    %c0_23 = arith.constant 0 : index
    %35 = vector.load %arg17[%c0_22, %c0_23] : memref<2x3xf32, #tpu.memory_space<vmem>>, vector<2x3xf32>
    tpu.vector_store %arg17[%c0_22, %c0_23], %34 {strides = array<i32>} : memref<2x3xf32, #tpu.memory_space<vmem>>, vector<2x3xf32>,
    %36 = vector.extract_strided_slice %27 {offsets = [0, 0], sizes = [2, 3], strides = [1, 1]} : vector<2x8xf32> to vector<2x3xf32>
    %c0_24 = arith.constant 0 : index
    %c0_25 = arith.constant 0 : index
    %37 = vector.load %arg18[%c0_24, %c0_25] : memref<2x3xf32, #tpu.memory_space<vmem>>, vector<2x3xf32>
    tpu.vector_store %arg18[%c0_24, %c0_25], %36 {strides = array<i32>} : memref<2x3xf32, #tpu.memory_space<vmem>>, vector<2x3xf32>,
    %38 = vector.extract_strided_slice %33 {offsets = [0, 0], sizes = [2, 3], strides = [1, 1]} : vector<2x8xf32> to vector<2x3xf32>
    %c0_26 = arith.constant 0 : index
    %c0_27 = arith.constant 0 : index
    %39 = vector.load %arg19[%c0_26, %c0_27] : memref<2x3xf32, #tpu.memory_space<vmem>>, vector<2x3xf32>
    tpu.vector_store %arg19[%c0_26, %c0_27], %38 {strides = array<i32>} : memref<2x3xf32, #tpu.memory_space<vmem>>, vector<2x3xf32>,
    %c0_28 = arith.constant 0 : index
    %c0_29 = arith.constant 0 : index
    %40 = vector.load %arg8[%c0_28, %c0_29] : memref<8x128xf32, #tpu.memory_space<vmem>>, vector<8x128xf32>
    %cst_30 = arith.constant dense<0.000000e+00> : vector<2x128xf32>
    %41 = tpu.matmul %33, %40, %cst_30 {dimension_numbers = #tpu.dot_dimension_numbers<[1], [0], [0], [1], [0, 0, 1, 1], [], []>} : vector<2x8xf32>, vector<8x128xf32>, vector<2x128xf32> -> vector<2x128xf32>
    %c0_31 = arith.constant 0 : index
    %c0_32 = arith.constant 0 : index
    %42 = vector.load %arg9[%c0_31, %c0_32] : memref<1x128xf32, #tpu.memory_space<vmem>>, vector<1x128xf32>
    %43 = vector.broadcast %42 : vector<1x128xf32> to vector<2x128xf32>
    %44 = arith.addf %41, %43 : vector<2x128xf32>
    %c0_33 = arith.constant 0 : index
    %c0_34 = arith.constant 0 : index
    %45 = vector.load %arg10[%c0_33, %c0_34] : memref<128x256xf32, #tpu.memory_space<vmem>>, vector<128x256xf32>
    %cst_35 = arith.constant dense<0.000000e+00> : vector<2x256xf32>
    %46 = tpu.matmul %44, %45, %cst_35 {dimension_numbers = #tpu.dot_dimension_numbers<[1], [0], [0], [1], [0, 0, 1, 1], [], []>} : vector<2x128xf32>, vector<128x256xf32>, vector<2x256xf32> -> vector<2x256xf32>
    %c0_36 = arith.constant 0 : index
    %c0_37 = arith.constant 0 : index
    %47 = vector.load %arg11[%c0_36, %c0_37] : memref<1x256xf32, #tpu.memory_space<vmem>>, vector<1x256xf32>
    %48 = vector.broadcast %47 : vector<1x256xf32> to vector<2x256xf32>
    %49 = arith.addf %46, %48 : vector<2x256xf32>
    %cst_38 = arith.constant 0.000000e+00 : f32
    %50 = vector.broadcast %cst_38 : f32 to vector<2x256xf32>
    %51 = arith.cmpf oge, %49, %50 : vector<2x256xf32>
    %cst_39 = arith.constant 0.00999999977 : f32
    %52 = vector.broadcast %cst_39 : f32 to vector<2x256xf32>
    %53 = arith.mulf %52, %49 : vector<2x256xf32>
    %54 = arith.select %51, %49, %53 : vector<2x256xi1>, vector<2x256xf32>
    %c0_40 = arith.constant 0 : index
    %c0_41 = arith.constant 0 : index
    %55 = vector.load %arg12[%c0_40, %c0_41] : memref<256x1024xf32, #tpu.memory_space<vmem>>, vector<256x1024xf32>
    %cst_42 = arith.constant dense<0.000000e+00> : vector<2x1024xf32>
    %56 = tpu.matmul %54, %55, %cst_42 {dimension_numbers = #tpu.dot_dimension_numbers<[1], [0], [0], [1], [0, 0, 1, 1], [], []>} : vector<2x256xf32>, vector<256x1024xf32>, vector<2x1024xf32> -> vector<2x1024xf32>
    %c0_43 = arith.constant 0 : index
    %c0_44 = arith.constant 0 : index
    %57 = vector.load %arg13[%c0_43, %c0_44] : memref<1x1024xf32, #tpu.memory_space<vmem>>, vector<1x1024xf32>
    %58 = vector.broadcast %57 : vector<1x1024xf32> to vector<2x1024xf32>
    %59 = arith.addf %56, %58 : vector<2x1024xf32>
    %cst_45 = arith.constant 0.000000e+00 : f32
    %60 = vector.broadcast %cst_45 : f32 to vector<2x1024xf32>
    %61 = arith.cmpf oge, %59, %60 : vector<2x1024xf32>
    %cst_46 = arith.constant 0.00999999977 : f32
    %62 = vector.broadcast %cst_46 : f32 to vector<2x1024xf32>
    %63 = arith.mulf %62, %59 : vector<2x1024xf32>
    %64 = arith.select %61, %59, %63 : vector<2x1024xi1>, vector<2x1024xf32>
    %c0_47 = arith.constant 0 : index
    %c0_48 = arith.constant 0 : index
    %65 = vector.load %arg14[%c0_47, %c0_48] : memref<1024x768xf32, #tpu.memory_space<vmem>>, vector<1024x768xf32>
    %cst_49 = arith.constant dense<0.000000e+00> : vector<2x768xf32>
    %66 = tpu.matmul %64, %65, %cst_49 {dimension_numbers = #tpu.dot_dimension_numbers<[1], [0], [0], [1], [0, 0, 1, 1], [], []>} : vector<2x1024xf32>, vector<1024x768xf32>, vector<2x768xf32> -> vector<2x768xf32>
    %c0_50 = arith.constant 0 : index
    %c0_51 = arith.constant 0 : index
    %67 = vector.load %arg15[%c0_50, %c0_51] : memref<1x768xf32, #tpu.memory_space<vmem>>, vector<1x768xf32>
    %68 = vector.broadcast %67 : vector<1x768xf32> to vector<2x768xf32>
    %69 = arith.addf %66, %68 : vector<2x768xf32>
    %70 = math.tanh %69 : vector<2x768xf32>
    %c0_52 = arith.constant 0 : index
    %c0_53 = arith.constant 0 : index
    %71 = vector.load %arg16[%c0_52, %c0_53] : memref<2x768xf32, #tpu.memory_space<vmem>>, vector<2x768xf32>
    tpu.vector_store %arg16[%c0_52, %c0_53], %70 {strides = array<i32>} : memref<2x768xf32, #tpu.memory_space<vmem>>, vector<2x768xf32>,
    return
  }
}

</mosaic_0001>

<llo_original>
// kernel: vae_forward.1
$region0: #{vae_forward.1}
  #allocation0 [shape = 'u32[]', space=smem, size = 0x4, offset = 0x4, fixed_abs, tag = 'smem constant byte address 0x4 - core index']
  #allocation1 [shape = 'u32[144,128]{1,0:T(1,128)}', space=vmem, size = 0x12000, scoped, tag = 'internal scratch']
  %s0 = inlined_call_operand.vmem [shape: f32[2,768], index: 0, kind: input, shape index: {}]
  %s1 = inlined_call_operand.vmem [shape: f32[2,8], index: 1, kind: input, shape index: {}]
  %s2 = inlined_call_operand.hbm [shape: f32[768,256], index: 2, kind: input, shape index: {}]
  %s3 = inlined_call_operand.hbm [shape: f32[1,256], index: 3, kind: input, shape index: {}]
  %s4 = inlined_call_operand.hbm [shape: f32[256,128], index: 4, kind: input, shape index: {}]
  %s5 = inlined_call_operand.hbm [shape: f32[1,128], index: 5, kind: input, shape index: {}]
  %s6 = inlined_call_operand.vmem [shape: f32[128,16], index: 6, kind: input, shape index: {}]
  %s7 = inlined_call_operand.hbm [shape: f32[1,16], index: 7, kind: input, shape index: {}]
  %s8 = inlined_call_operand.hbm [shape: f32[8,128], index: 8, kind: input, shape index: {}]
  %s9 = inlined_call_operand.hbm [shape: f32[1,128], index: 9, kind: input, shape index: {}]
  %s10 = inlined_call_operand.hbm [shape: f32[128,256], index: 10, kind: input, shape index: {}]
  %s11 = inlined_call_operand.hbm [shape: f32[1,256], index: 11, kind: input, shape index: {}]
  %s12 = inlined_call_operand.hbm [shape: f32[256,1024], index: 12, kind: input, shape index: {}]
  %s13 = inlined_call_operand.hbm [shape: f32[1,1024], index: 13, kind: input, shape index: {}]
  %s14 = inlined_call_operand.hbm [shape: f32[1024,768], index: 14, kind: input, shape index: {}]
  %s15 = inlined_call_operand.hbm [shape: f32[1,768], index: 15, kind: input, shape index: {}]
  %s16 = inlined_call_operand.vmem [shape: f32[2,768], index: 16, kind: output, shape index: {0}]
  %s17 = inlined_call_operand.hbm [shape: f32[2,3], index: 17, kind: output, shape index: {1}]
  %s18 = inlined_call_operand.hbm [shape: f32[2,3], index: 18, kind: output, shape index: {2}]
  %s19 = inlined_call_operand.hbm [shape: f32[2,3], index: 19, kind: output, shape index: {3}]
  %20 = xla_tuple %s16, %s17, %s18, %s19
  %s21 = sld [smem:[#allocation0]]
  $region150: #{vae_forward.1} parent=0
    _
  %s23 = ssub.s32 1, %s21
  %s24 = scalar_select 0, %s23, %s21
  $region1: #{vae_forward.1} parent=0
    #allocation2 [shape = 'u8[786432]{0}', space=vmem, size = 0xc0000, scoped, tag = 'input window, operand 2, single buffered']
    #allocation3 [shape = 's32[1]{0}', space=sflag, size = 0x4, scoped, tag = 'scoped memory for vae_forward.1']
    #allocation4 [shape = 's32[1]{0}', space=sflag, size = 0x4, scoped, tag = 'scoped memory for vae_forward.1']
    #allocation5 [shape = 'u8[1024]{0}', space=vmem, size = 0x400, scoped, tag = 'input window, operand 3, single buffered']
    #allocation6 [shape = 's32[1]{0}', space=sflag, size = 0x4, scoped, tag = 'scoped memory for vae_forward.1']
    #allocation7 [shape = 'u8[131072]{0}', space=vmem, size = 0x20000, scoped, tag = 'input window, operand 4, single buffered']
    #allocation8 [shape = 'u8[512]{0}', space=vmem, size = 0x400, scoped, tag = 'input window, operand 5, single buffered']
    #allocation9 [shape = 's32[1]{0}', space=sflag, size = 0x4, scoped, tag = 'scoped memory for vae_forward.1']
    #allocation10 [shape = 'u8[512]{0}', space=vmem, size = 0x400, scoped, tag = 'input window, operand 7, single buffered']
    #allocation11 [shape = 'u8[4096]{0}', space=vmem, size = 0x1000, scoped, tag = 'input window, operand 8, single buffered']
    #allocation12 [shape = 's32[1]{0}', space=sflag, size = 0x4, scoped, tag = 'scoped memory for vae_forward.1']
    #allocation13 [shape = 'u8[512]{0}', space=vmem, size = 0x400, scoped, tag = 'input window, operand 9, single buffered']
    #allocation14 [shape = 'u8[131072]{0}', space=vmem, size = 0x20000, scoped, tag = 'input window, operand 10, single buffered']
    #allocation15 [shape = 's32[1]{0}', space=sflag, size = 0x4, scoped, tag = 'scoped memory for vae_forward.1']
    #allocation16 [shape = 'u8[1024]{0}', space=vmem, size = 0x400, scoped, tag = 'input window, operand 11, single buffered']
    #allocation17 [shape = 'u8[1048576]{0}', space=vmem, size = 0x100000, scoped, tag = 'input window, operand 12, single buffered']
    #allocation18 [shape = 's32[1]{0}', space=sflag, size = 0x4, scoped, tag = 'scoped memory for vae_forward.1']
    #allocation19 [shape = 'u8[4096]{0}', space=vmem, size = 0x1000, scoped, tag = 'input window, operand 13, single buffered']
    #allocation20 [shape = 'u8[3145728]{0}', space=vmem, size = 0x300000, scoped, tag = 'input window, operand 14, single buffered']
    #allocation21 [shape = 's32[1]{0}', space=sflag, size = 0x4, scoped, tag = 'scoped memory for vae_forward.1']
    #allocation22 [shape = 'u8[3072]{0}', space=vmem, size = 0xc00, scoped, tag = 'input window, operand 15, single buffered']
    #allocation23 [shape = 'u8[1024]{0}', space=vmem, size = 0x400, scoped, tag = 'output window, operand 1, single buffered']
    #allocation24 [shape = 'u8[1024]{0}', space=vmem, size = 0x400, scoped, tag = 'output window, operand 2, single buffered']
    #allocation25 [shape = 's32[1]{0}', space=sflag, size = 0x4, scoped, tag = 'scoped memory for vae_forward.1']
    #allocation26 [shape = 'u8[1024]{0}', space=vmem, size = 0x400, scoped, tag = 'output window, operand 3, single buffered']
    %25 = vsyncpa [#allocation3], 0
    %26 = vsyncpa [#allocation6], 0
    %27 = vsyncpa [#allocation9], 0
    %28 = vsyncpa [#allocation12], 0
    %29 = vsyncpa [#allocation15], 0
    %30 = vsyncpa [#allocation18], 0
    %31 = vsyncpa [#allocation21], 0
    %32 = vsyncpa [#allocation4], 0
    %33 = vsyncpa [#allocation25], 0
    // Predicated region
    $region2: #{vae_forward.1} parent=1 // pred_check
      _
    $region3: #{vae_forward.1} parent=1 // pred_check_branch
      %35 = sbr.rel (0) target = $region5
    $region4: #{vae_forward.1} parent=1 // pred_region
      _
    $region5: #{vae_forward.1} parent=1 // pred_fallthru
      _
    // Predicated region
    $region6: #{vae_forward.1} parent=1 // pred_check
      _
    $region7: #{vae_forward.1} parent=1 // pred_check_branch
      %37 = sbr.rel (0) target = $region9
    $region8: #{vae_forward.1} parent=1 // pred_region
      _
    $region9: #{vae_forward.1} parent=1 // pred_fallthru
      _
    // Predicated region
    $region10: #{vae_forward.1} parent=1 // pred_check
      _
    $region11: #{vae_forward.1} parent=1 // pred_check_branch
      %39 = sbr.rel (0) target = $region13
    $region12: #{vae_forward.1} parent=1 // pred_region
      %s41 = ssub.s32 24576, 24576
      %42 = vsyncadd [#allocation3], %s41
      %s43 = sshll.u32 [#allocation2], 4
      %s44 = int_to_ptr.vmem [resolvable:$true] %s43
      %49 = dma.hbm_to_vmem [thread:$0]  %s2, 24576, %s44, [#allocation3], 256, 256, 16
    $region13: #{vae_forward.1} parent=1 // pred_fallthru
      _
    // Predicated region
    $region14: #{vae_forward.1} parent=1 // pred_check
      _
    $region15: #{vae_forward.1} parent=1 // pred_check_branch
      %51 = sbr.rel (0) target = $region17
    $region16: #{vae_forward.1} parent=1 // pred_region
      %s53 = ssub.s32 32, 32
      %54 = vsyncadd [#allocation6], %s53
      %s56 = sshll.u32 [#allocation5], 4
      %s57 = int_to_ptr.vmem [resolvable:$true] %s56
      %59 = dma.hbm_to_vmem [thread:$0]  %s3, 32, %s57, [#allocation6]
    $region17: #{vae_forward.1} parent=1 // pred_fallthru
      _
    // Predicated region
    $region18: #{vae_forward.1} parent=1 // pred_check
      _
    $region19: #{vae_forward.1} parent=1 // pred_check_branch
      %61 = sbr.rel (0) target = $region21
    $region20: #{vae_forward.1} parent=1 // pred_region
      %s63 = ssub.s32 4096, 4096
      %64 = vsyncadd [#allocation6], %s63
      %s65 = sshll.u32 [#allocation7], 4
      %s66 = int_to_ptr.vmem [resolvable:$true] %s65
      %71 = dma.hbm_to_vmem [thread:$0]  %s4, 4096, %s66, [#allocation6], 128, 128, 8
    $region21: #{vae_forward.1} parent=1 // pred_fallthru
      _
    // Predicated region
    $region22: #{vae_forward.1} parent=1 // pred_check
      _
    $region23: #{vae_forward.1} parent=1 // pred_check_branch
      %73 = sbr.rel (0) target = $region25
    $region24: #{vae_forward.1} parent=1 // pred_region
      %s75 = ssub.s32 16, 16
      %76 = vsyncadd [#allocation9], %s75
      %s78 = sshll.u32 [#allocation8], 4
      %s79 = int_to_ptr.vmem [resolvable:$true] %s78
      %81 = dma.hbm_to_vmem [thread:$0]  %s5, 16, %s79, [#allocation9]
    $region25: #{vae_forward.1} parent=1 // pred_fallthru
      _
    // Predicated region
    $region26: #{vae_forward.1} parent=1 // pred_check
      _
    $region27: #{vae_forward.1} parent=1 // pred_check_branch
      %83 = sbr.rel (0) target = $region29
    $region28: #{vae_forward.1} parent=1 // pred_region
      _
    $region29: #{vae_forward.1} parent=1 // pred_fallthru
      _
    // Predicated region
    $region30: #{vae_forward.1} parent=1 // pred_check
      _
    $region31: #{vae_forward.1} parent=1 // pred_check_branch
      %85 = sbr.rel (0) target = $region33
    $region32: #{vae_forward.1} parent=1 // pred_region
      %s87 = ssub.s32 16, 16
      %88 = vsyncadd [#allocation9], %s87
      %s90 = sshll.u32 [#allocation10], 4
      %s91 = int_to_ptr.vmem [resolvable:$true] %s90
      %93 = dma.hbm_to_vmem [thread:$0]  %s7, 16, %s91, [#allocation9]
    $region33: #{vae_forward.1} parent=1 // pred_fallthru
      _
    // Predicated region
    $region34: #{vae_forward.1} parent=1 // pred_check
      _
    $region35: #{vae_forward.1} parent=1 // pred_check_branch
      %95 = sbr.rel (0) target = $region37
    $region36: #{vae_forward.1} parent=1 // pred_region
      %s97 = ssub.s32 128, 128
      %98 = vsyncadd [#allocation12], %s97
      %s100 = sshll.u32 [#allocation11], 4
      %s101 = int_to_ptr.vmem [resolvable:$true] %s100
      %103 = dma.hbm_to_vmem [thread:$0]  %s8, 128, %s101, [#allocation12]
    $region37: #{vae_forward.1} parent=1 // pred_fallthru
      _
    // Predicated region
    $region38: #{vae_forward.1} parent=1 // pred_check
      _
    $region39: #{vae_forward.1} parent=1 // pred_check_branch
      %105 = sbr.rel (0) target = $region41
    $region40: #{vae_forward.1} parent=1 // pred_region
      %s107 = ssub.s32 16, 16
      %108 = vsyncadd [#allocation12], %s107
      %s110 = sshll.u32 [#allocation13], 4
      %s111 = int_to_ptr.vmem [resolvable:$true] %s110
      %113 = dma.hbm_to_vmem [thread:$0]  %s9, 16, %s111, [#allocation12]
    $region41: #{vae_forward.1} parent=1 // pred_fallthru
      _
    // Predicated region
    $region42: #{vae_forward.1} parent=1 // pred_check
      _
    $region43: #{vae_forward.1} parent=1 // pred_check_branch
      %115 = sbr.rel (0) target = $region45
    $region44: #{vae_forward.1} parent=1 // pred_region
      %s117 = ssub.s32 4096, 4096
      %118 = vsyncadd [#allocation15], %s117
      %s119 = sshll.u32 [#allocation14], 4
      %s120 = int_to_ptr.vmem [resolvable:$true] %s119
      %125 = dma.hbm_to_vmem [thread:$0]  %s10, 4096, %s120, [#allocation15], 256, 256, 16
    $region45: #{vae_forward.1} parent=1 // pred_fallthru
      _
    // Predicated region
    $region46: #{vae_forward.1} parent=1 // pred_check
      _
    $region47: #{vae_forward.1} parent=1 // pred_check_branch
      %127 = sbr.rel (0) target = $region49
    $region48: #{vae_forward.1} parent=1 // pred_region
      %s129 = ssub.s32 32, 32
      %130 = vsyncadd [#allocation15], %s129
      %s132 = sshll.u32 [#allocation16], 4
      %s133 = int_to_ptr.vmem [resolvable:$true] %s132
      %135 = dma.hbm_to_vmem [thread:$0]  %s11, 32, %s133, [#allocation15]
    $region49: #{vae_forward.1} parent=1 // pred_fallthru
      _
    // Predicated region
    $region50: #{vae_forward.1} parent=1 // pred_check
      _
    $region51: #{vae_forward.1} parent=1 // pred_check_branch
      %137 = sbr.rel (0) target = $region53
    $region52: #{vae_forward.1} parent=1 // pred_region
      %s139 = ssub.s32 32768, 32768
      %140 = vsyncadd [#allocation18], %s139
      %s141 = sshll.u32 [#allocation17], 4
      %s142 = int_to_ptr.vmem [resolvable:$true] %s141
      %147 = dma.hbm_to_vmem [thread:$0]  %s12, 32768, %s142, [#allocation18], 1024, 1024, 64
    $region53: #{vae_forward.1} parent=1 // pred_fallthru
      _
    // Predicated region
    $region54: #{vae_forward.1} parent=1 // pred_check
      _
    $region55: #{vae_forward.1} parent=1 // pred_check_branch
      %149 = sbr.rel (0) target = $region57
    $region56: #{vae_forward.1} parent=1 // pred_region
      %s151 = ssub.s32 128, 128
      %152 = vsyncadd [#allocation18], %s151
      %s154 = sshll.u32 [#allocation19], 4
      %s155 = int_to_ptr.vmem [resolvable:$true] %s154
      %157 = dma.hbm_to_vmem [thread:$0]  %s13, 128, %s155, [#allocation18]
    $region57: #{vae_forward.1} parent=1 // pred_fallthru
      _
    // Predicated region
    $region58: #{vae_forward.1} parent=1 // pred_check
      _
    $region59: #{vae_forward.1} parent=1 // pred_check_branch
      %159 = sbr.rel (0) target = $region61
    $region60: #{vae_forward.1} parent=1 // pred_region
      %s161 = ssub.s32 98304, 98304
      %162 = vsyncadd [#allocation21], %s161
      %s163 = sshll.u32 [#allocation20], 4
      %s164 = int_to_ptr.vmem [resolvable:$true] %s163
      %169 = dma.hbm_to_vmem [thread:$0]  %s14, 98304, %s164, [#allocation21], 768, 768, 48
    $region61: #{vae_forward.1} parent=1 // pred_fallthru
      _
    // Predicated region
    $region62: #{vae_forward.1} parent=1 // pred_check
      _
    $region63: #{vae_forward.1} parent=1 // pred_check_branch
      %171 = sbr.rel (0) target = $region65
    $region64: #{vae_forward.1} parent=1 // pred_region
      %s173 = ssub.s32 96, 96
      %174 = vsyncadd [#allocation21], %s173
      %s176 = sshll.u32 [#allocation22], 4
      %s177 = int_to_ptr.vmem [resolvable:$true] %s176
      %179 = dma.hbm_to_vmem [thread:$0]  %s15, 96, %s177, [#allocation21]
    $region65: #{vae_forward.1} parent=1 // pred_fallthru
      _
    // Predicated region
    $region66: #{vae_forward.1} parent=1 // pred_check
      _
    $region67: #{vae_forward.1} parent=1 // pred_check_branch
      %181 = sbr.rel (0) target = $region69
    $region68: #{vae_forward.1} parent=1 // pred_region
      %182 = dma.done [#allocation3], 24576
    $region69: #{vae_forward.1} parent=1 // pred_fallthru
      _
    // Predicated region
    $region70: #{vae_forward.1} parent=1 // pred_check
      _
    $region71: #{vae_forward.1} parent=1 // pred_check_branch
      %184 = sbr.rel (0) target = $region73
    $region72: #{vae_forward.1} parent=1 // pred_region
      %185 = dma.done [#allocation6], 32
    $region73: #{vae_forward.1} parent=1 // pred_fallthru
      _
    // Predicated region
    $region74: #{vae_forward.1} parent=1 // pred_check
      _
    $region75: #{vae_forward.1} parent=1 // pred_check_branch
      %187 = sbr.rel (0) target = $region77
    $region76: #{vae_forward.1} parent=1 // pred_region
      %188 = dma.done [#allocation6], 4096
    $region77: #{vae_forward.1} parent=1 // pred_fallthru
      _
    // Predicated region
    $region78: #{vae_forward.1} parent=1 // pred_check
      _
    $region79: #{vae_forward.1} parent=1 // pred_check_branch
      %190 = sbr.rel (0) target = $region81
    $region80: #{vae_forward.1} parent=1 // pred_region
      %191 = dma.done [#allocation9], 16
    $region81: #{vae_forward.1} parent=1 // pred_fallthru
      _
    // Predicated region
    $region82: #{vae_forward.1} parent=1 // pred_check
      _
    $region83: #{vae_forward.1} parent=1 // pred_check_branch
      %193 = sbr.rel (0) target = $region85
    $region84: #{vae_forward.1} parent=1 // pred_region
      %194 = dma.done [#allocation9], 16
    $region85: #{vae_forward.1} parent=1 // pred_fallthru
      _
    // Predicated region
    $region86: #{vae_forward.1} parent=1 // pred_check
      _
    $region87: #{vae_forward.1} parent=1 // pred_check_branch
      %196 = sbr.rel (0) target = $region89
    $region88: #{vae_forward.1} parent=1 // pred_region
      %197 = dma.done [#allocation12], 128
    $region89: #{vae_forward.1} parent=1 // pred_fallthru
      _
    // Predicated region
    $region90: #{vae_forward.1} parent=1 // pred_check
      _
    $region91: #{vae_forward.1} parent=1 // pred_check_branch
      %199 = sbr.rel (0) target = $region93
    $region92: #{vae_forward.1} parent=1 // pred_region
      %200 = dma.done [#allocation12], 16
    $region93: #{vae_forward.1} parent=1 // pred_fallthru
      _
    // Predicated region
    $region94: #{vae_forward.1} parent=1 // pred_check
      _
    $region95: #{vae_forward.1} parent=1 // pred_check_branch
      %202 = sbr.rel (0) target = $region97
    $region96: #{vae_forward.1} parent=1 // pred_region
      %203 = dma.done [#allocation15], 4096
    $region97: #{vae_forward.1} parent=1 // pred_fallthru
      _
    // Predicated region
    $region98: #{vae_forward.1} parent=1 // pred_check
      _
    $region99: #{vae_forward.1} parent=1 // pred_check_branch
      %205 = sbr.rel (0) target = $region101
    $region100: #{vae_forward.1} parent=1 // pred_region
      %206 = dma.done [#allocation15], 32
    $region101: #{vae_forward.1} parent=1 // pred_fallthru
      _
    // Predicated region
    $region102: #{vae_forward.1} parent=1 // pred_check
      _
    $region103: #{vae_forward.1} parent=1 // pred_check_branch
      %208 = sbr.rel (0) target = $region105
    $region104: #{vae_forward.1} parent=1 // pred_region
      %209 = dma.done [#allocation18], 32768
    $region105: #{vae_forward.1} parent=1 // pred_fallthru
      _
    // Predicated region
    $region106: #{vae_forward.1} parent=1 // pred_check
      _
    $region107: #{vae_forward.1} parent=1 // pred_check_branch
      %211 = sbr.rel (0) target = $region109
    $region108: #{vae_forward.1} parent=1 // pred_region
      %212 = dma.done [#allocation18], 128
    $region109: #{vae_forward.1} parent=1 // pred_fallthru
      _
    // Predicated region
    $region110: #{vae_forward.1} parent=1 // pred_check
      _
    $region111: #{vae_forward.1} parent=1 // pred_check_branch
      %214 = sbr.rel (0) target = $region113
    $region112: #{vae_forward.1} parent=1 // pred_region
      %215 = dma.done [#allocation21], 98304
    $region113: #{vae_forward.1} parent=1 // pred_fallthru
      _
    // Predicated region
    $region114: #{vae_forward.1} parent=1 // pred_check
      _
    $region115: #{vae_forward.1} parent=1 // pred_check_branch
      %217 = sbr.rel (0) target = $region117
    $region116: #{vae_forward.1} parent=1 // pred_region
      %218 = dma.done [#allocation21], 96
    $region117: #{vae_forward.1} parent=1 // pred_fallthru
      _
    %v219 = vld [vmem:[%s0] sm:$0xff]
    %v220 = vld [vmem:[%s0 + $0x8] sm:$0xf]
    %v221 = vld [vmem:[#allocation2] sm:$0xff]
    %v222 = vld [vmem:[#allocation2 + $0x8] sm:$0xff]
    %v223 = vld [vmem:[#allocation2 + $0x10] sm:$0xff]
    %v224 = vld [vmem:[#allocation2 + $0x18] sm:$0xff]
    %v225 = vld [vmem:[#allocation2 + $0x20] sm:$0xff]
    %v226 = vld [vmem:[#allocation2 + $0x28] sm:$0xff]
    %v227 = vld [vmem:[#allocation2 + $0x30] sm:$0xff]
    %v228 = vld [vmem:[#allocation2 + $0x38] sm:$0xff]
    %v229 = vld [vmem:[#allocation2 + $0x40] sm:$0xff]
    %v230 = vld [vmem:[#allocation2 + $0x48] sm:$0xff]
    %v231 = vld [vmem:[#allocation2 + $0x50] sm:$0xff]
    %v232 = vld [vmem:[#allocation2 + $0x58] sm:$0xff]
    %v233 = vld [vmem:[#allocation2 + $0x60] sm:$0xff]
    %v234 = vld [vmem:[#allocation2 + $0x68] sm:$0xff]
    %v235 = vld [vmem:[#allocation2 + $0x70] sm:$0xff]
    %v236 = vld [vmem:[#allocation2 + $0x78] sm:$0xff]
    %v237 = vld [vmem:[#allocation2 + $0x80] sm:$0xff]
    %v238 = vld [vmem:[#allocation2 + $0x88] sm:$0xff]
    %v239 = vld [vmem:[#allocation2 + $0x90] sm:$0xff]
    %v240 = vld [vmem:[#allocation2 + $0x98] sm:$0xff]
    %v241 = vld [vmem:[#allocation2 + $0xa0] sm:$0xff]
    %v242 = vld [vmem:[#allocation2 + $0xa8] sm:$0xff]
    %v243 = vld [vmem:[#allocation2 + $0xb0] sm:$0xff]
    %v244 = vld [vmem:[#allocation2 + $0xb8] sm:$0xff]
    %v245 = vld [vmem:[#allocation2 + $0xc0] sm:$0xff]
    %v246 = vld [vmem:[#allocation2 + $0xc8] sm:$0xff]
    %v247 = vld [vmem:[#allocation2 + $0xd0] sm:$0xff]
    %v248 = vld [vmem:[#allocation2 + $0xd8] sm:$0xff]
    %v249 = vld [vmem:[#allocation2 + $0xe0] sm:$0xff]
    %v250 = vld [vmem:[#allocation2 + $0xe8] sm:$0xff]
    %v251 = vld [vmem:[#allocation2 + $0xf0] sm:$0xff]
    %v252 = vld [vmem:[#allocation2 + $0xf8] sm:$0xff]
    %v253 = vld [vmem:[#allocation2 + $0x100] sm:$0xff]
    %v254 = vld [vmem:[#allocation2 + $0x108] sm:$0xff]
    %v255 = vld [vmem:[#allocation2 + $0x110] sm:$0xff]
    %v256 = vld [vmem:[#allocation2 + $0x118] sm:$0xff]
    %v257 = vld [vmem:[#allocation2 + $0x120] sm:$0xff]
    %v258 = vld [vmem:[#allocation2 + $0x128] sm:$0xff]
    %v259 = vld [vmem:[#allocation2 + $0x130] sm:$0xff]
    %v260 = vld [vmem:[#allocation2 + $0x138] sm:$0xff]
    %v261 = vld [vmem:[#allocation2 + $0x140] sm:$0xff]
    %v262 = vld [vmem:[#allocation2 + $0x148] sm:$0xff]
    %v263 = vld [vmem:[#allocation2 + $0x150] sm:$0xff]
    %v264 = vld [vmem:[#allocation2 + $0x158] sm:$0xff]
    %v265 = vld [vmem:[#allocation2 + $0x160] sm:$0xff]
    %v266 = vld [vmem:[#allocation2 + $0x168] sm:$0xff]
    %v267 = vld [vmem:[#allocation2 + $0x170] sm:$0xff]
    %v268 = vld [vmem:[#allocation2 + $0x178] sm:$0xff]
    %v269 = vld [vmem:[#allocation2 + $0x180] sm:$0xff]
    %v270 = vld [vmem:[#allocation2 + $0x188] sm:$0xff]
    %v271 = vld [vmem:[#allocation2 + $0x190] sm:$0xff]
    %v272 = vld [vmem:[#allocation2 + $0x198] sm:$0xff]
    %v273 = vld [vmem:[#allocation2 + $0x1a0] sm:$0xff]
    %v274 = vld [vmem:[#allocation2 + $0x1a8] sm:$0xff]
    %v275 = vld [vmem:[#allocation2 + $0x1b0] sm:$0xff]
    %v276 = vld [vmem:[#allocation2 + $0x1b8] sm:$0xff]
    %v277 = vld [vmem:[#allocation2 + $0x1c0] sm:$0xff]
    %v278 = vld [vmem:[#allocation2 + $0x1c8] sm:$0xff]
    %v279 = vld [vmem:[#allocation2 + $0x1d0] sm:$0xff]
    %v280 = vld [vmem:[#allocation2 + $0x1d8] sm:$0xff]
    %v281 = vld [vmem:[#allocation2 + $0x1e0] sm:$0xff]
    %v282 = vld [vmem:[#allocation2 + $0x1e8] sm:$0xff]
    %v283 = vld [vmem:[#allocation2 + $0x1f0] sm:$0xff]
    %v284 = vld [vmem:[#allocation2 + $0x1f8] sm:$0xff]
    %v285 = vld [vmem:[#allocation2 + $0x200] sm:$0xff]
    %v286 = vld [vmem:[#allocation2 + $0x208] sm:$0xff]
    %v287 = vld [vmem:[#allocation2 + $0x210] sm:$0xff]
    %v288 = vld [vmem:[#allocation2 + $0x218] sm:$0xff]
    %v289 = vld [vmem:[#allocation2 + $0x220] sm:$0xff]
    %v290 = vld [vmem:[#allocation2 + $0x228] sm:$0xff]
    %v291 = vld [vmem:[#allocation2 + $0x230] sm:$0xff]
    %v292 = vld [vmem:[#allocation2 + $0x238] sm:$0xff]
    %v293 = vld [vmem:[#allocation2 + $0x240] sm:$0xff]
    %v294 = vld [vmem:[#allocation2 + $0x248] sm:$0xff]
    %v295 = vld [vmem:[#allocation2 + $0x250] sm:$0xff]
    %v296 = vld [vmem:[#allocation2 + $0x258] sm:$0xff]
    %v297 = vld [vmem:[#allocation2 + $0x260] sm:$0xff]
    %v298 = vld [vmem:[#allocation2 + $0x268] sm:$0xff]
    %v299 = vld [vmem:[#allocation2 + $0x270] sm:$0xff]
    %v300 = vld [vmem:[#allocation2 + $0x278] sm:$0xff]
    %v301 = vld [vmem:[#allocation2 + $0x280] sm:$0xff]
    %v302 = vld [vmem:[#allocation2 + $0x288] sm:$0xff]
    %v303 = vld [vmem:[#allocation2 + $0x290] sm:$0xff]
    %v304 = vld [vmem:[#allocation2 + $0x298] sm:$0xff]
    %v305 = vld [vmem:[#allocation2 + $0x2a0] sm:$0xff]
    %v306 = vld [vmem:[#allocation2 + $0x2a8] sm:$0xff]
    %v307 = vld [vmem:[#allocation2 + $0x2b0] sm:$0xff]
    %v308 = vld [vmem:[#allocation2 + $0x2b8] sm:$0xff]
    %v309 = vld [vmem:[#allocation2 + $0x2c0] sm:$0xff]
    %v310 = vld [vmem:[#allocation2 + $0x2c8] sm:$0xff]
    %v311 = vld [vmem:[#allocation2 + $0x2d0] sm:$0xff]
    %v312 = vld [vmem:[#allocation2 + $0x2d8] sm:$0xff]
    %v313 = vld [vmem:[#allocation2 + $0x2e0] sm:$0xff]
    %v314 = vld [vmem:[#allocation2 + $0x2e8] sm:$0xff]
    %v315 = vld [vmem:[#allocation2 + $0x2f0] sm:$0xff]
    %v316 = vld [vmem:[#allocation2 + $0x2f8] sm:$0xff]
    %v317 = vld [vmem:[#allocation2 + $0x300] sm:$0xff]
    %v318 = vld [vmem:[#allocation2 + $0x308] sm:$0xff]
    %v319 = vld [vmem:[#allocation2 + $0x310] sm:$0xff]
    %v320 = vld [vmem:[#allocation2 + $0x318] sm:$0xff]
    %v321 = vld [vmem:[#allocation2 + $0x320] sm:$0xff]
    %v322 = vld [vmem:[#allocation2 + $0x328] sm:$0xff]
    %v323 = vld [vmem:[#allocation2 + $0x330] sm:$0xff]
    %v324 = vld [vmem:[#allocation2 + $0x338] sm:$0xff]
    %v325 = vld [vmem:[#allocation2 + $0x340] sm:$0xff]
    %v326 = vld [vmem:[#allocation2 + $0x348] sm:$0xff]
    %v327 = vld [vmem:[#allocation2 + $0x350] sm:$0xff]
    %v328 = vld [vmem:[#allocation2 + $0x358] sm:$0xff]
    %v329 = vld [vmem:[#allocation2 + $0x360] sm:$0xff]
    %v330 = vld [vmem:[#allocation2 + $0x368] sm:$0xff]
    %v331 = vld [vmem:[#allocation2 + $0x370] sm:$0xff]
    %v332 = vld [vmem:[#allocation2 + $0x378] sm:$0xff]
    %v333 = vld [vmem:[#allocation2 + $0x380] sm:$0xff]
    %v334 = vld [vmem:[#allocation2 + $0x388] sm:$0xff]
    %v335 = vld [vmem:[#allocation2 + $0x390] sm:$0xff]
    %v336 = vld [vmem:[#allocation2 + $0x398] sm:$0xff]
    %v337 = vld [vmem:[#allocation2 + $0x3a0] sm:$0xff]
    %v338 = vld [vmem:[#allocation2 + $0x3a8] sm:$0xff]
    %v339 = vld [vmem:[#allocation2 + $0x3b0] sm:$0xff]
    %v340 = vld [vmem:[#allocation2 + $0x3b8] sm:$0xff]
    %v341 = vld [vmem:[#allocation2 + $0x3c0] sm:$0xff]
    %v342 = vld [vmem:[#allocation2 + $0x3c8] sm:$0xff]
    %v343 = vld [vmem:[#allocation2 + $0x3d0] sm:$0xff]
    %v344 = vld [vmem:[#allocation2 + $0x3d8] sm:$0xff]
    %v345 = vld [vmem:[#allocation2 + $0x3e0] sm:$0xff]
    %v346 = vld [vmem:[#allocation2 + $0x3e8] sm:$0xff]
    %v347 = vld [vmem:[#allocation2 + $0x3f0] sm:$0xff]
    %v348 = vld [vmem:[#allocation2 + $0x3f8] sm:$0xff]
    %v349 = vld [vmem:[#allocation2 + $0x400] sm:$0xff]
    %v350 = vld [vmem:[#allocation2 + $0x408] sm:$0xff]
    %v351 = vld [vmem:[#allocation2 + $0x410] sm:$0xff]
    %v352 = vld [vmem:[#allocation2 + $0x418] sm:$0xff]
    %v353 = vld [vmem:[#allocation2 + $0x420] sm:$0xff]
    %v354 = vld [vmem:[#allocation2 + $0x428] sm:$0xff]
    %v355 = vld [vmem:[#allocation2 + $0x430] sm:$0xff]
    %v356 = vld [vmem:[#allocation2 + $0x438] sm:$0xff]
    %v357 = vld [vmem:[#allocation2 + $0x440] sm:$0xff]
    %v358 = vld [vmem:[#allocation2 + $0x448] sm:$0xff]
    %v359 = vld [vmem:[#allocation2 + $0x450] sm:$0xff]
    %v360 = vld [vmem:[#allocation2 + $0x458] sm:$0xff]
    %v361 = vld [vmem:[#allocation2 + $0x460] sm:$0xff]
    %v362 = vld [vmem:[#allocation2 + $0x468] sm:$0xff]
    %v363 = vld [vmem:[#allocation2 + $0x470] sm:$0xff]
    %v364 = vld [vmem:[#allocation2 + $0x478] sm:$0xff]
    %v365 = vld [vmem:[#allocation2 + $0x480] sm:$0xff]
    %v366 = vld [vmem:[#allocation2 + $0x488] sm:$0xff]
    %v367 = vld [vmem:[#allocation2 + $0x490] sm:$0xff]
    %v368 = vld [vmem:[#allocation2 + $0x498] sm:$0xff]
    %v369 = vld [vmem:[#allocation2 + $0x4a0] sm:$0xff]
    %v370 = vld [vmem:[#allocation2 + $0x4a8] sm:$0xff]
    %v371 = vld [vmem:[#allocation2 + $0x4b0] sm:$0xff]
    %v372 = vld [vmem:[#allocation2 + $0x4b8] sm:$0xff]
    %v373 = vld [vmem:[#allocation2 + $0x4c0] sm:$0xff]
    %v374 = vld [vmem:[#allocation2 + $0x4c8] sm:$0xff]
    %v375 = vld [vmem:[#allocation2 + $0x4d0] sm:$0xff]
    %v376 = vld [vmem:[#allocation2 + $0x4d8] sm:$0xff]
    %v377 = vld [vmem:[#allocation2 + $0x4e0] sm:$0xff]
    %v378 = vld [vmem:[#allocation2 + $0x4e8] sm:$0xff]
    %v379 = vld [vmem:[#allocation2 + $0x4f0] sm:$0xff]
    %v380 = vld [vmem:[#allocation2 + $0x4f8] sm:$0xff]
    %v381 = vld [vmem:[#allocation2 + $0x500] sm:$0xff]
    %v382 = vld [vmem:[#allocation2 + $0x508] sm:$0xff]
    %v383 = vld [vmem:[#allocation2 + $0x510] sm:$0xff]
    %v384 = vld [vmem:[#allocation2 + $0x518] sm:$0xff]
    %v385 = vld [vmem:[#allocation2 + $0x520] sm:$0xff]
    %v386 = vld [vmem:[#allocation2 + $0x528] sm:$0xff]
    %v387 = vld [vmem:[#allocation2 + $0x530] sm:$0xff]
    %v388 = vld [vmem:[#allocation2 + $0x538] sm:$0xff]
    %v389 = vld [vmem:[#allocation2 + $0x540] sm:$0xff]
    %v390 = vld [vmem:[#allocation2 + $0x548] sm:$0xff]
    %v391 = vld [vmem:[#allocation2 + $0x550] sm:$0xff]
    %v392 = vld [vmem:[#allocation2 + $0x558] sm:$0xff]
    %v393 = vld [vmem:[#allocation2 + $0x560] sm:$0xff]
    %v394 = vld [vmem:[#allocation2 + $0x568] sm:$0xff]
    %v395 = vld [vmem:[#allocation2 + $0x570] sm:$0xff]
    %v396 = vld [vmem:[#allocation2 + $0x578] sm:$0xff]
    %v397 = vld [vmem:[#allocation2 + $0x580] sm:$0xff]
    %v398 = vld [vmem:[#allocation2 + $0x588] sm:$0xff]
    %v399 = vld [vmem:[#allocation2 + $0x590] sm:$0xff]
    %v400 = vld [vmem:[#allocation2 + $0x598] sm:$0xff]
    %v401 = vld [vmem:[#allocation2 + $0x5a0] sm:$0xff]
    %v402 = vld [vmem:[#allocation2 + $0x5a8] sm:$0xff]
    %v403 = vld [vmem:[#allocation2 + $0x5b0] sm:$0xff]
    %v404 = vld [vmem:[#allocation2 + $0x5b8] sm:$0xff]
    %v405 = vld [vmem:[#allocation2 + $0x5c0] sm:$0xff]
    %v406 = vld [vmem:[#allocation2 + $0x5c8] sm:$0xff]
    %v407 = vld [vmem:[#allocation2 + $0x5d0] sm:$0xff]
    %v408 = vld [vmem:[#allocation2 + $0x5d8] sm:$0xff]
    %v409 = vld [vmem:[#allocation2 + $0x5e0] sm:$0xff]
    %v410 = vld [vmem:[#allocation2 + $0x5e8] sm:$0xff]
    %v411 = vld [vmem:[#allocation2 + $0x5f0] sm:$0xff]
    %v412 = vld [vmem:[#allocation2 + $0x5f8] sm:$0xff]
    %v413 = vld [vmem:[#allocation5] sm:$0x3]
    %v415 = vlaneseq
    %v416 = vshrl.u32 %v415, 7
    %v417 = vsub.s32 0, %v416
    %v418 = vrot.slane %v413, %v417
    %v419 = vlaneseq
    %v420 = vshrl.u32 %v419, 7
    %v421 = vsub.s32 1, %v420
    %v422 = vrot.slane %v413, %v421
    %v427 = vcombine.high %v219, %v219
    %v429 = vunpack.c.l.s4 1983009808
    %v430 = vunpack.c.0.s8 %v429
    %v431 = vlaneseq
    %v432 = vshrl.u32 %v431, 7
    %v433 = vsub.s32 %v430, %v432
    %v434 = vrot.slane %v219, %v433
    %v436 = vunpack.c.l.s4 1983009808
    %v437 = vunpack.c.0.s8 %v436
    %v438 = vlaneseq
    %v439 = vshrl.u32 %v438, 7
    %v440 = vsub.s32 %v437, %v439
    %v441 = vrot.slane %v427, %v440
    %v442 = vcombine.high %v434, %v434
    %v443 = vcombine.high %v441, %v441
    %v445 = vunpack.c.l.s4 1983009808
    %v446 = vunpack.c.0.s8 %v445
    %v447 = vlaneseq
    %v448 = vshrl.u32 %v447, 7
    %v449 = vsub.s32 %v446, %v448
    %v450 = vrot.slane %v220, %v449
    %v451 = vcombine.high %v450, %v450
    %458 = vmatprep.subr.mxu0 %v222
    %459 = vmatpush1.msra.mxu0 %v221
    %460 = vmatprep.subr.mxu0 %v224
    %461 = vmatpush1.msra.mxu0 %v223
    %462 = vmatprep.subr.mxu0 %v226
    %463 = vmatpush1.msra.mxu0 %v225
    %464 = vmatprep.subr.mxu0 %v228
    %465 = vmatpush1.msra.mxu0 %v227
    %466 = vmatprep.subr.mxu0 %v230
    %467 = vmatpush1.msra.mxu0 %v229
    %468 = vmatprep.subr.mxu0 %v232
    %469 = vmatpush1.msra.mxu0 %v231
    %470 = vmatprep.subr.mxu0 %v234
    %471 = vmatpush1.msra.mxu0 %v233
    %472 = vmatprep.subr.mxu0 %v236
    %473 = vmatpush1.msra.mxu0 %v235
    %474 = vmatprep.subr.mxu0 %v238
    %475 = vmatpush1.msra.mxu0 %v237
    %476 = vmatprep.subr.mxu0 %v240
    %477 = vmatpush1.msra.mxu0 %v239
    %478 = vmatprep.subr.mxu0 %v242
    %479 = vmatpush1.msra.mxu0 %v241
    %480 = vmatprep.subr.mxu0 %v244
    %481 = vmatpush1.msra.mxu0 %v243
    %482 = vmatprep.subr.mxu0 %v246
    %483 = vmatpush1.msra.mxu0 %v245
    %484 = vmatprep.subr.mxu0 %v248
    %485 = vmatpush1.msra.mxu0 %v247
    %486 = vmatprep.subr.mxu0 %v250
    %487 = vmatpush1.msra.mxu0 %v249
    %488 = vmatprep.subr.mxu0 %v252
    %489 = vmatpush1.msra.mxu0 %v251
    %490 = vmatprep.subr.mxu0 %v254
    %491 = vmatpush1.msra.mxu0 %v253
    %492 = vmatprep.subr.mxu0 %v256
    %493 = vmatpush1.msra.mxu0 %v255
    %494 = vmatprep.subr.mxu0 %v258
    %495 = vmatpush1.msra.mxu0 %v257
    %496 = vmatprep.subr.mxu0 %v260
    %497 = vmatpush1.msra.mxu0 %v259
    %498 = vmatprep.subr.mxu0 %v262
    %499 = vmatpush1.msra.mxu0 %v261
    %500 = vmatprep.subr.mxu0 %v264
    %501 = vmatpush1.msra.mxu0 %v263
    %502 = vmatprep.subr.mxu0 %v266
    %503 = vmatpush1.msra.mxu0 %v265
    %504 = vmatprep.subr.mxu0 %v268
    %505 = vmatpush1.msra.mxu0 %v267
    %506 = vmatprep.subr.mxu0 %v270
    %507 = vmatpush1.msra.mxu0 %v269
    %508 = vmatprep.subr.mxu0 %v272
    %509 = vmatpush1.msra.mxu0 %v271
    %510 = vmatprep.subr.mxu0 %v274
    %511 = vmatpush1.msra.mxu0 %v273
    %512 = vmatprep.subr.mxu0 %v276
    %513 = vmatpush1.msra.mxu0 %v275
    %514 = vmatprep.subr.mxu0 %v278
    %515 = vmatpush1.msra.mxu0 %v277
    %516 = vmatprep.subr.mxu0 %v280
    %517 = vmatpush1.msra.mxu0 %v279
    %518 = vmatprep.subr.mxu0 %v282
    %519 = vmatpush1.msra.mxu0 %v281
    %520 = vmatprep.subr.mxu0 %v284
    %521 = vmatpush1.msra.mxu0 %v283
    %522 = vmatprep.mubr.f32.mxu0 %v442
    %523 = vmatmul.mubr.f32.gmra.mrb[0].mxu0 %v434
    %v524 = vpop.f32.mrb[0].mxu0
    %v525 = vadd.f32 %v418, %v524
    %v526 = vpop.f32.mrb[0].mxu0
    %v527 = vadd.f32 %v422, %v526
    %528 = vdwg.mxu0
    %529 = vmatprep.subr.mxu0 %v286
    %530 = vmatpush1.msra.mxu0 %v285
    %531 = vmatprep.subr.mxu0 %v288
    %532 = vmatpush1.msra.mxu0 %v287
    %533 = vmatprep.subr.mxu0 %v290
    %534 = vmatpush1.msra.mxu0 %v289
    %535 = vmatprep.subr.mxu0 %v292
    %536 = vmatpush1.msra.mxu0 %v291
    %537 = vmatprep.subr.mxu0 %v294
    %538 = vmatpush1.msra.mxu0 %v293
    %539 = vmatprep.subr.mxu0 %v296
    %540 = vmatpush1.msra.mxu0 %v295
    %541 = vmatprep.subr.mxu0 %v298
    %542 = vmatpush1.msra.mxu0 %v297
    %543 = vmatprep.subr.mxu0 %v300
    %544 = vmatpush1.msra.mxu0 %v299
    %545 = vmatprep.subr.mxu0 %v302
    %546 = vmatpush1.msra.mxu0 %v301
    %547 = vmatprep.subr.mxu0 %v304
    %548 = vmatpush1.msra.mxu0 %v303
    %549 = vmatprep.subr.mxu0 %v306
    %550 = vmatpush1.msra.mxu0 %v305
    %551 = vmatprep.subr.mxu0 %v308
    %552 = vmatpush1.msra.mxu0 %v307
    %553 = vmatprep.subr.mxu0 %v310
    %554 = vmatpush1.msra.mxu0 %v309
    %555 = vmatprep.subr.mxu0 %v312
    %556 = vmatpush1.msra.mxu0 %v311
    %557 = vmatprep.subr.mxu0 %v314
    %558 = vmatpush1.msra.mxu0 %v313
    %559 = vmatprep.subr.mxu0 %v316
    %560 = vmatpush1.msra.mxu0 %v315
    %561 = vmatprep.subr.mxu0 %v318
    %562 = vmatpush1.msra.mxu0 %v317
    %563 = vmatprep.subr.mxu0 %v320
    %564 = vmatpush1.msra.mxu0 %v319
    %565 = vmatprep.subr.mxu0 %v322
    %566 = vmatpush1.msra.mxu0 %v321
    %567 = vmatprep.subr.mxu0 %v324
    %568 = vmatpush1.msra.mxu0 %v323
    %569 = vmatprep.subr.mxu0 %v326
    %570 = vmatpush1.msra.mxu0 %v325
    %571 = vmatprep.subr.mxu0 %v328
    %572 = vmatpush1.msra.mxu0 %v327
    %573 = vmatprep.subr.mxu0 %v330
    %574 = vmatpush1.msra.mxu0 %v329
    %575 = vmatprep.subr.mxu0 %v332
    %576 = vmatpush1.msra.mxu0 %v331
    %577 = vmatprep.subr.mxu0 %v334
    %578 = vmatpush1.msra.mxu0 %v333
    %579 = vmatprep.subr.mxu0 %v336
    %580 = vmatpush1.msra.mxu0 %v335
    %581 = vmatprep.subr.mxu0 %v338
    %582 = vmatpush1.msra.mxu0 %v337
    %583 = vmatprep.subr.mxu0 %v340
    %584 = vmatpush1.msra.mxu0 %v339
    %585 = vmatprep.subr.mxu0 %v342
    %586 = vmatpush1.msra.mxu0 %v341
    %587 = vmatprep.subr.mxu0 %v344
    %588 = vmatpush1.msra.mxu0 %v343
    %589 = vmatprep.subr.mxu0 %v346
    %590 = vmatpush1.msra.mxu0 %v345
    %591 = vmatprep.subr.mxu0 %v348
    %592 = vmatpush1.msra.mxu0 %v347
    %593 = vmatprep.mubr.f32.mxu0 %v443
    %594 = vmatmul.mubr.f32.gmra.mrb[0].mxu0 %v441
    %v595 = vpop.f32.mrb[0].mxu0
    %v596 = vadd.f32 %v525, %v595
    %v597 = vpop.f32.mrb[0].mxu0
    %v598 = vadd.f32 %v527, %v597
    %599 = vdwg.mxu0
    %600 = vmatprep.subr.mxu0 %v350
    %601 = vmatpush1.msra.mxu0 %v349
    %602 = vmatprep.subr.mxu0 %v352
    %603 = vmatpush1.msra.mxu0 %v351
    %604 = vmatprep.subr.mxu0 %v354
    %605 = vmatpush1.msra.mxu0 %v353
    %606 = vmatprep.subr.mxu0 %v356
    %607 = vmatpush1.msra.mxu0 %v355
    %608 = vmatprep.subr.mxu0 %v358
    %609 = vmatpush1.msra.mxu0 %v357
    %610 = vmatprep.subr.mxu0 %v360
    %611 = vmatpush1.msra.mxu0 %v359
    %612 = vmatprep.subr.mxu0 %v362
    %613 = vmatpush1.msra.mxu0 %v361
    %614 = vmatprep.subr.mxu0 %v364
    %615 = vmatpush1.msra.mxu0 %v363
    %616 = vmatprep.subr.mxu0 %v366
    %617 = vmatpush1.msra.mxu0 %v365
    %618 = vmatprep.subr.mxu0 %v368
    %619 = vmatpush1.msra.mxu0 %v367
    %620 = vmatprep.subr.mxu0 %v370
    %621 = vmatpush1.msra.mxu0 %v369
    %622 = vmatprep.subr.mxu0 %v372
    %623 = vmatpush1.msra.mxu0 %v371
    %624 = vmatprep.subr.mxu0 %v374
    %625 = vmatpush1.msra.mxu0 %v373
    %626 = vmatprep.subr.mxu0 %v376
    %627 = vmatpush1.msra.mxu0 %v375
    %628 = vmatprep.subr.mxu0 %v378
    %629 = vmatpush1.msra.mxu0 %v377
    %630 = vmatprep.subr.mxu0 %v380
    %631 = vmatpush1.msra.mxu0 %v379
    %632 = vmatprep.subr.mxu0 %v382
    %633 = vmatpush1.msra.mxu0 %v381
    %634 = vmatprep.subr.mxu0 %v384
    %635 = vmatpush1.msra.mxu0 %v383
    %636 = vmatprep.subr.mxu0 %v386
    %637 = vmatpush1.msra.mxu0 %v385
    %638 = vmatprep.subr.mxu0 %v388
    %639 = vmatpush1.msra.mxu0 %v387
    %640 = vmatprep.subr.mxu0 %v390
    %641 = vmatpush1.msra.mxu0 %v389
    %642 = vmatprep.subr.mxu0 %v392
    %643 = vmatpush1.msra.mxu0 %v391
    %644 = vmatprep.subr.mxu0 %v394
    %645 = vmatpush1.msra.mxu0 %v393
    %646 = vmatprep.subr.mxu0 %v396
    %647 = vmatpush1.msra.mxu0 %v395
    %648 = vmatprep.subr.mxu0 %v398
    %649 = vmatpush1.msra.mxu0 %v397
    %650 = vmatprep.subr.mxu0 %v400
    %651 = vmatpush1.msra.mxu0 %v399
    %652 = vmatprep.subr.mxu0 %v402
    %653 = vmatpush1.msra.mxu0 %v401
    %654 = vmatprep.subr.mxu0 %v404
    %655 = vmatpush1.msra.mxu0 %v403
    %656 = vmatprep.subr.mxu0 %v406
    %657 = vmatpush1.msra.mxu0 %v405
    %658 = vmatprep.subr.mxu0 %v408
    %659 = vmatpush1.msra.mxu0 %v407
    %660 = vmatprep.subr.mxu0 %v410
    %661 = vmatpush1.msra.mxu0 %v409
    %662 = vmatprep.subr.mxu0 %v412
    %663 = vmatpush1.msra.mxu0 %v411
    %664 = vmatprep.mubr.f32.mxu0 %v451
    %665 = vmatmul.mubr.f32.gmra.mrb[0].mxu0 %v450
    %v666 = vpop.f32.mrb[0].mxu0
    %v667 = vadd.f32 %v596, %v666
    %v668 = vpop.f32.mrb[0].mxu0
    %v669 = vadd.f32 %v598, %v668
    %670 = vdwg.mxu0
    %vm671 = vcmp.ge.f32.partialorder %v667, 0.0
    %vm672 = vcmp.ge.f32.partialorder %v669, 0.0
    %v673 = vmul.f32 %v667, 0.01
    %v674 = vmul.f32 %v669, 0.01
    %v675 = vsel %vm671, %v667, %v673
    %v676 = vsel %vm672, %v669, %v674
    %v677 = vld [vmem:[#allocation7] sm:$0xff]
    %v678 = vld [vmem:[#allocation7 + $0x8] sm:$0xff]
    %v679 = vld [vmem:[#allocation7 + $0x10] sm:$0xff]
    %v680 = vld [vmem:[#allocation7 + $0x18] sm:$0xff]
    %v681 = vld [vmem:[#allocation7 + $0x20] sm:$0xff]
    %v682 = vld [vmem:[#allocation7 + $0x28] sm:$0xff]
    %v683 = vld [vmem:[#allocation7 + $0x30] sm:$0xff]
    %v684 = vld [vmem:[#allocation7 + $0x38] sm:$0xff]
    %v685 = vld [vmem:[#allocation7 + $0x40] sm:$0xff]
    %v686 = vld [vmem:[#allocation7 + $0x48] sm:$0xff]
    %v687 = vld [vmem:[#allocation7 + $0x50] sm:$0xff]
    %v688 = vld [vmem:[#allocation7 + $0x58] sm:$0xff]
    %v689 = vld [vmem:[#allocation7 + $0x60] sm:$0xff]
    %v690 = vld [vmem:[#allocation7 + $0x68] sm:$0xff]
    %v691 = vld [vmem:[#allocation7 + $0x70] sm:$0xff]
    %v692 = vld [vmem:[#allocation7 + $0x78] sm:$0xff]
    %v693 = vld [vmem:[#allocation7 + $0x80] sm:$0xff]
    %v694 = vld [vmem:[#allocation7 + $0x88] sm:$0xff]
    %v695 = vld [vmem:[#allocation7 + $0x90] sm:$0xff]
    %v696 = vld [vmem:[#allocation7 + $0x98] sm:$0xff]
    %v697 = vld [vmem:[#allocation7 + $0xa0] sm:$0xff]
    %v698 = vld [vmem:[#allocation7 + $0xa8] sm:$0xff]
    %v699 = vld [vmem:[#allocation7 + $0xb0] sm:$0xff]
    %v700 = vld [vmem:[#allocation7 + $0xb8] sm:$0xff]
    %v701 = vld [vmem:[#allocation7 + $0xc0] sm:$0xff]
    %v702 = vld [vmem:[#allocation7 + $0xc8] sm:$0xff]
    %v703 = vld [vmem:[#allocation7 + $0xd0] sm:$0xff]
    %v704 = vld [vmem:[#allocation7 + $0xd8] sm:$0xff]
    %v705 = vld [vmem:[#allocation7 + $0xe0] sm:$0xff]
    %v706 = vld [vmem:[#allocation7 + $0xe8] sm:$0xff]
    %v707 = vld [vmem:[#allocation7 + $0xf0] sm:$0xff]
    %v708 = vld [vmem:[#allocation7 + $0xf8] sm:$0xff]
    %v709 = vld [vmem:[#allocation8] sm:$0x1]
    %v711 = vlaneseq
    %v712 = vshrl.u32 %v711, 7
    %v713 = vsub.s32 0, %v712
    %v714 = vrot.slane %v709, %v713
    %716 = vmatprep.subr.mxu0 0.0
    %717 = vmatpush1.msra.mxu0 %v677
    %718 = vmatprep.subr.mxu0 0.0
    %719 = vmatpush1.msra.mxu0 %v678
    %720 = vmatprep.subr.mxu0 0.0
    %721 = vmatpush1.msra.mxu0 %v679
    %722 = vmatprep.subr.mxu0 0.0
    %723 = vmatpush1.msra.mxu0 %v680
    %724 = vmatprep.subr.mxu0 0.0
    %725 = vmatpush1.msra.mxu0 %v681
    %726 = vmatprep.subr.mxu0 0.0
    %727 = vmatpush1.msra.mxu0 %v682
    %728 = vmatprep.subr.mxu0 0.0
    %729 = vmatpush1.msra.mxu0 %v683
    %730 = vmatprep.subr.mxu0 0.0
    %731 = vmatpush1.msra.mxu0 %v684
    %732 = vmatprep.subr.mxu0 0.0
    %733 = vmatpush1.msra.mxu0 %v685
    %734 = vmatprep.subr.mxu0 0.0
    %735 = vmatpush1.msra.mxu0 %v686
    %736 = vmatprep.subr.mxu0 0.0
    %737 = vmatpush1.msra.mxu0 %v687
    %738 = vmatprep.subr.mxu0 0.0
    %739 = vmatpush1.msra.mxu0 %v688
    %740 = vmatprep.subr.mxu0 0.0
    %741 = vmatpush1.msra.mxu0 %v689
    %742 = vmatprep.subr.mxu0 0.0
    %743 = vmatpush1.msra.mxu0 %v690
    %744 = vmatprep.subr.mxu0 0.0
    %745 = vmatpush1.msra.mxu0 %v691
    %746 = vmatprep.subr.mxu0 0.0
    %747 = vmatpush1.msra.mxu0 %v692
    %748 = vmatprep.subr.mxu0 0.0
    %749 = vmatpush1.msra.mxu0 %v693
    %750 = vmatprep.subr.mxu0 0.0
    %751 = vmatpush1.msra.mxu0 %v694
    %752 = vmatprep.subr.mxu0 0.0
    %753 = vmatpush1.msra.mxu0 %v695
    %754 = vmatprep.subr.mxu0 0.0
    %755 = vmatpush1.msra.mxu0 %v696
    %756 = vmatprep.subr.mxu0 0.0
    %757 = vmatpush1.msra.mxu0 %v697
    %758 = vmatprep.subr.mxu0 0.0
    %759 = vmatpush1.msra.mxu0 %v698
    %760 = vmatprep.subr.mxu0 0.0
    %761 = vmatpush1.msra.mxu0 %v699
    %762 = vmatprep.subr.mxu0 0.0
    %763 = vmatpush1.msra.mxu0 %v700
    %764 = vmatprep.subr.mxu0 0.0
    %765 = vmatpush1.msra.mxu0 %v701
    %766 = vmatprep.subr.mxu0 0.0
    %767 = vmatpush1.msra.mxu0 %v702
    %768 = vmatprep.subr.mxu0 0.0
    %769 = vmatpush1.msra.mxu0 %v703
    %770 = vmatprep.subr.mxu0 0.0
    %771 = vmatpush1.msra.mxu0 %v704
    %772 = vmatprep.subr.mxu0 0.0
    %773 = vmatpush1.msra.mxu0 %v705
    %774 = vmatprep.subr.mxu0 0.0
    %775 = vmatpush1.msra.mxu0 %v706
    %776 = vmatprep.subr.mxu0 0.0
    %777 = vmatpush1.msra.mxu0 %v707
    %778 = vmatprep.subr.mxu0 0.0
    %779 = vmatpush1.msra.mxu0 %v708
    %780 = vmatprep.mubr.f32.mxu0 %v676
    %781 = vmatmul.mubr.f32.gmra.mrb[0].mxu0 %v675
    %v782 = vpop.f32.mrb[0].mxu0
    %v783 = vadd.f32 %v714, %v782
    %v784 = vpop.f32.mrb[0].mxu0
    %785 = vdwg.mxu0
    %vm786 = vcmp.ge.f32.partialorder %v783, 0.0
    %v787 = vmul.f32 %v783, 0.01
    %v788 = vsel %vm786, %v783, %v787
    %v789 = vld [vmem:[%s6] sm:$0xff]
    %v790 = vld [vmem:[%s6 + $0x8] sm:$0xff]
    %v791 = vld [vmem:[%s6 + $0x10] sm:$0xff]
    %v792 = vld [vmem:[%s6 + $0x18] sm:$0xff]
    %v793 = vld [vmem:[%s6 + $0x20] sm:$0xff]
    %v794 = vld [vmem:[%s6 + $0x28] sm:$0xff]
    %v795 = vld [vmem:[%s6 + $0x30] sm:$0xff]
    %v796 = vld [vmem:[%s6 + $0x38] sm:$0xff]
    %v797 = vld [vmem:[%s6 + $0x40] sm:$0xff]
    %v798 = vld [vmem:[%s6 + $0x48] sm:$0xff]
    %v799 = vld [vmem:[%s6 + $0x50] sm:$0xff]
    %v800 = vld [vmem:[%s6 + $0x58] sm:$0xff]
    %v801 = vld [vmem:[%s6 + $0x60] sm:$0xff]
    %v802 = vld [vmem:[%s6 + $0x68] sm:$0xff]
    %v803 = vld [vmem:[%s6 + $0x70] sm:$0xff]
    %v804 = vld [vmem:[%s6 + $0x78] sm:$0xff]
    %v805 = vld [vmem:[#allocation10] sm:$0x1]
    %v807 = vlaneseq
    %v808 = vshrl.u32 %v807, 7
    %v809 = vsub.s32 0, %v808
    %v810 = vrot.slane %v805, %v809
    %812 = vmatprep.subr.mxu0 0.0
    %813 = vmatpush1.msra.mxu0 %v789
    %814 = vmatprep.subr.mxu0 0.0
    %815 = vmatpush1.msra.mxu0 %v790
    %816 = vmatprep.subr.mxu0 0.0
    %817 = vmatpush1.msra.mxu0 %v791
    %818 = vmatprep.subr.mxu0 0.0
    %819 = vmatpush1.msra.mxu0 %v792
    %820 = vmatprep.subr.mxu0 0.0
    %821 = vmatpush1.msra.mxu0 %v793
    %822 = vmatprep.subr.mxu0 0.0
    %823 = vmatpush1.msra.mxu0 %v794
    %824 = vmatprep.subr.mxu0 0.0
    %825 = vmatpush1.msra.mxu0 %v795
    %826 = vmatprep.subr.mxu0 0.0
    %827 = vmatpush1.msra.mxu0 %v796
    %828 = vmatprep.subr.mxu0 0.0
    %829 = vmatpush1.msra.mxu0 %v797
    %830 = vmatprep.subr.mxu0 0.0
    %831 = vmatpush1.msra.mxu0 %v798
    %832 = vmatprep.subr.mxu0 0.0
    %833 = vmatpush1.msra.mxu0 %v799
    %834 = vmatprep.subr.mxu0 0.0
    %835 = vmatpush1.msra.mxu0 %v800
    %836 = vmatprep.subr.mxu0 0.0
    %837 = vmatpush1.msra.mxu0 %v801
    %838 = vmatprep.subr.mxu0 0.0
    %839 = vmatpush1.msra.mxu0 %v802
    %840 = vmatprep.subr.mxu0 0.0
    %841 = vmatpush1.msra.mxu0 %v803
    %842 = vmatprep.subr.mxu0 0.0
    %843 = vmatpush1.msra.mxu0 %v804
    %844 = vmatprep.subr.mxu0 0.0
    %845 = vmatpush1.msra.mxu0 0.0
    %846 = vmatprep.subr.mxu0 0.0
    %847 = vmatpush1.msra.mxu0 0.0
    %848 = vmatprep.subr.mxu0 0.0
    %849 = vmatpush1.msra.mxu0 0.0
    %850 = vmatprep.subr.mxu0 0.0
    %851 = vmatpush1.msra.mxu0 0.0
    %852 = vmatprep.subr.mxu0 0.0
    %853 = vmatpush1.msra.mxu0 0.0
    %854 = vmatprep.subr.mxu0 0.0
    %855 = vmatpush1.msra.mxu0 0.0
    %856 = vmatprep.subr.mxu0 0.0
    %857 = vmatpush1.msra.mxu0 0.0
    %858 = vmatprep.subr.mxu0 0.0
    %859 = vmatpush1.msra.mxu0 0.0
    %860 = vmatprep.subr.mxu0 0.0
    %861 = vmatpush1.msra.mxu0 0.0
    %862 = vmatprep.subr.mxu0 0.0
    %863 = vmatpush1.msra.mxu0 0.0
    %864 = vmatprep.subr.mxu0 0.0
    %865 = vmatpush1.msra.mxu0 0.0
    %866 = vmatprep.subr.mxu0 0.0
    %867 = vmatpush1.msra.mxu0 0.0
    %868 = vmatprep.subr.mxu0 0.0
    %869 = vmatpush1.msra.mxu0 0.0
    %870 = vmatprep.subr.mxu0 0.0
    %871 = vmatpush1.msra.mxu0 0.0
    %872 = vmatprep.subr.mxu0 0.0
    %873 = vmatpush1.msra.mxu0 0.0
    %874 = vmatprep.subr.mxu0 0.0
    %875 = vmatpush1.msra.mxu0 0.0
    %876 = vmatprep.mubr.f32.mxu0 0.0
    %877 = vmatmul.mubr.f32.gmra.mrb[0].mxu0 %v788
    %v878 = vpop.f32.mrb[0].mxu0
    %v879 = vadd.f32 %v810, %v878
    %v880 = vpop.f32.mrb[0].mxu0
    %881 = vdwg.mxu0
    %v882 = vld [vmem:[%s1] sm:$0x3]
    %v883 = vmul.f32 %v879, 0.5
    %v884 = vmul.f32 %v883, 1.442695
    %v885 = vpow.pop %v884
    %887 = vrot.lane.b32.xlu0 %v885, 120
    %v888 = vpop.permute.xlu0 %887
    %v890 = vmul.f32 %v882, %v888
    %v891 = vadd.f32 %v879, %v890
    %vm892 = vcmask 17408
    %893 = vst.msk [vmem:[#allocation23] sm:$0x3] %vm892, %v879
    %895 = vrot.lane.b32.xlu0 %v879, 120
    %v896 = vpop.permute.xlu0 %895
    %898 = vst.msk [vmem:[#allocation24] sm:$0x3] %vm892, %v896
    %899 = vst.msk [vmem:[#allocation26] sm:$0x3] %vm892, %v891
    %v900 = vld [vmem:[#allocation11] sm:$0xff]
    %v901 = vld [vmem:[#allocation13] sm:$0x1]
    %v903 = vlaneseq
    %v904 = vshrl.u32 %v903, 7
    %v905 = vsub.s32 0, %v904
    %v906 = vrot.slane %v901, %v905
    %vm908 = vcmask 64512
    %v910 = vsel %vm908, %v891, 0
    %912 = vmatprep.subr.mxu0 0.0
    %913 = vmatpush1.msra.mxu0 %v900
    %914 = vmatprep.subr.mxu0 0.0
    %915 = vmatpush1.msra.mxu0 0.0
    %916 = vmatprep.subr.mxu0 0.0
    %917 = vmatpush1.msra.mxu0 0.0
    %918 = vmatprep.subr.mxu0 0.0
    %919 = vmatpush1.msra.mxu0 0.0
    %920 = vmatprep.subr.mxu0 0.0
    %921 = vmatpush1.msra.mxu0 0.0
    %922 = vmatprep.subr.mxu0 0.0
    %923 = vmatpush1.msra.mxu0 0.0
    %924 = vmatprep.subr.mxu0 0.0
    %925 = vmatpush1.msra.mxu0 0.0
    %926 = vmatprep.subr.mxu0 0.0
    %927 = vmatpush1.msra.mxu0 0.0
    %928 = vmatprep.subr.mxu0 0.0
    %929 = vmatpush1.msra.mxu0 0.0
    %930 = vmatprep.subr.mxu0 0.0
    %931 = vmatpush1.msra.mxu0 0.0
    %932 = vmatprep.subr.mxu0 0.0
    %933 = vmatpush1.msra.mxu0 0.0
    %934 = vmatprep.subr.mxu0 0.0
    %935 = vmatpush1.msra.mxu0 0.0
    %936 = vmatprep.subr.mxu0 0.0
    %937 = vmatpush1.msra.mxu0 0.0
    %938 = vmatprep.subr.mxu0 0.0
    %939 = vmatpush1.msra.mxu0 0.0
    %940 = vmatprep.subr.mxu0 0.0
    %941 = vmatpush1.msra.mxu0 0.0
    %942 = vmatprep.subr.mxu0 0.0
    %943 = vmatpush1.msra.mxu0 0.0
    %944 = vmatprep.subr.mxu0 0.0
    %945 = vmatpush1.msra.mxu0 0.0
    %946 = vmatprep.subr.mxu0 0.0
    %947 = vmatpush1.msra.mxu0 0.0
    %948 = vmatprep.subr.mxu0 0.0
    %949 = vmatpush1.msra.mxu0 0.0
    %950 = vmatprep.subr.mxu0 0.0
    %951 = vmatpush1.msra.mxu0 0.0
    %952 = vmatprep.subr.mxu0 0.0
    %953 = vmatpush1.msra.mxu0 0.0
    %954 = vmatprep.subr.mxu0 0.0
    %955 = vmatpush1.msra.mxu0 0.0
    %956 = vmatprep.subr.mxu0 0.0
    %957 = vmatpush1.msra.mxu0 0.0
    %958 = vmatprep.subr.mxu0 0.0
    %959 = vmatpush1.msra.mxu0 0.0
    %960 = vmatprep.subr.mxu0 0.0
    %961 = vmatpush1.msra.mxu0 0.0
    %962 = vmatprep.subr.mxu0 0.0
    %963 = vmatpush1.msra.mxu0 0.0
    %964 = vmatprep.subr.mxu0 0.0
    %965 = vmatpush1.msra.mxu0 0.0
    %966 = vmatprep.subr.mxu0 0.0
    %967 = vmatpush1.msra.mxu0 0.0
    %968 = vmatprep.subr.mxu0 0.0
    %969 = vmatpush1.msra.mxu0 0.0
    %970 = vmatprep.subr.mxu0 0.0
    %971 = vmatpush1.msra.mxu0 0.0
    %972 = vmatprep.subr.mxu0 0.0
    %973 = vmatpush1.msra.mxu0 0.0
    %974 = vmatprep.subr.mxu0 0.0
    %975 = vmatpush1.msra.mxu0 0.0
    %976 = vmatprep.mubr.f32.mxu0 0.0
    %977 = vmatmul.mubr.f32.gmra.mrb[0].mxu0 %v910
    %v978 = vpop.f32.mrb[0].mxu0
    %v979 = vadd.f32 %v906, %v978
    %v980 = vpop.f32.mrb[0].mxu0
    %981 = vdwg.mxu0
    %v982 = vld [vmem:[#allocation14] sm:$0xff]
    %v983 = vld [vmem:[#allocation14 + $0x8] sm:$0xff]
    %v984 = vld [vmem:[#allocation14 + $0x10] sm:$0xff]
    %v985 = vld [vmem:[#allocation14 + $0x18] sm:$0xff]
    %v986 = vld [vmem:[#allocation14 + $0x20] sm:$0xff]
    %v987 = vld [vmem:[#allocation14 + $0x28] sm:$0xff]
    %v988 = vld [vmem:[#allocation14 + $0x30] sm:$0xff]
    %v989 = vld [vmem:[#allocation14 + $0x38] sm:$0xff]
    %v990 = vld [vmem:[#allocation14 + $0x40] sm:$0xff]
    %v991 = vld [vmem:[#allocation14 + $0x48] sm:$0xff]
    %v992 = vld [vmem:[#allocation14 + $0x50] sm:$0xff]
    %v993 = vld [vmem:[#allocation14 + $0x58] sm:$0xff]
    %v994 = vld [vmem:[#allocation14 + $0x60] sm:$0xff]
    %v995 = vld [vmem:[#allocation14 + $0x68] sm:$0xff]
    %v996 = vld [vmem:[#allocation14 + $0x70] sm:$0xff]
    %v997 = vld [vmem:[#allocation14 + $0x78] sm:$0xff]
    %v998 = vld [vmem:[#allocation14 + $0x80] sm:$0xff]
    %v999 = vld [vmem:[#allocation14 + $0x88] sm:$0xff]
    %v1000 = vld [vmem:[#allocation14 + $0x90] sm:$0xff]
    %v1001 = vld [vmem:[#allocation14 + $0x98] sm:$0xff]
    %v1002 = vld [vmem:[#allocation14 + $0xa0] sm:$0xff]
    %v1003 = vld [vmem:[#allocation14 + $0xa8] sm:$0xff]
    %v1004 = vld [vmem:[#allocation14 + $0xb0] sm:$0xff]
    %v1005 = vld [vmem:[#allocation14 + $0xb8] sm:$0xff]
    %v1006 = vld [vmem:[#allocation14 + $0xc0] sm:$0xff]
    %v1007 = vld [vmem:[#allocation14 + $0xc8] sm:$0xff]
    %v1008 = vld [vmem:[#allocation14 + $0xd0] sm:$0xff]
    %v1009 = vld [vmem:[#allocation14 + $0xd8] sm:$0xff]
    %v1010 = vld [vmem:[#allocation14 + $0xe0] sm:$0xff]
    %v1011 = vld [vmem:[#allocation14 + $0xe8] sm:$0xff]
    %v1012 = vld [vmem:[#allocation14 + $0xf0] sm:$0xff]
    %v1013 = vld [vmem:[#allocation14 + $0xf8] sm:$0xff]
    %v1014 = vld [vmem:[#allocation16] sm:$0x3]
    %v1016 = vlaneseq
    %v1017 = vshrl.u32 %v1016, 7
    %v1018 = vsub.s32 0, %v1017
    %v1019 = vrot.slane %v1014, %v1018
    %v1020 = vlaneseq
    %v1021 = vshrl.u32 %v1020, 7
    %v1022 = vsub.s32 1, %v1021
    %v1023 = vrot.slane %v1014, %v1022
    %1026 = vmatprep.subr.mxu0 %v983
    %1027 = vmatpush1.msra.mxu0 %v982
    %1028 = vmatprep.subr.mxu0 %v985
    %1029 = vmatpush1.msra.mxu0 %v984
    %1030 = vmatprep.subr.mxu0 %v987
    %1031 = vmatpush1.msra.mxu0 %v986
    %1032 = vmatprep.subr.mxu0 %v989
    %1033 = vmatpush1.msra.mxu0 %v988
    %1034 = vmatprep.subr.mxu0 %v991
    %1035 = vmatpush1.msra.mxu0 %v990
    %1036 = vmatprep.subr.mxu0 %v993
    %1037 = vmatpush1.msra.mxu0 %v992
    %1038 = vmatprep.subr.mxu0 %v995
    %1039 = vmatpush1.msra.mxu0 %v994
    %1040 = vmatprep.subr.mxu0 %v997
    %1041 = vmatpush1.msra.mxu0 %v996
    %1042 = vmatprep.subr.mxu0 %v999
    %1043 = vmatpush1.msra.mxu0 %v998
    %1044 = vmatprep.subr.mxu0 %v1001
    %1045 = vmatpush1.msra.mxu0 %v1000
    %1046 = vmatprep.subr.mxu0 %v1003
    %1047 = vmatpush1.msra.mxu0 %v1002
    %1048 = vmatprep.subr.mxu0 %v1005
    %1049 = vmatpush1.msra.mxu0 %v1004
    %1050 = vmatprep.subr.mxu0 %v1007
    %1051 = vmatpush1.msra.mxu0 %v1006
    %1052 = vmatprep.subr.mxu0 %v1009
    %1053 = vmatpush1.msra.mxu0 %v1008
    %1054 = vmatprep.subr.mxu0 %v1011
    %1055 = vmatpush1.msra.mxu0 %v1010
    %1056 = vmatprep.subr.mxu0 %v1013
    %1057 = vmatpush1.msra.mxu0 %v1012
    %1058 = vmatprep.subr.mxu0 0.0
    %1059 = vmatpush1.msra.mxu0 0.0
    %1060 = vmatprep.subr.mxu0 0.0
    %1061 = vmatpush1.msra.mxu0 0.0
    %1062 = vmatprep.subr.mxu0 0.0
    %1063 = vmatpush1.msra.mxu0 0.0
    %1064 = vmatprep.subr.mxu0 0.0
    %1065 = vmatpush1.msra.mxu0 0.0
    %1066 = vmatprep.subr.mxu0 0.0
    %1067 = vmatpush1.msra.mxu0 0.0
    %1068 = vmatprep.subr.mxu0 0.0
    %1069 = vmatpush1.msra.mxu0 0.0
    %1070 = vmatprep.subr.mxu0 0.0
    %1071 = vmatpush1.msra.mxu0 0.0
    %1072 = vmatprep.subr.mxu0 0.0
    %1073 = vmatpush1.msra.mxu0 0.0
    %1074 = vmatprep.subr.mxu0 0.0
    %1075 = vmatpush1.msra.mxu0 0.0
    %1076 = vmatprep.subr.mxu0 0.0
    %1077 = vmatpush1.msra.mxu0 0.0
    %1078 = vmatprep.subr.mxu0 0.0
    %1079 = vmatpush1.msra.mxu0 0.0
    %1080 = vmatprep.subr.mxu0 0.0
    %1081 = vmatpush1.msra.mxu0 0.0
    %1082 = vmatprep.subr.mxu0 0.0
    %1083 = vmatpush1.msra.mxu0 0.0
    %1084 = vmatprep.subr.mxu0 0.0
    %1085 = vmatpush1.msra.mxu0 0.0
    %1086 = vmatprep.subr.mxu0 0.0
    %1087 = vmatpush1.msra.mxu0 0.0
    %1088 = vmatprep.subr.mxu0 0.0
    %1089 = vmatpush1.msra.mxu0 0.0
    %1090 = vmatprep.mubr.f32.mxu0 0.0
    %1091 = vmatmul.mubr.f32.gmra.mrb[0].mxu0 %v979
    %v1092 = vpop.f32.mrb[0].mxu0
    %v1093 = vadd.f32 %v1019, %v1092
    %v1094 = vpop.f32.mrb[0].mxu0
    %v1095 = vadd.f32 %v1023, %v1094
    %1096 = vdwg.mxu0
    %vm1097 = vcmp.ge.f32.partialorder %v1093, 0.0
    %vm1098 = vcmp.ge.f32.partialorder %v1095, 0.0
    %v1099 = vmul.f32 %v1093, 0.01
    %v1100 = vmul.f32 %v1095, 0.01
    %v1101 = vsel %vm1097, %v1093, %v1099
    %v1102 = vsel %vm1098, %v1095, %v1100
    %v1103 = vld [vmem:[#allocation17] sm:$0xff]
    %v1104 = vld [vmem:[#allocation17 + $0x8] sm:$0xff]
    %v1105 = vld [vmem:[#allocation17 + $0x10] sm:$0xff]
    %v1106 = vld [vmem:[#allocation17 + $0x18] sm:$0xff]
    %v1107 = vld [vmem:[#allocation17 + $0x20] sm:$0xff]
    %v1108 = vld [vmem:[#allocation17 + $0x28] sm:$0xff]
    %v1109 = vld [vmem:[#allocation17 + $0x30] sm:$0xff]
    %v1110 = vld [vmem:[#allocation17 + $0x38] sm:$0xff]
    %v1111 = vld [vmem:[#allocation17 + $0x40] sm:$0xff]
    %v1112 = vld [vmem:[#allocation17 + $0x48] sm:$0xff]
    %v1113 = vld [vmem:[#allocation17 + $0x50] sm:$0xff]
    %v1114 = vld [vmem:[#allocation17 + $0x58] sm:$0xff]
    %v1115 = vld [vmem:[#allocation17 + $0x60] sm:$0xff]
    %v1116 = vld [vmem:[#allocation17 + $0x68] sm:$0xff]
    %v1117 = vld [vmem:[#allocation17 + $0x70] sm:$0xff]
    %v1118 = vld [vmem:[#allocation17 + $0x78] sm:$0xff]
    %v1119 = vld [vmem:[#allocation17 + $0x80] sm:$0xff]
    %v1120 = vld [vmem:[#allocation17 + $0x88] sm:$0xff]
    %v1121 = vld [vmem:[#allocation17 + $0x90] sm:$0xff]
    %v1122 = vld [vmem:[#allocation17 + $0x98] sm:$0xff]
    %v1123 = vld [vmem:[#allocation17 + $0xa0] sm:$0xff]
    %v1124 = vld [vmem:[#allocation17 + $0xa8] sm:$0xff]
    %v1125 = vld [vmem:[#allocation17 + $0xb0] sm:$0xff]
    %v1126 = vld [vmem:[#allocation17 + $0xb8] sm:$0xff]
    %v1127 = vld [vmem:[#allocation17 + $0xc0] sm:$0xff]
    %v1128 = vld [vmem:[#allocation17 + $0xc8] sm:$0xff]
    %v1129 = vld [vmem:[#allocation17 + $0xd0] sm:$0xff]
    %v1130 = vld [vmem:[#allocation17 + $0xd8] sm:$0xff]
    %v1131 = vld [vmem:[#allocation17 + $0xe0] sm:$0xff]
    %v1132 = vld [vmem:[#allocation17 + $0xe8] sm:$0xff]
    %v1133 = vld [vmem:[#allocation17 + $0xf0] sm:$0xff]
    %v1134 = vld [vmem:[#allocation17 + $0xf8] sm:$0xff]
    %v1135 = vld [vmem:[#allocation17 + $0x100] sm:$0xff]
    %v1136 = vld [vmem:[#allocation17 + $0x108] sm:$0xff]
    %v1137 = vld [vmem:[#allocation17 + $0x110] sm:$0xff]
    %v1138 = vld [vmem:[#allocation17 + $0x118] sm:$0xff]
    %v1139 = vld [vmem:[#allocation17 + $0x120] sm:$0xff]
    %v1140 = vld [vmem:[#allocation17 + $0x128] sm:$0xff]
    %v1141 = vld [vmem:[#allocation17 + $0x130] sm:$0xff]
    %v1142 = vld [vmem:[#allocation17 + $0x138] sm:$0xff]
    %v1143 = vld [vmem:[#allocation17 + $0x140] sm:$0xff]
    %v1144 = vld [vmem:[#allocation17 + $0x148] sm:$0xff]
    %v1145 = vld [vmem:[#allocation17 + $0x150] sm:$0xff]
    %v1146 = vld [vmem:[#allocation17 + $0x158] sm:$0xff]
    %v1147 = vld [vmem:[#allocation17 + $0x160] sm:$0xff]
    %v1148 = vld [vmem:[#allocation17 + $0x168] sm:$0xff]
    %v1149 = vld [vmem:[#allocation17 + $0x170] sm:$0xff]
    %v1150 = vld [vmem:[#allocation17 + $0x178] sm:$0xff]
    %v1151 = vld [vmem:[#allocation17 + $0x180] sm:$0xff]
    %v1152 = vld [vmem:[#allocation17 + $0x188] sm:$0xff]
    %v1153 = vld [vmem:[#allocation17 + $0x190] sm:$0xff]
    %v1154 = vld [vmem:[#allocation17 + $0x198] sm:$0xff]
    %v1155 = vld [vmem:[#allocation17 + $0x1a0] sm:$0xff]
    %v1156 = vld [vmem:[#allocation17 + $0x1a8] sm:$0xff]
    %v1157 = vld [vmem:[#allocation17 + $0x1b0] sm:$0xff]
    %v1158 = vld [vmem:[#allocation17 + $0x1b8] sm:$0xff]
    %v1159 = vld [vmem:[#allocation17 + $0x1c0] sm:$0xff]
    %v1160 = vld [vmem:[#allocation17 + $0x1c8] sm:$0xff]
    %v1161 = vld [vmem:[#allocation17 + $0x1d0] sm:$0xff]
    %v1162 = vld [vmem:[#allocation17 + $0x1d8] sm:$0xff]
    %v1163 = vld [vmem:[#allocation17 + $0x1e0] sm:$0xff]
    %v1164 = vld [vmem:[#allocation17 + $0x1e8] sm:$0xff]
    %v1165 = vld [vmem:[#allocation17 + $0x1f0] sm:$0xff]
    %v1166 = vld [vmem:[#allocation17 + $0x1f8] sm:$0xff]
    %v1167 = vld [vmem:[#allocation17 + $0x200] sm:$0xff]
    %v1168 = vld [vmem:[#allocation17 + $0x208] sm:$0xff]
    %v1169 = vld [vmem:[#allocation17 + $0x210] sm:$0xff]
    %v1170 = vld [vmem:[#allocation17 + $0x218] sm:$0xff]
    %v1171 = vld [vmem:[#allocation17 + $0x220] sm:$0xff]
    %v1172 = vld [vmem:[#allocation17 + $0x228] sm:$0xff]
    %v1173 = vld [vmem:[#allocation17 + $0x230] sm:$0xff]
    %v1174 = vld [vmem:[#allocation17 + $0x238] sm:$0xff]
    %v1175 = vld [vmem:[#allocation17 + $0x240] sm:$0xff]
    %v1176 = vld [vmem:[#allocation17 + $0x248] sm:$0xff]
    %v1177 = vld [vmem:[#allocation17 + $0x250] sm:$0xff]
    %v1178 = vld [vmem:[#allocation17 + $0x258] sm:$0xff]
    %v1179 = vld [vmem:[#allocation17 + $0x260] sm:$0xff]
    %v1180 = vld [vmem:[#allocation17 + $0x268] sm:$0xff]
    %v1181 = vld [vmem:[#allocation17 + $0x270] sm:$0xff]
    %v1182 = vld [vmem:[#allocation17 + $0x278] sm:$0xff]
    %v1183 = vld [vmem:[#allocation17 + $0x280] sm:$0xff]
    %v1184 = vld [vmem:[#allocation17 + $0x288] sm:$0xff]
    %v1185 = vld [vmem:[#allocation17 + $0x290] sm:$0xff]
    %v1186 = vld [vmem:[#allocation17 + $0x298] sm:$0xff]
    %v1187 = vld [vmem:[#allocation17 + $0x2a0] sm:$0xff]
    %v1188 = vld [vmem:[#allocation17 + $0x2a8] sm:$0xff]
    %v1189 = vld [vmem:[#allocation17 + $0x2b0] sm:$0xff]
    %v1190 = vld [vmem:[#allocation17 + $0x2b8] sm:$0xff]
    %v1191 = vld [vmem:[#allocation17 + $0x2c0] sm:$0xff]
    %v1192 = vld [vmem:[#allocation17 + $0x2c8] sm:$0xff]
    %v1193 = vld [vmem:[#allocation17 + $0x2d0] sm:$0xff]
    %v1194 = vld [vmem:[#allocation17 + $0x2d8] sm:$0xff]
    %v1195 = vld [vmem:[#allocation17 + $0x2e0] sm:$0xff]
    %v1196 = vld [vmem:[#allocation17 + $0x2e8] sm:$0xff]
    %v1197 = vld [vmem:[#allocation17 + $0x2f0] sm:$0xff]
    %v1198 = vld [vmem:[#allocation17 + $0x2f8] sm:$0xff]
    %v1199 = vld [vmem:[#allocation17 + $0x300] sm:$0xff]
    %v1200 = vld [vmem:[#allocation17 + $0x308] sm:$0xff]
    %v1201 = vld [vmem:[#allocation17 + $0x310] sm:$0xff]
    %v1202 = vld [vmem:[#allocation17 + $0x318] sm:$0xff]
    %v1203 = vld [vmem:[#allocation17 + $0x320] sm:$0xff]
    %v1204 = vld [vmem:[#allocation17 + $0x328] sm:$0xff]
    %v1205 = vld [vmem:[#allocation17 + $0x330] sm:$0xff]
    %v1206 = vld [vmem:[#allocation17 + $0x338] sm:$0xff]
    %v1207 = vld [vmem:[#allocation17 + $0x340] sm:$0xff]
    %v1208 = vld [vmem:[#allocation17 + $0x348] sm:$0xff]
    %v1209 = vld [vmem:[#allocation17 + $0x350] sm:$0xff]
    %v1210 = vld [vmem:[#allocation17 + $0x358] sm:$0xff]
    %v1211 = vld [vmem:[#allocation17 + $0x360] sm:$0xff]
    %v1212 = vld [vmem:[#allocation17 + $0x368] sm:$0xff]
    %v1213 = vld [vmem:[#allocation17 + $0x370] sm:$0xff]
    %v1214 = vld [vmem:[#allocation17 + $0x378] sm:$0xff]
    %v1215 = vld [vmem:[#allocation17 + $0x380] sm:$0xff]
    %v1216 = vld [vmem:[#allocation17 + $0x388] sm:$0xff]
    %v1217 = vld [vmem:[#allocation17 + $0x390] sm:$0xff]
    %v1218 = vld [vmem:[#allocation17 + $0x398] sm:$0xff]
    %v1219 = vld [vmem:[#allocation17 + $0x3a0] sm:$0xff]
    %v1220 = vld [vmem:[#allocation17 + $0x3a8] sm:$0xff]
    %v1221 = vld [vmem:[#allocation17 + $0x3b0] sm:$0xff]
    %v1222 = vld [vmem:[#allocation17 + $0x3b8] sm:$0xff]
    %v1223 = vld [vmem:[#allocation17 + $0x3c0] sm:$0xff]
    %v1224 = vld [vmem:[#allocation17 + $0x3c8] sm:$0xff]
    %v1225 = vld [vmem:[#allocation17 + $0x3d0] sm:$0xff]
    %v1226 = vld [vmem:[#allocation17 + $0x3d8] sm:$0xff]
    %v1227 = vld [vmem:[#allocation17 + $0x3e0] sm:$0xff]
    %v1228 = vld [vmem:[#allocation17 + $0x3e8] sm:$0xff]
    %v1229 = vld [vmem:[#allocation17 + $0x3f0] sm:$0xff]
    %v1230 = vld [vmem:[#allocation17 + $0x3f8] sm:$0xff]
    %v1231 = vld [vmem:[#allocation17 + $0x400] sm:$0xff]
    %v1232 = vld [vmem:[#allocation17 + $0x408] sm:$0xff]
    %v1233 = vld [vmem:[#allocation17 + $0x410] sm:$0xff]
    %v1234 = vld [vmem:[#allocation17 + $0x418] sm:$0xff]
    %v1235 = vld [vmem:[#allocation17 + $0x420] sm:$0xff]
    %v1236 = vld [vmem:[#allocation17 + $0x428] sm:$0xff]
    %v1237 = vld [vmem:[#allocation17 + $0x430] sm:$0xff]
    %v1238 = vld [vmem:[#allocation17 + $0x438] sm:$0xff]
    %v1239 = vld [vmem:[#allocation17 + $0x440] sm:$0xff]
    %v1240 = vld [vmem:[#allocation17 + $0x448] sm:$0xff]
    %v1241 = vld [vmem:[#allocation17 + $0x450] sm:$0xff]
    %v1242 = vld [vmem:[#allocation17 + $0x458] sm:$0xff]
    %v1243 = vld [vmem:[#allocation17 + $0x460] sm:$0xff]
    %v1244 = vld [vmem:[#allocation17 + $0x468] sm:$0xff]
    %v1245 = vld [vmem:[#allocation17 + $0x470] sm:$0xff]
    %v1246 = vld [vmem:[#allocation17 + $0x478] sm:$0xff]
    %v1247 = vld [vmem:[#allocation17 + $0x480] sm:$0xff]
    %v1248 = vld [vmem:[#allocation17 + $0x488] sm:$0xff]
    %v1249 = vld [vmem:[#allocation17 + $0x490] sm:$0xff]
    %v1250 = vld [vmem:[#allocation17 + $0x498] sm:$0xff]
    %v1251 = vld [vmem:[#allocation17 + $0x4a0] sm:$0xff]
    %v1252 = vld [vmem:[#allocation17 + $0x4a8] sm:$0xff]
    %v1253 = vld [vmem:[#allocation17 + $0x4b0] sm:$0xff]
    %v1254 = vld [vmem:[#allocation17 + $0x4b8] sm:$0xff]
    %v1255 = vld [vmem:[#allocation17 + $0x4c0] sm:$0xff]
    %v1256 = vld [vmem:[#allocation17 + $0x4c8] sm:$0xff]
    %v1257 = vld [vmem:[#allocation17 + $0x4d0] sm:$0xff]
    %v1258 = vld [vmem:[#allocation17 + $0x4d8] sm:$0xff]
    %v1259 = vld [vmem:[#allocation17 + $0x4e0] sm:$0xff]
    %v1260 = vld [vmem:[#allocation17 + $0x4e8] sm:$0xff]
    %v1261 = vld [vmem:[#allocation17 + $0x4f0] sm:$0xff]
    %v1262 = vld [vmem:[#allocation17 + $0x4f8] sm:$0xff]
    %v1263 = vld [vmem:[#allocation17 + $0x500] sm:$0xff]
    %v1264 = vld [vmem:[#allocation17 + $0x508] sm:$0xff]
    %v1265 = vld [vmem:[#allocation17 + $0x510] sm:$0xff]
    %v1266 = vld [vmem:[#allocation17 + $0x518] sm:$0xff]
    %v1267 = vld [vmem:[#allocation17 + $0x520] sm:$0xff]
    %v1268 = vld [vmem:[#allocation17 + $0x528] sm:$0xff]
    %v1269 = vld [vmem:[#allocation17 + $0x530] sm:$0xff]
    %v1270 = vld [vmem:[#allocation17 + $0x538] sm:$0xff]
    %v1271 = vld [vmem:[#allocation17 + $0x540] sm:$0xff]
    %v1272 = vld [vmem:[#allocation17 + $0x548] sm:$0xff]
    %v1273 = vld [vmem:[#allocation17 + $0x550] sm:$0xff]
    %v1274 = vld [vmem:[#allocation17 + $0x558] sm:$0xff]
    %v1275 = vld [vmem:[#allocation17 + $0x560] sm:$0xff]
    %v1276 = vld [vmem:[#allocation17 + $0x568] sm:$0xff]
    %v1277 = vld [vmem:[#allocation17 + $0x570] sm:$0xff]
    %v1278 = vld [vmem:[#allocation17 + $0x578] sm:$0xff]
    %v1279 = vld [vmem:[#allocation17 + $0x580] sm:$0xff]
    %v1280 = vld [vmem:[#allocation17 + $0x588] sm:$0xff]
    %v1281 = vld [vmem:[#allocation17 + $0x590] sm:$0xff]
    %v1282 = vld [vmem:[#allocation17 + $0x598] sm:$0xff]
    %v1283 = vld [vmem:[#allocation17 + $0x5a0] sm:$0xff]
    %v1284 = vld [vmem:[#allocation17 + $0x5a8] sm:$0xff]
    %v1285 = vld [vmem:[#allocation17 + $0x5b0] sm:$0xff]
    %v1286 = vld [vmem:[#allocation17 + $0x5b8] sm:$0xff]
    %v1287 = vld [vmem:[#allocation17 + $0x5c0] sm:$0xff]
    %v1288 = vld [vmem:[#allocation17 + $0x5c8] sm:$0xff]
    %v1289 = vld [vmem:[#allocation17 + $0x5d0] sm:$0xff]
    %v1290 = vld [vmem:[#allocation17 + $0x5d8] sm:$0xff]
    %v1291 = vld [vmem:[#allocation17 + $0x5e0] sm:$0xff]
    %v1292 = vld [vmem:[#allocation17 + $0x5e8] sm:$0xff]
    %v1293 = vld [vmem:[#allocation17 + $0x5f0] sm:$0xff]
    %v1294 = vld [vmem:[#allocation17 + $0x5f8] sm:$0xff]
    %v1295 = vld [vmem:[#allocation17 + $0x600] sm:$0xff]
    %v1296 = vld [vmem:[#allocation17 + $0x608] sm:$0xff]
    %v1297 = vld [vmem:[#allocation17 + $0x610] sm:$0xff]
    %v1298 = vld [vmem:[#allocation17 + $0x618] sm:$0xff]
    %v1299 = vld [vmem:[#allocation17 + $0x620] sm:$0xff]
    %v1300 = vld [vmem:[#allocation17 + $0x628] sm:$0xff]
    %v1301 = vld [vmem:[#allocation17 + $0x630] sm:$0xff]
    %v1302 = vld [vmem:[#allocation17 + $0x638] sm:$0xff]
    %v1303 = vld [vmem:[#allocation17 + $0x640] sm:$0xff]
    %v1304 = vld [vmem:[#allocation17 + $0x648] sm:$0xff]
    %v1305 = vld [vmem:[#allocation17 + $0x650] sm:$0xff]
    %v1306 = vld [vmem:[#allocation17 + $0x658] sm:$0xff]
    %v1307 = vld [vmem:[#allocation17 + $0x660] sm:$0xff]
    %v1308 = vld [vmem:[#allocation17 + $0x668] sm:$0xff]
    %v1309 = vld [vmem:[#allocation17 + $0x670] sm:$0xff]
    %v1310 = vld [vmem:[#allocation17 + $0x678] sm:$0xff]
    %v1311 = vld [vmem:[#allocation17 + $0x680] sm:$0xff]
    %v1312 = vld [vmem:[#allocation17 + $0x688] sm:$0xff]
    %v1313 = vld [vmem:[#allocation17 + $0x690] sm:$0xff]
    %v1314 = vld [vmem:[#allocation17 + $0x698] sm:$0xff]
    %v1315 = vld [vmem:[#allocation17 + $0x6a0] sm:$0xff]
    %v1316 = vld [vmem:[#allocation17 + $0x6a8] sm:$0xff]
    %v1317 = vld [vmem:[#allocation17 + $0x6b0] sm:$0xff]
    %v1318 = vld [vmem:[#allocation17 + $0x6b8] sm:$0xff]
    %v1319 = vld [vmem:[#allocation17 + $0x6c0] sm:$0xff]
    %v1320 = vld [vmem:[#allocation17 + $0x6c8] sm:$0xff]
    %v1321 = vld [vmem:[#allocation17 + $0x6d0] sm:$0xff]
    %v1322 = vld [vmem:[#allocation17 + $0x6d8] sm:$0xff]
    %v1323 = vld [vmem:[#allocation17 + $0x6e0] sm:$0xff]
    %v1324 = vld [vmem:[#allocation17 + $0x6e8] sm:$0xff]
    %v1325 = vld [vmem:[#allocation17 + $0x6f0] sm:$0xff]
    %v1326 = vld [vmem:[#allocation17 + $0x6f8] sm:$0xff]
    %v1327 = vld [vmem:[#allocation17 + $0x700] sm:$0xff]
    %v1328 = vld [vmem:[#allocation17 + $0x708] sm:$0xff]
    %v1329 = vld [vmem:[#allocation17 + $0x710] sm:$0xff]
    %v1330 = vld [vmem:[#allocation17 + $0x718] sm:$0xff]
    %v1331 = vld [vmem:[#allocation17 + $0x720] sm:$0xff]
    %v1332 = vld [vmem:[#allocation17 + $0x728] sm:$0xff]
    %v1333 = vld [vmem:[#allocation17 + $0x730] sm:$0xff]
    %v1334 = vld [vmem:[#allocation17 + $0x738] sm:$0xff]
    %v1335 = vld [vmem:[#allocation17 + $0x740] sm:$0xff]
    %v1336 = vld [vmem:[#allocation17 + $0x748] sm:$0xff]
    %v1337 = vld [vmem:[#allocation17 + $0x750] sm:$0xff]
    %v1338 = vld [vmem:[#allocation17 + $0x758] sm:$0xff]
    %v1339 = vld [vmem:[#allocation17 + $0x760] sm:$0xff]
    %v1340 = vld [vmem:[#allocation17 + $0x768] sm:$0xff]
    %v1341 = vld [vmem:[#allocation17 + $0x770] sm:$0xff]
    %v1342 = vld [vmem:[#allocation17 + $0x778] sm:$0xff]
    %v1343 = vld [vmem:[#allocation17 + $0x780] sm:$0xff]
    %v1344 = vld [vmem:[#allocation17 + $0x788] sm:$0xff]
    %v1345 = vld [vmem:[#allocation17 + $0x790] sm:$0xff]
    %v1346 = vld [vmem:[#allocation17 + $0x798] sm:$0xff]
    %v1347 = vld [vmem:[#allocation17 + $0x7a0] sm:$0xff]
    %v1348 = vld [vmem:[#allocation17 + $0x7a8] sm:$0xff]
    %v1349 = vld [vmem:[#allocation17 + $0x7b0] sm:$0xff]
    %v1350 = vld [vmem:[#allocation17 + $0x7b8] sm:$0xff]
    %v1351 = vld [vmem:[#allocation17 + $0x7c0] sm:$0xff]
    %v1352 = vld [vmem:[#allocation17 + $0x7c8] sm:$0xff]
    %v1353 = vld [vmem:[#allocation17 + $0x7d0] sm:$0xff]
    %v1354 = vld [vmem:[#allocation17 + $0x7d8] sm:$0xff]
    %v1355 = vld [vmem:[#allocation17 + $0x7e0] sm:$0xff]
    %v1356 = vld [vmem:[#allocation17 + $0x7e8] sm:$0xff]
    %v1357 = vld [vmem:[#allocation17 + $0x7f0] sm:$0xff]
    %v1358 = vld [vmem:[#allocation17 + $0x7f8] sm:$0xff]
    %v1359 = vld [vmem:[#allocation19] sm:$0xff]
    %v1361 = vlaneseq
    %v1362 = vshrl.u32 %v1361, 7
    %v1363 = vsub.s32 0, %v1362
    %v1364 = vrot.slane %v1359, %v1363
    %v1365 = vlaneseq
    %v1366 = vshrl.u32 %v1365, 7
    %v1367 = vsub.s32 1, %v1366
    %v1368 = vrot.slane %v1359, %v1367
    %v1369 = vlaneseq
    %v1370 = vshrl.u32 %v1369, 7
    %v1371 = vsub.s32 2, %v1370
    %v1372 = vrot.slane %v1359, %v1371
    %v1373 = vlaneseq
    %v1374 = vshrl.u32 %v1373, 7
    %v1375 = vsub.s32 3, %v1374
    %v1376 = vrot.slane %v1359, %v1375
    %v1377 = vlaneseq
    %v1378 = vshrl.u32 %v1377, 7
    %v1379 = vsub.s32 4, %v1378
    %v1380 = vrot.slane %v1359, %v1379
    %v1381 = vlaneseq
    %v1382 = vshrl.u32 %v1381, 7
    %v1383 = vsub.s32 5, %v1382
    %v1384 = vrot.slane %v1359, %v1383
    %v1385 = vlaneseq
    %v1386 = vshrl.u32 %v1385, 7
    %v1387 = vsub.s32 6, %v1386
    %v1388 = vrot.slane %v1359, %v1387
    %v1389 = vlaneseq
    %v1390 = vshrl.u32 %v1389, 7
    %v1391 = vsub.s32 7, %v1390
    %v1392 = vrot.slane %v1359, %v1391
    %1401 = vmatprep.subr.mxu0 %v1104
    %1402 = vmatpush1.msra.mxu0 %v1103
    %1403 = vmatprep.subr.mxu0 %v1112
    %1404 = vmatpush1.msra.mxu0 %v1111
    %1405 = vmatprep.subr.mxu0 %v1120
    %1406 = vmatpush1.msra.mxu0 %v1119
    %1407 = vmatprep.subr.mxu0 %v1128
    %1408 = vmatpush1.msra.mxu0 %v1127
    %1409 = vmatprep.subr.mxu0 %v1136
    %1410 = vmatpush1.msra.mxu0 %v1135
    %1411 = vmatprep.subr.mxu0 %v1144
    %1412 = vmatpush1.msra.mxu0 %v1143
    %1413 = vmatprep.subr.mxu0 %v1152
    %1414 = vmatpush1.msra.mxu0 %v1151
    %1415 = vmatprep.subr.mxu0 %v1160
    %1416 = vmatpush1.msra.mxu0 %v1159
    %1417 = vmatprep.subr.mxu0 %v1168
    %1418 = vmatpush1.msra.mxu0 %v1167
    %1419 = vmatprep.subr.mxu0 %v1176
    %1420 = vmatpush1.msra.mxu0 %v1175
    %1421 = vmatprep.subr.mxu0 %v1184
    %1422 = vmatpush1.msra.mxu0 %v1183
    %1423 = vmatprep.subr.mxu0 %v1192
    %1424 = vmatpush1.msra.mxu0 %v1191
    %1425 = vmatprep.subr.mxu0 %v1200
    %1426 = vmatpush1.msra.mxu0 %v1199
    %1427 = vmatprep.subr.mxu0 %v1208
    %1428 = vmatpush1.msra.mxu0 %v1207
    %1429 = vmatprep.subr.mxu0 %v1216
    %1430 = vmatpush1.msra.mxu0 %v1215
    %1431 = vmatprep.subr.mxu0 %v1224
    %1432 = vmatpush1.msra.mxu0 %v1223
    %1433 = vmatprep.subr.mxu0 %v1232
    %1434 = vmatpush1.msra.mxu0 %v1231
    %1435 = vmatprep.subr.mxu0 %v1240
    %1436 = vmatpush1.msra.mxu0 %v1239
    %1437 = vmatprep.subr.mxu0 %v1248
    %1438 = vmatpush1.msra.mxu0 %v1247
    %1439 = vmatprep.subr.mxu0 %v1256
    %1440 = vmatpush1.msra.mxu0 %v1255
    %1441 = vmatprep.subr.mxu0 %v1264
    %1442 = vmatpush1.msra.mxu0 %v1263
    %1443 = vmatprep.subr.mxu0 %v1272
    %1444 = vmatpush1.msra.mxu0 %v1271
    %1445 = vmatprep.subr.mxu0 %v1280
    %1446 = vmatpush1.msra.mxu0 %v1279
    %1447 = vmatprep.subr.mxu0 %v1288
    %1448 = vmatpush1.msra.mxu0 %v1287
    %1449 = vmatprep.subr.mxu0 %v1296
    %1450 = vmatpush1.msra.mxu0 %v1295
    %1451 = vmatprep.subr.mxu0 %v1304
    %1452 = vmatpush1.msra.mxu0 %v1303
    %1453 = vmatprep.subr.mxu0 %v1312
    %1454 = vmatpush1.msra.mxu0 %v1311
    %1455 = vmatprep.subr.mxu0 %v1320
    %1456 = vmatpush1.msra.mxu0 %v1319
    %1457 = vmatprep.subr.mxu0 %v1328
    %1458 = vmatpush1.msra.mxu0 %v1327
    %1459 = vmatprep.subr.mxu0 %v1336
    %1460 = vmatpush1.msra.mxu0 %v1335
    %1461 = vmatprep.subr.mxu0 %v1344
    %1462 = vmatpush1.msra.mxu0 %v1343
    %1463 = vmatprep.subr.mxu0 %v1352
    %1464 = vmatpush1.msra.mxu0 %v1351
    %1465 = vmatprep.mubr.f32.mxu0 %v1102
    %1466 = vmatmul.mubr.f32.gmra.mrb[0].mxu0 %v1101
    %v1467 = vpop.f32.mrb[0].mxu0
    %v1468 = vadd.f32 %v1364, %v1467
    %v1469 = vpop.f32.mrb[0].mxu0
    %v1470 = vadd.f32 %v1368, %v1469
    %1471 = vdwg.mxu0
    %1472 = vmatprep.subr.mxu0 %v1106
    %1473 = vmatpush1.msra.mxu0 %v1105
    %1474 = vmatprep.subr.mxu0 %v1114
    %1475 = vmatpush1.msra.mxu0 %v1113
    %1476 = vmatprep.subr.mxu0 %v1122
    %1477 = vmatpush1.msra.mxu0 %v1121
    %1478 = vmatprep.subr.mxu0 %v1130
    %1479 = vmatpush1.msra.mxu0 %v1129
    %1480 = vmatprep.subr.mxu0 %v1138
    %1481 = vmatpush1.msra.mxu0 %v1137
    %1482 = vmatprep.subr.mxu0 %v1146
    %1483 = vmatpush1.msra.mxu0 %v1145
    %1484 = vmatprep.subr.mxu0 %v1154
    %1485 = vmatpush1.msra.mxu0 %v1153
    %1486 = vmatprep.subr.mxu0 %v1162
    %1487 = vmatpush1.msra.mxu0 %v1161
    %1488 = vmatprep.subr.mxu0 %v1170
    %1489 = vmatpush1.msra.mxu0 %v1169
    %1490 = vmatprep.subr.mxu0 %v1178
    %1491 = vmatpush1.msra.mxu0 %v1177
    %1492 = vmatprep.subr.mxu0 %v1186
    %1493 = vmatpush1.msra.mxu0 %v1185
    %1494 = vmatprep.subr.mxu0 %v1194
    %1495 = vmatpush1.msra.mxu0 %v1193
    %1496 = vmatprep.subr.mxu0 %v1202
    %1497 = vmatpush1.msra.mxu0 %v1201
    %1498 = vmatprep.subr.mxu0 %v1210
    %1499 = vmatpush1.msra.mxu0 %v1209
    %1500 = vmatprep.subr.mxu0 %v1218
    %1501 = vmatpush1.msra.mxu0 %v1217
    %1502 = vmatprep.subr.mxu0 %v1226
    %1503 = vmatpush1.msra.mxu0 %v1225
    %1504 = vmatprep.subr.mxu0 %v1234
    %1505 = vmatpush1.msra.mxu0 %v1233
    %1506 = vmatprep.subr.mxu0 %v1242
    %1507 = vmatpush1.msra.mxu0 %v1241
    %1508 = vmatprep.subr.mxu0 %v1250
    %1509 = vmatpush1.msra.mxu0 %v1249
    %1510 = vmatprep.subr.mxu0 %v1258
    %1511 = vmatpush1.msra.mxu0 %v1257
    %1512 = vmatprep.subr.mxu0 %v1266
    %1513 = vmatpush1.msra.mxu0 %v1265
    %1514 = vmatprep.subr.mxu0 %v1274
    %1515 = vmatpush1.msra.mxu0 %v1273
    %1516 = vmatprep.subr.mxu0 %v1282
    %1517 = vmatpush1.msra.mxu0 %v1281
    %1518 = vmatprep.subr.mxu0 %v1290
    %1519 = vmatpush1.msra.mxu0 %v1289
    %1520 = vmatprep.subr.mxu0 %v1298
    %1521 = vmatpush1.msra.mxu0 %v1297
    %1522 = vmatprep.subr.mxu0 %v1306
    %1523 = vmatpush1.msra.mxu0 %v1305
    %1524 = vmatprep.subr.mxu0 %v1314
    %1525 = vmatpush1.msra.mxu0 %v1313
    %1526 = vmatprep.subr.mxu0 %v1322
    %1527 = vmatpush1.msra.mxu0 %v1321
    %1528 = vmatprep.subr.mxu0 %v1330
    %1529 = vmatpush1.msra.mxu0 %v1329
    %1530 = vmatprep.subr.mxu0 %v1338
    %1531 = vmatpush1.msra.mxu0 %v1337
    %1532 = vmatprep.subr.mxu0 %v1346
    %1533 = vmatpush1.msra.mxu0 %v1345
    %1534 = vmatprep.subr.mxu0 %v1354
    %1535 = vmatpush1.msra.mxu0 %v1353
    %1536 = vmatprep.mubr.f32.mxu0 %v1102
    %1537 = vmatmul.mubr.f32.gmra.mrb[0].mxu0 %v1101
    %v1538 = vpop.f32.mrb[0].mxu0
    %v1539 = vadd.f32 %v1372, %v1538
    %v1540 = vpop.f32.mrb[0].mxu0
    %v1541 = vadd.f32 %v1376, %v1540
    %1542 = vdwg.mxu0
    %1543 = vmatprep.subr.mxu0 %v1108
    %1544 = vmatpush1.msra.mxu0 %v1107
    %1545 = vmatprep.subr.mxu0 %v1116
    %1546 = vmatpush1.msra.mxu0 %v1115
    %1547 = vmatprep.subr.mxu0 %v1124
    %1548 = vmatpush1.msra.mxu0 %v1123
    %1549 = vmatprep.subr.mxu0 %v1132
    %1550 = vmatpush1.msra.mxu0 %v1131
    %1551 = vmatprep.subr.mxu0 %v1140
    %1552 = vmatpush1.msra.mxu0 %v1139
    %1553 = vmatprep.subr.mxu0 %v1148
    %1554 = vmatpush1.msra.mxu0 %v1147
    %1555 = vmatprep.subr.mxu0 %v1156
    %1556 = vmatpush1.msra.mxu0 %v1155
    %1557 = vmatprep.subr.mxu0 %v1164
    %1558 = vmatpush1.msra.mxu0 %v1163
    %1559 = vmatprep.subr.mxu0 %v1172
    %1560 = vmatpush1.msra.mxu0 %v1171
    %1561 = vmatprep.subr.mxu0 %v1180
    %1562 = vmatpush1.msra.mxu0 %v1179
    %1563 = vmatprep.subr.mxu0 %v1188
    %1564 = vmatpush1.msra.mxu0 %v1187
    %1565 = vmatprep.subr.mxu0 %v1196
    %1566 = vmatpush1.msra.mxu0 %v1195
    %1567 = vmatprep.subr.mxu0 %v1204
    %1568 = vmatpush1.msra.mxu0 %v1203
    %1569 = vmatprep.subr.mxu0 %v1212
    %1570 = vmatpush1.msra.mxu0 %v1211
    %1571 = vmatprep.subr.mxu0 %v1220
    %1572 = vmatpush1.msra.mxu0 %v1219
    %1573 = vmatprep.subr.mxu0 %v1228
    %1574 = vmatpush1.msra.mxu0 %v1227
    %1575 = vmatprep.subr.mxu0 %v1236
    %1576 = vmatpush1.msra.mxu0 %v1235
    %1577 = vmatprep.subr.mxu0 %v1244
    %1578 = vmatpush1.msra.mxu0 %v1243
    %1579 = vmatprep.subr.mxu0 %v1252
    %1580 = vmatpush1.msra.mxu0 %v1251
    %1581 = vmatprep.subr.mxu0 %v1260
    %1582 = vmatpush1.msra.mxu0 %v1259
    %1583 = vmatprep.subr.mxu0 %v1268
    %1584 = vmatpush1.msra.mxu0 %v1267
    %1585 = vmatprep.subr.mxu0 %v1276
    %1586 = vmatpush1.msra.mxu0 %v1275
    %1587 = vmatprep.subr.mxu0 %v1284
    %1588 = vmatpush1.msra.mxu0 %v1283
    %1589 = vmatprep.subr.mxu0 %v1292
    %1590 = vmatpush1.msra.mxu0 %v1291
    %1591 = vmatprep.subr.mxu0 %v1300
    %1592 = vmatpush1.msra.mxu0 %v1299
    %1593 = vmatprep.subr.mxu0 %v1308
    %1594 = vmatpush1.msra.mxu0 %v1307
    %1595 = vmatprep.subr.mxu0 %v1316
    %1596 = vmatpush1.msra.mxu0 %v1315
    %1597 = vmatprep.subr.mxu0 %v1324
    %1598 = vmatpush1.msra.mxu0 %v1323
    %1599 = vmatprep.subr.mxu0 %v1332
    %1600 = vmatpush1.msra.mxu0 %v1331
    %1601 = vmatprep.subr.mxu0 %v1340
    %1602 = vmatpush1.msra.mxu0 %v1339
    %1603 = vmatprep.subr.mxu0 %v1348
    %1604 = vmatpush1.msra.mxu0 %v1347
    %1605 = vmatprep.subr.mxu0 %v1356
    %1606 = vmatpush1.msra.mxu0 %v1355
    %1607 = vmatprep.mubr.f32.mxu0 %v1102
    %1608 = vmatmul.mubr.f32.gmra.mrb[0].mxu0 %v1101
    %v1609 = vpop.f32.mrb[0].mxu0
    %v1610 = vadd.f32 %v1380, %v1609
    %v1611 = vpop.f32.mrb[0].mxu0
    %v1612 = vadd.f32 %v1384, %v1611
    %1613 = vdwg.mxu0
    %1614 = vmatprep.subr.mxu0 %v1110
    %1615 = vmatpush1.msra.mxu0 %v1109
    %1616 = vmatprep.subr.mxu0 %v1118
    %1617 = vmatpush1.msra.mxu0 %v1117
    %1618 = vmatprep.subr.mxu0 %v1126
    %1619 = vmatpush1.msra.mxu0 %v1125
    %1620 = vmatprep.subr.mxu0 %v1134
    %1621 = vmatpush1.msra.mxu0 %v1133
    %1622 = vmatprep.subr.mxu0 %v1142
    %1623 = vmatpush1.msra.mxu0 %v1141
    %1624 = vmatprep.subr.mxu0 %v1150
    %1625 = vmatpush1.msra.mxu0 %v1149
    %1626 = vmatprep.subr.mxu0 %v1158
    %1627 = vmatpush1.msra.mxu0 %v1157
    %1628 = vmatprep.subr.mxu0 %v1166
    %1629 = vmatpush1.msra.mxu0 %v1165
    %1630 = vmatprep.subr.mxu0 %v1174
    %1631 = vmatpush1.msra.mxu0 %v1173
    %1632 = vmatprep.subr.mxu0 %v1182
    %1633 = vmatpush1.msra.mxu0 %v1181
    %1634 = vmatprep.subr.mxu0 %v1190
    %1635 = vmatpush1.msra.mxu0 %v1189
    %1636 = vmatprep.subr.mxu0 %v1198
    %1637 = vmatpush1.msra.mxu0 %v1197
    %1638 = vmatprep.subr.mxu0 %v1206
    %1639 = vmatpush1.msra.mxu0 %v1205
    %1640 = vmatprep.subr.mxu0 %v1214
    %1641 = vmatpush1.msra.mxu0 %v1213
    %1642 = vmatprep.subr.mxu0 %v1222
    %1643 = vmatpush1.msra.mxu0 %v1221
    %1644 = vmatprep.subr.mxu0 %v1230
    %1645 = vmatpush1.msra.mxu0 %v1229
    %1646 = vmatprep.subr.mxu0 %v1238
    %1647 = vmatpush1.msra.mxu0 %v1237
    %1648 = vmatprep.subr.mxu0 %v1246
    %1649 = vmatpush1.msra.mxu0 %v1245
    %1650 = vmatprep.subr.mxu0 %v1254
    %1651 = vmatpush1.msra.mxu0 %v1253
    %1652 = vmatprep.subr.mxu0 %v1262
    %1653 = vmatpush1.msra.mxu0 %v1261
    %1654 = vmatprep.subr.mxu0 %v1270
    %1655 = vmatpush1.msra.mxu0 %v1269
    %1656 = vmatprep.subr.mxu0 %v1278
    %1657 = vmatpush1.msra.mxu0 %v1277
    %1658 = vmatprep.subr.mxu0 %v1286
    %1659 = vmatpush1.msra.mxu0 %v1285
    %1660 = vmatprep.subr.mxu0 %v1294
    %1661 = vmatpush1.msra.mxu0 %v1293
    %1662 = vmatprep.subr.mxu0 %v1302
    %1663 = vmatpush1.msra.mxu0 %v1301
    %1664 = vmatprep.subr.mxu0 %v1310
    %1665 = vmatpush1.msra.mxu0 %v1309
    %1666 = vmatprep.subr.mxu0 %v1318
    %1667 = vmatpush1.msra.mxu0 %v1317
    %1668 = vmatprep.subr.mxu0 %v1326
    %1669 = vmatpush1.msra.mxu0 %v1325
    %1670 = vmatprep.subr.mxu0 %v1334
    %1671 = vmatpush1.msra.mxu0 %v1333
    %1672 = vmatprep.subr.mxu0 %v1342
    %1673 = vmatpush1.msra.mxu0 %v1341
    %1674 = vmatprep.subr.mxu0 %v1350
    %1675 = vmatpush1.msra.mxu0 %v1349
    %1676 = vmatprep.subr.mxu0 %v1358
    %1677 = vmatpush1.msra.mxu0 %v1357
    %1678 = vmatprep.mubr.f32.mxu0 %v1102
    %1679 = vmatmul.mubr.f32.gmra.mrb[0].mxu0 %v1101
    %v1680 = vpop.f32.mrb[0].mxu0
    %v1681 = vadd.f32 %v1388, %v1680
    %v1682 = vpop.f32.mrb[0].mxu0
    %v1683 = vadd.f32 %v1392, %v1682
    %1684 = vdwg.mxu0
    %vm1685 = vcmp.ge.f32.partialorder %v1468, 0.0
    %vm1686 = vcmp.ge.f32.partialorder %v1470, 0.0
    %vm1687 = vcmp.ge.f32.partialorder %v1539, 0.0
    %vm1688 = vcmp.ge.f32.partialorder %v1541, 0.0
    %vm1689 = vcmp.ge.f32.partialorder %v1610, 0.0
    %vm1690 = vcmp.ge.f32.partialorder %v1612, 0.0
    %vm1691 = vcmp.ge.f32.partialorder %v1681, 0.0
    %vm1692 = vcmp.ge.f32.partialorder %v1683, 0.0
    %v1693 = vmul.f32 %v1468, 0.01
    %v1694 = vmul.f32 %v1470, 0.01
    %v1695 = vmul.f32 %v1539, 0.01
    %v1696 = vmul.f32 %v1541, 0.01
    %v1697 = vmul.f32 %v1610, 0.01
    %v1698 = vmul.f32 %v1612, 0.01
    %v1699 = vmul.f32 %v1681, 0.01
    %v1700 = vmul.f32 %v1683, 0.01
    %v1701 = vsel %vm1685, %v1468, %v1693
    %v1702 = vsel %vm1686, %v1470, %v1694
    %v1703 = vsel %vm1687, %v1539, %v1695
    %v1704 = vsel %vm1688, %v1541, %v1696
    %v1705 = vsel %vm1689, %v1610, %v1697
    %v1706 = vsel %vm1690, %v1612, %v1698
    %v1707 = vsel %vm1691, %v1681, %v1699
    %v1708 = vsel %vm1692, %v1683, %v1700
    %v1709 = vld [vmem:[#allocation20] sm:$0xff]
    %v1710 = vld [vmem:[#allocation20 + $0x8] sm:$0xff]
    %v1711 = vld [vmem:[#allocation20 + $0x10] sm:$0xff]
    %v1712 = vld [vmem:[#allocation20 + $0x18] sm:$0xff]
    %v1713 = vld [vmem:[#allocation20 + $0x20] sm:$0xff]
    %v1714 = vld [vmem:[#allocation20 + $0x28] sm:$0xff]
    %v1715 = vld [vmem:[#allocation20 + $0x30] sm:$0xff]
    %v1716 = vld [vmem:[#allocation20 + $0x38] sm:$0xff]
    %v1717 = vld [vmem:[#allocation20 + $0x40] sm:$0xff]
    %v1718 = vld [vmem:[#allocation20 + $0x48] sm:$0xff]
    %v1719 = vld [vmem:[#allocation20 + $0x50] sm:$0xff]
    %v1720 = vld [vmem:[#allocation20 + $0x58] sm:$0xff]
    %v1721 = vld [vmem:[#allocation20 + $0x60] sm:$0xff]
    %v1722 = vld [vmem:[#allocation20 + $0x68] sm:$0xff]
    %v1723 = vld [vmem:[#allocation20 + $0x70] sm:$0xff]
    %v1724 = vld [vmem:[#allocation20 + $0x78] sm:$0xff]
    %v1725 = vld [vmem:[#allocation20 + $0x80] sm:$0xff]
    %v1726 = vld [vmem:[#allocation20 + $0x88] sm:$0xff]
    %v1727 = vld [vmem:[#allocation20 + $0x90] sm:$0xff]
    %v1728 = vld [vmem:[#allocation20 + $0x98] sm:$0xff]
    %v1729 = vld [vmem:[#allocation20 + $0xa0] sm:$0xff]
    %v1730 = vld [vmem:[#allocation20 + $0xa8] sm:$0xff]
    %v1731 = vld [vmem:[#allocation20 + $0xb0] sm:$0xff]
    %v1732 = vld [vmem:[#allocation20 + $0xb8] sm:$0xff]
    %v1733 = vld [vmem:[#allocation20 + $0xc0] sm:$0xff]
    %v1734 = vld [vmem:[#allocation20 + $0xc8] sm:$0xff]
    %v1735 = vld [vmem:[#allocation20 + $0xd0] sm:$0xff]
    %v1736 = vld [vmem:[#allocation20 + $0xd8] sm:$0xff]
    %v1737 = vld [vmem:[#allocation20 + $0xe0] sm:$0xff]
    %v1738 = vld [vmem:[#allocation20 + $0xe8] sm:$0xff]
    %v1739 = vld [vmem:[#allocation20 + $0xf0] sm:$0xff]
    %v1740 = vld [vmem:[#allocation20 + $0xf8] sm:$0xff]
    %v1741 = vld [vmem:[#allocation20 + $0x100] sm:$0xff]
    %v1742 = vld [vmem:[#allocation20 + $0x108] sm:$0xff]
    %v1743 = vld [vmem:[#allocation20 + $0x110] sm:$0xff]
    %v1744 = vld [vmem:[#allocation20 + $0x118] sm:$0xff]
    %v1745 = vld [vmem:[#allocation20 + $0x120] sm:$0xff]
    %v1746 = vld [vmem:[#allocation20 + $0x128] sm:$0xff]
    %v1747 = vld [vmem:[#allocation20 + $0x130] sm:$0xff]
    %v1748 = vld [vmem:[#allocation20 + $0x138] sm:$0xff]
    %v1749 = vld [vmem:[#allocation20 + $0x140] sm:$0xff]
    %v1750 = vld [vmem:[#allocation20 + $0x148] sm:$0xff]
    %v1751 = vld [vmem:[#allocation20 + $0x150] sm:$0xff]
    %v1752 = vld [vmem:[#allocation20 + $0x158] sm:$0xff]
    %v1753 = vld [vmem:[#allocation20 + $0x160] sm:$0xff]
    %v1754 = vld [vmem:[#allocation20 + $0x168] sm:$0xff]
    %v1755 = vld [vmem:[#allocation20 + $0x170] sm:$0xff]
    %v1756 = vld [vmem:[#allocation20 + $0x178] sm:$0xff]
    %v1757 = vld [vmem:[#allocation20 + $0x180] sm:$0xff]
    %v1758 = vld [vmem:[#allocation20 + $0x188] sm:$0xff]
    %v1759 = vld [vmem:[#allocation20 + $0x190] sm:$0xff]
    %v1760 = vld [vmem:[#allocation20 + $0x198] sm:$0xff]
    %v1761 = vld [vmem:[#allocation20 + $0x1a0] sm:$0xff]
    %v1762 = vld [vmem:[#allocation20 + $0x1a8] sm:$0xff]
    %v1763 = vld [vmem:[#allocation20 + $0x1b0] sm:$0xff]
    %v1764 = vld [vmem:[#allocation20 + $0x1b8] sm:$0xff]
    %v1765 = vld [vmem:[#allocation20 + $0x1c0] sm:$0xff]
    %v1766 = vld [vmem:[#allocation20 + $0x1c8] sm:$0xff]
    %v1767 = vld [vmem:[#allocation20 + $0x1d0] sm:$0xff]
    %v1768 = vld [vmem:[#allocation20 + $0x1d8] sm:$0xff]
    %v1769 = vld [vmem:[#allocation20 + $0x1e0] sm:$0xff]
    %v1770 = vld [vmem:[#allocation20 + $0x1e8] sm:$0xff]
    %v1771 = vld [vmem:[#allocation20 + $0x1f0] sm:$0xff]
    %v1772 = vld [vmem:[#allocation20 + $0x1f8] sm:$0xff]
    %v1773 = vld [vmem:[#allocation20 + $0x200] sm:$0xff]
    %v1774 = vld [vmem:[#allocation20 + $0x208] sm:$0xff]
    %v1775 = vld [vmem:[#allocation20 + $0x210] sm:$0xff]
    %v1776 = vld [vmem:[#allocation20 + $0x218] sm:$0xff]
    %v1777 = vld [vmem:[#allocation20 + $0x220] sm:$0xff]
    %v1778 = vld [vmem:[#allocation20 + $0x228] sm:$0xff]
    %v1779 = vld [vmem:[#allocation20 + $0x230] sm:$0xff]
    %v1780 = vld [vmem:[#allocation20 + $0x238] sm:$0xff]
    %v1781 = vld [vmem:[#allocation20 + $0x240] sm:$0xff]
    %v1782 = vld [vmem:[#allocation20 + $0x248] sm:$0xff]
    %v1783 = vld [vmem:[#allocation20 + $0x250] sm:$0xff]
    %v1784 = vld [vmem:[#allocation20 + $0x258] sm:$0xff]
    %v1785 = vld [vmem:[#allocation20 + $0x260] sm:$0xff]
    %v1786 = vld [vmem:[#allocation20 + $0x268] sm:$0xff]
    %v1787 = vld [vmem:[#allocation20 + $0x270] sm:$0xff]
    %v1788 = vld [vmem:[#allocation20 + $0x278] sm:$0xff]
    %v1789 = vld [vmem:[#allocation20 + $0x280] sm:$0xff]
    %v1790 = vld [vmem:[#allocation20 + $0x288] sm:$0xff]
    %v1791 = vld [vmem:[#allocation20 + $0x290] sm:$0xff]
    %v1792 = vld [vmem:[#allocation20 + $0x298] sm:$0xff]
    %v1793 = vld [vmem:[#allocation20 + $0x2a0] sm:$0xff]
    %v1794 = vld [vmem:[#allocation20 + $0x2a8] sm:$0xff]
    %v1795 = vld [vmem:[#allocation20 + $0x2b0] sm:$0xff]
    %v1796 = vld [vmem:[#allocation20 + $0x2b8] sm:$0xff]
    %v1797 = vld [vmem:[#allocation20 + $0x2c0] sm:$0xff]
    %v1798 = vld [vmem:[#allocation20 + $0x2c8] sm:$0xff]
    %v1799 = vld [vmem:[#allocation20 + $0x2d0] sm:$0xff]
    %v1800 = vld [vmem:[#allocation20 + $0x2d8] sm:$0xff]
    %v1801 = vld [vmem:[#allocation20 + $0x2e0] sm:$0xff]
    %v1802 = vld [vmem:[#allocation20 + $0x2e8] sm:$0xff]
    %v1803 = vld [vmem:[#allocation20 + $0x2f0] sm:$0xff]
    %v1804 = vld [vmem:[#allocation20 + $0x2f8] sm:$0xff]
    %v1805 = vld [vmem:[#allocation20 + $0x300] sm:$0xff]
    %v1806 = vld [vmem:[#allocation20 + $0x308] sm:$0xff]
    %v1807 = vld [vmem:[#allocation20 + $0x310] sm:$0xff]
    %v1808 = vld [vmem:[#allocation20 + $0x318] sm:$0xff]
    %v1809 = vld [vmem:[#allocation20 + $0x320] sm:$0xff]
    %v1810 = vld [vmem:[#allocation20 + $0x328] sm:$0xff]
    %v1811 = vld [vmem:[#allocation20 + $0x330] sm:$0xff]
    %v1812 = vld [vmem:[#allocation20 + $0x338] sm:$0xff]
    %v1813 = vld [vmem:[#allocation20 + $0x340] sm:$0xff]
    %v1814 = vld [vmem:[#allocation20 + $0x348] sm:$0xff]
    %v1815 = vld [vmem:[#allocation20 + $0x350] sm:$0xff]
    %v1816 = vld [vmem:[#allocation20 + $0x358] sm:$0xff]
    %v1817 = vld [vmem:[#allocation20 + $0x360] sm:$0xff]
    %v1818 = vld [vmem:[#allocation20 + $0x368] sm:$0xff]
    %v1819 = vld [vmem:[#allocation20 + $0x370] sm:$0xff]
    %v1820 = vld [vmem:[#allocation20 + $0x378] sm:$0xff]
    %v1821 = vld [vmem:[#allocation20 + $0x380] sm:$0xff]
    %v1822 = vld [vmem:[#allocation20 + $0x388] sm:$0xff]
    %v1823 = vld [vmem:[#allocation20 + $0x390] sm:$0xff]
    %v1824 = vld [vmem:[#allocation20 + $0x398] sm:$0xff]
    %v1825 = vld [vmem:[#allocation20 + $0x3a0] sm:$0xff]
    %v1826 = vld [vmem:[#allocation20 + $0x3a8] sm:$0xff]
    %v1827 = vld [vmem:[#allocation20 + $0x3b0] sm:$0xff]
    %v1828 = vld [vmem:[#allocation20 + $0x3b8] sm:$0xff]
    %v1829 = vld [vmem:[#allocation20 + $0x3c0] sm:$0xff]
    %v1830 = vld [vmem:[#allocation20 + $0x3c8] sm:$0xff]
    %v1831 = vld [vmem:[#allocation20 + $0x3d0] sm:$0xff]
    %v1832 = vld [vmem:[#allocation20 + $0x3d8] sm:$0xff]
    %v1833 = vld [vmem:[#allocation20 + $0x3e0] sm:$0xff]
    %v1834 = vld [vmem:[#allocation20 + $0x3e8] sm:$0xff]
    %v1835 = vld [vmem:[#allocation20 + $0x3f0] sm:$0xff]
    %v1836 = vld [vmem:[#allocation20 + $0x3f8] sm:$0xff]
    %v1837 = vld [vmem:[#allocation20 + $0x400] sm:$0xff]
    %v1838 = vld [vmem:[#allocation20 + $0x408] sm:$0xff]
    %v1839 = vld [vmem:[#allocation20 + $0x410] sm:$0xff]
    %v1840 = vld [vmem:[#allocation20 + $0x418] sm:$0xff]
    %v1841 = vld [vmem:[#allocation20 + $0x420] sm:$0xff]
    %v1842 = vld [vmem:[#allocation20 + $0x428] sm:$0xff]
    %v1843 = vld [vmem:[#allocation20 + $0x430] sm:$0xff]
    %v1844 = vld [vmem:[#allocation20 + $0x438] sm:$0xff]
    %v1845 = vld [vmem:[#allocation20 + $0x440] sm:$0xff]
    %v1846 = vld [vmem:[#allocation20 + $0x448] sm:$0xff]
    %v1847 = vld [vmem:[#allocation20 + $0x450] sm:$0xff]
    %v1848 = vld [vmem:[#allocation20 + $0x458] sm:$0xff]
    %v1849 = vld [vmem:[#allocation20 + $0x460] sm:$0xff]
    %v1850 = vld [vmem:[#allocation20 + $0x468] sm:$0xff]
    %v1851 = vld [vmem:[#allocation20 + $0x470] sm:$0xff]
    %v1852 = vld [vmem:[#allocation20 + $0x478] sm:$0xff]
    %v1853 = vld [vmem:[#allocation20 + $0x480] sm:$0xff]
    %v1854 = vld [vmem:[#allocation20 + $0x488] sm:$0xff]
    %v1855 = vld [vmem:[#allocation20 + $0x490] sm:$0xff]
    %v1856 = vld [vmem:[#allocation20 + $0x498] sm:$0xff]
    %v1857 = vld [vmem:[#allocation20 + $0x4a0] sm:$0xff]
    %v1858 = vld [vmem:[#allocation20 + $0x4a8] sm:$0xff]
    %v1859 = vld [vmem:[#allocation20 + $0x4b0] sm:$0xff]
    %v1860 = vld [vmem:[#allocation20 + $0x4b8] sm:$0xff]
    %v1861 = vld [vmem:[#allocation20 + $0x4c0] sm:$0xff]
    %v1862 = vld [vmem:[#allocation20 + $0x4c8] sm:$0xff]
    %v1863 = vld [vmem:[#allocation20 + $0x4d0] sm:$0xff]
    %v1864 = vld [vmem:[#allocation20 + $0x4d8] sm:$0xff]
    %v1865 = vld [vmem:[#allocation20 + $0x4e0] sm:$0xff]
    %v1866 = vld [vmem:[#allocation20 + $0x4e8] sm:$0xff]
    %v1867 = vld [vmem:[#allocation20 + $0x4f0] sm:$0xff]
    %v1868 = vld [vmem:[#allocation20 + $0x4f8] sm:$0xff]
    %v1869 = vld [vmem:[#allocation20 + $0x500] sm:$0xff]
    %v1870 = vld [vmem:[#allocation20 + $0x508] sm:$0xff]
    %v1871 = vld [vmem:[#allocation20 + $0x510] sm:$0xff]
    %v1872 = vld [vmem:[#allocation20 + $0x518] sm:$0xff]
    %v1873 = vld [vmem:[#allocation20 + $0x520] sm:$0xff]
    %v1874 = vld [vmem:[#allocation20 + $0x528] sm:$0xff]
    %v1875 = vld [vmem:[#allocation20 + $0x530] sm:$0xff]
    %v1876 = vld [vmem:[#allocation20 + $0x538] sm:$0xff]
    %v1877 = vld [vmem:[#allocation20 + $0x540] sm:$0xff]
    %v1878 = vld [vmem:[#allocation20 + $0x548] sm:$0xff]
    %v1879 = vld [vmem:[#allocation20 + $0x550] sm:$0xff]
    %v1880 = vld [vmem:[#allocation20 + $0x558] sm:$0xff]
    %v1881 = vld [vmem:[#allocation20 + $0x560] sm:$0xff]
    %v1882 = vld [vmem:[#allocation20 + $0x568] sm:$0xff]
    %v1883 = vld [vmem:[#allocation20 + $0x570] sm:$0xff]
    %v1884 = vld [vmem:[#allocation20 + $0x578] sm:$0xff]
    %v1885 = vld [vmem:[#allocation20 + $0x580] sm:$0xff]
    %v1886 = vld [vmem:[#allocation20 + $0x588] sm:$0xff]
    %v1887 = vld [vmem:[#allocation20 + $0x590] sm:$0xff]
    %v1888 = vld [vmem:[#allocation20 + $0x598] sm:$0xff]
    %v1889 = vld [vmem:[#allocation20 + $0x5a0] sm:$0xff]
    %v1890 = vld [vmem:[#allocation20 + $0x5a8] sm:$0xff]
    %v1891 = vld [vmem:[#allocation20 + $0x5b0] sm:$0xff]
    %v1892 = vld [vmem:[#allocation20 + $0x5b8] sm:$0xff]
    %v1893 = vld [vmem:[#allocation20 + $0x5c0] sm:$0xff]
    %v1894 = vld [vmem:[#allocation20 + $0x5c8] sm:$0xff]
    %v1895 = vld [vmem:[#allocation20 + $0x5d0] sm:$0xff]
    %v1896 = vld [vmem:[#allocation20 + $0x5d8] sm:$0xff]
    %v1897 = vld [vmem:[#allocation20 + $0x5e0] sm:$0xff]
    %v1898 = vld [vmem:[#allocation20 + $0x5e8] sm:$0xff]
    %v1899 = vld [vmem:[#allocation20 + $0x5f0] sm:$0xff]
    %v1900 = vld [vmem:[#allocation20 + $0x5f8] sm:$0xff]
    %v1901 = vld [vmem:[#allocation20 + $0x600] sm:$0xff]
    %v1902 = vld [vmem:[#allocation20 + $0x608] sm:$0xff]
    %v1903 = vld [vmem:[#allocation20 + $0x610] sm:$0xff]
    %v1904 = vld [vmem:[#allocation20 + $0x618] sm:$0xff]
    %v1905 = vld [vmem:[#allocation20 + $0x620] sm:$0xff]
    %v1906 = vld [vmem:[#allocation20 + $0x628] sm:$0xff]
    %v1907 = vld [vmem:[#allocation20 + $0x630] sm:$0xff]
    %v1908 = vld [vmem:[#allocation20 + $0x638] sm:$0xff]
    %v1909 = vld [vmem:[#allocation20 + $0x640] sm:$0xff]
    %v1910 = vld [vmem:[#allocation20 + $0x648] sm:$0xff]
    %v1911 = vld [vmem:[#allocation20 + $0x650] sm:$0xff]
    %v1912 = vld [vmem:[#allocation20 + $0x658] sm:$0xff]
    %v1913 = vld [vmem:[#allocation20 + $0x660] sm:$0xff]
    %v1914 = vld [vmem:[#allocation20 + $0x668] sm:$0xff]
    %v1915 = vld [vmem:[#allocation20 + $0x670] sm:$0xff]
    %v1916 = vld [vmem:[#allocation20 + $0x678] sm:$0xff]
    %v1917 = vld [vmem:[#allocation20 + $0x680] sm:$0xff]
    %v1918 = vld [vmem:[#allocation20 + $0x688] sm:$0xff]
    %v1919 = vld [vmem:[#allocation20 + $0x690] sm:$0xff]
    %v1920 = vld [vmem:[#allocation20 + $0x698] sm:$0xff]
    %v1921 = vld [vmem:[#allocation20 + $0x6a0] sm:$0xff]
    %v1922 = vld [vmem:[#allocation20 + $0x6a8] sm:$0xff]
    %v1923 = vld [vmem:[#allocation20 + $0x6b0] sm:$0xff]
    %v1924 = vld [vmem:[#allocation20 + $0x6b8] sm:$0xff]
    %v1925 = vld [vmem:[#allocation20 + $0x6c0] sm:$0xff]
    %v1926 = vld [vmem:[#allocation20 + $0x6c8] sm:$0xff]
    %v1927 = vld [vmem:[#allocation20 + $0x6d0] sm:$0xff]
    %v1928 = vld [vmem:[#allocation20 + $0x6d8] sm:$0xff]
    %v1929 = vld [vmem:[#allocation20 + $0x6e0] sm:$0xff]
    %v1930 = vld [vmem:[#allocation20 + $0x6e8] sm:$0xff]
    %v1931 = vld [vmem:[#allocation20 + $0x6f0] sm:$0xff]
    %v1932 = vld [vmem:[#allocation20 + $0x6f8] sm:$0xff]
    %v1933 = vld [vmem:[#allocation20 + $0x700] sm:$0xff]
    %v1934 = vld [vmem:[#allocation20 + $0x708] sm:$0xff]
    %v1935 = vld [vmem:[#allocation20 + $0x710] sm:$0xff]
    %v1936 = vld [vmem:[#allocation20 + $0x718] sm:$0xff]
    %v1937 = vld [vmem:[#allocation20 + $0x720] sm:$0xff]
    %v1938 = vld [vmem:[#allocation20 + $0x728] sm:$0xff]
    %v1939 = vld [vmem:[#allocation20 + $0x730] sm:$0xff]
    %v1940 = vld [vmem:[#allocation20 + $0x738] sm:$0xff]
    %v1941 = vld [vmem:[#allocation20 + $0x740] sm:$0xff]
    %v1942 = vld [vmem:[#allocation20 + $0x748] sm:$0xff]
    %v1943 = vld [vmem:[#allocation20 + $0x750] sm:$0xff]
    %v1944 = vld [vmem:[#allocation20 + $0x758] sm:$0xff]
    %v1945 = vld [vmem:[#allocation20 + $0x760] sm:$0xff]
    %v1946 = vld [vmem:[#allocation20 + $0x768] sm:$0xff]
    %v1947 = vld [vmem:[#allocation20 + $0x770] sm:$0xff]
    %v1948 = vld [vmem:[#allocation20 + $0x778] sm:$0xff]
    %v1949 = vld [vmem:[#allocation20 + $0x780] sm:$0xff]
    %v1950 = vld [vmem:[#allocation20 + $0x788] sm:$0xff]
    %v1951 = vld [vmem:[#allocation20 + $0x790] sm:$0xff]
    %v1952 = vld [vmem:[#allocation20 + $0x798] sm:$0xff]
    %v1953 = vld [vmem:[#allocation20 + $0x7a0] sm:$0xff]
    %v1954 = vld [vmem:[#allocation20 + $0x7a8] sm:$0xff]
    %v1955 = vld [vmem:[#allocation20 + $0x7b0] sm:$0xff]
    %v1956 = vld [vmem:[#allocation20 + $0x7b8] sm:$0xff]
    %v1957 = vld [vmem:[#allocation20 + $0x7c0] sm:$0xff]
    %v1958 = vld [vmem:[#allocation20 + $0x7c8] sm:$0xff]
    %v1959 = vld [vmem:[#allocation20 + $0x7d0] sm:$0xff]
    %v1960 = vld [vmem:[#allocation20 + $0x7d8] sm:$0xff]
    %v1961 = vld [vmem:[#allocation20 + $0x7e0] sm:$0xff]
    %v1962 = vld [vmem:[#allocation20 + $0x7e8] sm:$0xff]
    %v1963 = vld [vmem:[#allocation20 + $0x7f0] sm:$0xff]
    %v1964 = vld [vmem:[#allocation20 + $0x7f8] sm:$0xff]
    %v1965 = vld [vmem:[#allocation20 + $0x800] sm:$0xff]
    %v1966 = vld [vmem:[#allocation20 + $0x808] sm:$0xff]
    %v1967 = vld [vmem:[#allocation20 + $0x810] sm:$0xff]
    %v1968 = vld [vmem:[#allocation20 + $0x818] sm:$0xff]
    %v1969 = vld [vmem:[#allocation20 + $0x820] sm:$0xff]
    %v1970 = vld [vmem:[#allocation20 + $0x828] sm:$0xff]
    %v1971 = vld [vmem:[#allocation20 + $0x830] sm:$0xff]
    %v1972 = vld [vmem:[#allocation20 + $0x838] sm:$0xff]
    %v1973 = vld [vmem:[#allocation20 + $0x840] sm:$0xff]
    %v1974 = vld [vmem:[#allocation20 + $0x848] sm:$0xff]
    %v1975 = vld [vmem:[#allocation20 + $0x850] sm:$0xff]
    %v1976 = vld [vmem:[#allocation20 + $0x858] sm:$0xff]
    %v1977 = vld [vmem:[#allocation20 + $0x860] sm:$0xff]
    %v1978 = vld [vmem:[#allocation20 + $0x868] sm:$0xff]
    %v1979 = vld [vmem:[#allocation20 + $0x870] sm:$0xff]
    %v1980 = vld [vmem:[#allocation20 + $0x878] sm:$0xff]
    %v1981 = vld [vmem:[#allocation20 + $0x880] sm:$0xff]
    %v1982 = vld [vmem:[#allocation20 + $0x888] sm:$0xff]
    %v1983 = vld [vmem:[#allocation20 + $0x890] sm:$0xff]
    %v1984 = vld [vmem:[#allocation20 + $0x898] sm:$0xff]
    %v1985 = vld [vmem:[#allocation20 + $0x8a0] sm:$0xff]
    %v1986 = vld [vmem:[#allocation20 + $0x8a8] sm:$0xff]
    %v1987 = vld [vmem:[#allocation20 + $0x8b0] sm:$0xff]
    %v1988 = vld [vmem:[#allocation20 + $0x8b8] sm:$0xff]
    %v1989 = vld [vmem:[#allocation20 + $0x8c0] sm:$0xff]
    %v1990 = vld [vmem:[#allocation20 + $0x8c8] sm:$0xff]
    %v1991 = vld [vmem:[#allocation20 + $0x8d0] sm:$0xff]
    %v1992 = vld [vmem:[#allocation20 + $0x8d8] sm:$0xff]
    %v1993 = vld [vmem:[#allocation20 + $0x8e0] sm:$0xff]
    %v1994 = vld [vmem:[#allocation20 + $0x8e8] sm:$0xff]
    %v1995 = vld [vmem:[#allocation20 + $0x8f0] sm:$0xff]
    %v1996 = vld [vmem:[#allocation20 + $0x8f8] sm:$0xff]
    %v1997 = vld [vmem:[#allocation20 + $0x900] sm:$0xff]
    %v1998 = vld [vmem:[#allocation20 + $0x908] sm:$0xff]
    %v1999 = vld [vmem:[#allocation20 + $0x910] sm:$0xff]
    %v2000 = vld [vmem:[#allocation20 + $0x918] sm:$0xff]
    %v2001 = vld [vmem:[#allocation20 + $0x920] sm:$0xff]
    %v2002 = vld [vmem:[#allocation20 + $0x928] sm:$0xff]
    %v2003 = vld [vmem:[#allocation20 + $0x930] sm:$0xff]
    %v2004 = vld [vmem:[#allocation20 + $0x938] sm:$0xff]
    %v2005 = vld [vmem:[#allocation20 + $0x940] sm:$0xff]
    %v2006 = vld [vmem:[#allocation20 + $0x948] sm:$0xff]
    %v2007 = vld [vmem:[#allocation20 + $0x950] sm:$0xff]
    %v2008 = vld [vmem:[#allocation20 + $0x958] sm:$0xff]
    %v2009 = vld [vmem:[#allocation20 + $0x960] sm:$0xff]
    %v2010 = vld [vmem:[#allocation20 + $0x968] sm:$0xff]
    %v2011 = vld [vmem:[#allocation20 + $0x970] sm:$0xff]
    %v2012 = vld [vmem:[#allocation20 + $0x978] sm:$0xff]
    %v2013 = vld [vmem:[#allocation20 + $0x980] sm:$0xff]
    %v2014 = vld [vmem:[#allocation20 + $0x988] sm:$0xff]
    %v2015 = vld [vmem:[#allocation20 + $0x990] sm:$0xff]
    %v2016 = vld [vmem:[#allocation20 + $0x998] sm:$0xff]
    %v2017 = vld [vmem:[#allocation20 + $0x9a0] sm:$0xff]
    %v2018 = vld [vmem:[#allocation20 + $0x9a8] sm:$0xff]
    %v2019 = vld [vmem:[#allocation20 + $0x9b0] sm:$0xff]
    %v2020 = vld [vmem:[#allocation20 + $0x9b8] sm:$0xff]
    %v2021 = vld [vmem:[#allocation20 + $0x9c0] sm:$0xff]
    %v2022 = vld [vmem:[#allocation20 + $0x9c8] sm:$0xff]
    %v2023 = vld [vmem:[#allocation20 + $0x9d0] sm:$0xff]
    %v2024 = vld [vmem:[#allocation20 + $0x9d8] sm:$0xff]
    %v2025 = vld [vmem:[#allocation20 + $0x9e0] sm:$0xff]
    %v2026 = vld [vmem:[#allocation20 + $0x9e8] sm:$0xff]
    %v2027 = vld [vmem:[#allocation20 + $0x9f0] sm:$0xff]
    %v2028 = vld [vmem:[#allocation20 + $0x9f8] sm:$0xff]
    %v2029 = vld [vmem:[#allocation20 + $0xa00] sm:$0xff]
    %v2030 = vld [vmem:[#allocation20 + $0xa08] sm:$0xff]
    %v2031 = vld [vmem:[#allocation20 + $0xa10] sm:$0xff]
    %v2032 = vld [vmem:[#allocation20 + $0xa18] sm:$0xff]
    %v2033 = vld [vmem:[#allocation20 + $0xa20] sm:$0xff]
    %v2034 = vld [vmem:[#allocation20 + $0xa28] sm:$0xff]
    %v2035 = vld [vmem:[#allocation20 + $0xa30] sm:$0xff]
    %v2036 = vld [vmem:[#allocation20 + $0xa38] sm:$0xff]
    %v2037 = vld [vmem:[#allocation20 + $0xa40] sm:$0xff]
    %v2038 = vld [vmem:[#allocation20 + $0xa48] sm:$0xff]
    %v2039 = vld [vmem:[#allocation20 + $0xa50] sm:$0xff]
    %v2040 = vld [vmem:[#allocation20 + $0xa58] sm:$0xff]
    %v2041 = vld [vmem:[#allocation20 + $0xa60] sm:$0xff]
    %v2042 = vld [vmem:[#allocation20 + $0xa68] sm:$0xff]
    %v2043 = vld [vmem:[#allocation20 + $0xa70] sm:$0xff]
    %v2044 = vld [vmem:[#allocation20 + $0xa78] sm:$0xff]
    %v2045 = vld [vmem:[#allocation20 + $0xa80] sm:$0xff]
    %v2046 = vld [vmem:[#allocation20 + $0xa88] sm:$0xff]
    %v2047 = vld [vmem:[#allocation20 + $0xa90] sm:$0xff]
    %v2048 = vld [vmem:[#allocation20 + $0xa98] sm:$0xff]
    %v2049 = vld [vmem:[#allocation20 + $0xaa0] sm:$0xff]
    %v2050 = vld [vmem:[#allocation20 + $0xaa8] sm:$0xff]
    %v2051 = vld [vmem:[#allocation20 + $0xab0] sm:$0xff]
    %v2052 = vld [vmem:[#allocation20 + $0xab8] sm:$0xff]
    %v2053 = vld [vmem:[#allocation20 + $0xac0] sm:$0xff]
    %v2054 = vld [vmem:[#allocation20 + $0xac8] sm:$0xff]
    %v2055 = vld [vmem:[#allocation20 + $0xad0] sm:$0xff]
    %v2056 = vld [vmem:[#allocation20 + $0xad8] sm:$0xff]
    %v2057 = vld [vmem:[#allocation20 + $0xae0] sm:$0xff]
    %v2058 = vld [vmem:[#allocation20 + $0xae8] sm:$0xff]
    %v2059 = vld [vmem:[#allocation20 + $0xaf0] sm:$0xff]
    %v2060 = vld [vmem:[#allocation20 + $0xaf8] sm:$0xff]
    %v2061 = vld [vmem:[#allocation20 + $0xb00] sm:$0xff]
    %v2062 = vld [vmem:[#allocation20 + $0xb08] sm:$0xff]
    %v2063 = vld [vmem:[#allocation20 + $0xb10] sm:$0xff]
    %v2064 = vld [vmem:[#allocation20 + $0xb18] sm:$0xff]
    %v2065 = vld [vmem:[#allocation20 + $0xb20] sm:$0xff]
    %v2066 = vld [vmem:[#allocation20 + $0xb28] sm:$0xff]
    %v2067 = vld [vmem:[#allocation20 + $0xb30] sm:$0xff]
    %v2068 = vld [vmem:[#allocation20 + $0xb38] sm:$0xff]
    %v2069 = vld [vmem:[#allocation20 + $0xb40] sm:$0xff]
    %v2070 = vld [vmem:[#allocation20 + $0xb48] sm:$0xff]
    %v2071 = vld [vmem:[#allocation20 + $0xb50] sm:$0xff]
    %v2072 = vld [vmem:[#allocation20 + $0xb58] sm:$0xff]
    %v2073 = vld [vmem:[#allocation20 + $0xb60] sm:$0xff]
    %v2074 = vld [vmem:[#allocation20 + $0xb68] sm:$0xff]
    %v2075 = vld [vmem:[#allocation20 + $0xb70] sm:$0xff]
    %v2076 = vld [vmem:[#allocation20 + $0xb78] sm:$0xff]
    %v2077 = vld [vmem:[#allocation20 + $0xb80] sm:$0xff]
    %v2078 = vld [vmem:[#allocation20 + $0xb88] sm:$0xff]
    %v2079 = vld [vmem:[#allocation20 + $0xb90] sm:$0xff]
    %v2080 = vld [vmem:[#allocation20 + $0xb98] sm:$0xff]
    %v2081 = vld [vmem:[#allocation20 + $0xba0] sm:$0xff]
    %v2082 = vld [vmem:[#allocation20 + $0xba8] sm:$0xff]
    %v2083 = vld [vmem:[#allocation20 + $0xbb0] sm:$0xff]
    %v2084 = vld [vmem:[#allocation20 + $0xbb8] sm:$0xff]
    %v2085 = vld [vmem:[#allocation20 + $0xbc0] sm:$0xff]
    %v2086 = vld [vmem:[#allocation20 + $0xbc8] sm:$0xff]
    %v2087 = vld [vmem:[#allocation20 + $0xbd0] sm:$0xff]
    %v2088 = vld [vmem:[#allocation20 + $0xbd8] sm:$0xff]
    %v2089 = vld [vmem:[#allocation20 + $0xbe0] sm:$0xff]
    %v2090 = vld [vmem:[#allocation20 + $0xbe8] sm:$0xff]
    %v2091 = vld [vmem:[#allocation20 + $0xbf0] sm:$0xff]
    %v2092 = vld [vmem:[#allocation20 + $0xbf8] sm:$0xff]
    %v2093 = vld [vmem:[#allocation20 + $0xc00] sm:$0xff]
    %v2094 = vld [vmem:[#allocation20 + $0xc08] sm:$0xff]
    %v2095 = vld [vmem:[#allocation20 + $0xc10] sm:$0xff]
    %v2096 = vld [vmem:[#allocation20 + $0xc18] sm:$0xff]
    %v2097 = vld [vmem:[#allocation20 + $0xc20] sm:$0xff]
    %v2098 = vld [vmem:[#allocation20 + $0xc28] sm:$0xff]
    %v2099 = vld [vmem:[#allocation20 + $0xc30] sm:$0xff]
    %v2100 = vld [vmem:[#allocation20 + $0xc38] sm:$0xff]
    %v2101 = vld [vmem:[#allocation20 + $0xc40] sm:$0xff]
    %v2102 = vld [vmem:[#allocation20 + $0xc48] sm:$0xff]
    %v2103 = vld [vmem:[#allocation20 + $0xc50] sm:$0xff]
    %v2104 = vld [vmem:[#allocation20 + $0xc58] sm:$0xff]
    %v2105 = vld [vmem:[#allocation20 + $0xc60] sm:$0xff]
    %v2106 = vld [vmem:[#allocation20 + $0xc68] sm:$0xff]
    %v2107 = vld [vmem:[#allocation20 + $0xc70] sm:$0xff]
    %v2108 = vld [vmem:[#allocation20 + $0xc78] sm:$0xff]
    %v2109 = vld [vmem:[#allocation20 + $0xc80] sm:$0xff]
    %v2110 = vld [vmem:[#allocation20 + $0xc88] sm:$0xff]
    %v2111 = vld [vmem:[#allocation20 + $0xc90] sm:$0xff]
    %v2112 = vld [vmem:[#allocation20 + $0xc98] sm:$0xff]
    %v2113 = vld [vmem:[#allocation20 + $0xca0] sm:$0xff]
    %v2114 = vld [vmem:[#allocation20 + $0xca8] sm:$0xff]
    %v2115 = vld [vmem:[#allocation20 + $0xcb0] sm:$0xff]
    %v2116 = vld [vmem:[#allocation20 + $0xcb8] sm:$0xff]
    %v2117 = vld [vmem:[#allocation20 + $0xcc0] sm:$0xff]
    %v2118 = vld [vmem:[#allocation20 + $0xcc8] sm:$0xff]
    %v2119 = vld [vmem:[#allocation20 + $0xcd0] sm:$0xff]
    %v2120 = vld [vmem:[#allocation20 + $0xcd8] sm:$0xff]
    %v2121 = vld [vmem:[#allocation20 + $0xce0] sm:$0xff]
    %v2122 = vld [vmem:[#allocation20 + $0xce8] sm:$0xff]
    %v2123 = vld [vmem:[#allocation20 + $0xcf0] sm:$0xff]
    %v2124 = vld [vmem:[#allocation20 + $0xcf8] sm:$0xff]
    %v2125 = vld [vmem:[#allocation20 + $0xd00] sm:$0xff]
    %v2126 = vld [vmem:[#allocation20 + $0xd08] sm:$0xff]
    %v2127 = vld [vmem:[#allocation20 + $0xd10] sm:$0xff]
    %v2128 = vld [vmem:[#allocation20 + $0xd18] sm:$0xff]
    %v2129 = vld [vmem:[#allocation20 + $0xd20] sm:$0xff]
    %v2130 = vld [vmem:[#allocation20 + $0xd28] sm:$0xff]
    %v2131 = vld [vmem:[#allocation20 + $0xd30] sm:$0xff]
    %v2132 = vld [vmem:[#allocation20 + $0xd38] sm:$0xff]
    %v2133 = vld [vmem:[#allocation20 + $0xd40] sm:$0xff]
    %v2134 = vld [vmem:[#allocation20 + $0xd48] sm:$0xff]
    %v2135 = vld [vmem:[#allocation20 + $0xd50] sm:$0xff]
    %v2136 = vld [vmem:[#allocation20 + $0xd58] sm:$0xff]
    %v2137 = vld [vmem:[#allocation20 + $0xd60] sm:$0xff]
    %v2138 = vld [vmem:[#allocation20 + $0xd68] sm:$0xff]
    %v2139 = vld [vmem:[#allocation20 + $0xd70] sm:$0xff]
    %v2140 = vld [vmem:[#allocation20 + $0xd78] sm:$0xff]
    %v2141 = vld [vmem:[#allocation20 + $0xd80] sm:$0xff]
    %v2142 = vld [vmem:[#allocation20 + $0xd88] sm:$0xff]
    %v2143 = vld [vmem:[#allocation20 + $0xd90] sm:$0xff]
    %v2144 = vld [vmem:[#allocation20 + $0xd98] sm:$0xff]
    %v2145 = vld [vmem:[#allocation20 + $0xda0] sm:$0xff]
    %v2146 = vld [vmem:[#allocation20 + $0xda8] sm:$0xff]
    %v2147 = vld [vmem:[#allocation20 + $0xdb0] sm:$0xff]
    %v2148 = vld [vmem:[#allocation20 + $0xdb8] sm:$0xff]
    %v2149 = vld [vmem:[#allocation20 + $0xdc0] sm:$0xff]
    %v2150 = vld [vmem:[#allocation20 + $0xdc8] sm:$0xff]
    %v2151 = vld [vmem:[#allocation20 + $0xdd0] sm:$0xff]
    %v2152 = vld [vmem:[#allocation20 + $0xdd8] sm:$0xff]
    %v2153 = vld [vmem:[#allocation20 + $0xde0] sm:$0xff]
    %v2154 = vld [vmem:[#allocation20 + $0xde8] sm:$0xff]
    %v2155 = vld [vmem:[#allocation20 + $0xdf0] sm:$0xff]
    %v2156 = vld [vmem:[#allocation20 + $0xdf8] sm:$0xff]
    %v2157 = vld [vmem:[#allocation20 + $0xe00] sm:$0xff]
    %v2158 = vld [vmem:[#allocation20 + $0xe08] sm:$0xff]
    %v2159 = vld [vmem:[#allocation20 + $0xe10] sm:$0xff]
    %v2160 = vld [vmem:[#allocation20 + $0xe18] sm:$0xff]
    %v2161 = vld [vmem:[#allocation20 + $0xe20] sm:$0xff]
    %v2162 = vld [vmem:[#allocation20 + $0xe28] sm:$0xff]
    %v2163 = vld [vmem:[#allocation20 + $0xe30] sm:$0xff]
    %v2164 = vld [vmem:[#allocation20 + $0xe38] sm:$0xff]
    %v2165 = vld [vmem:[#allocation20 + $0xe40] sm:$0xff]
    %v2166 = vld [vmem:[#allocation20 + $0xe48] sm:$0xff]
    %v2167 = vld [vmem:[#allocation20 + $0xe50] sm:$0xff]
    %v2168 = vld [vmem:[#allocation20 + $0xe58] sm:$0xff]
    %v2169 = vld [vmem:[#allocation20 + $0xe60] sm:$0xff]
    %v2170 = vld [vmem:[#allocation20 + $0xe68] sm:$0xff]
    %v2171 = vld [vmem:[#allocation20 + $0xe70] sm:$0xff]
    %v2172 = vld [vmem:[#allocation20 + $0xe78] sm:$0xff]
    %v2173 = vld [vmem:[#allocation20 + $0xe80] sm:$0xff]
    %v2174 = vld [vmem:[#allocation20 + $0xe88] sm:$0xff]
    %v2175 = vld [vmem:[#allocation20 + $0xe90] sm:$0xff]
    %v2176 = vld [vmem:[#allocation20 + $0xe98] sm:$0xff]
    %v2177 = vld [vmem:[#allocation20 + $0xea0] sm:$0xff]
    %v2178 = vld [vmem:[#allocation20 + $0xea8] sm:$0xff]
    %v2179 = vld [vmem:[#allocation20 + $0xeb0] sm:$0xff]
    %v2180 = vld [vmem:[#allocation20 + $0xeb8] sm:$0xff]
    %v2181 = vld [vmem:[#allocation20 + $0xec0] sm:$0xff]
    %v2182 = vld [vmem:[#allocation20 + $0xec8] sm:$0xff]
    %v2183 = vld [vmem:[#allocation20 + $0xed0] sm:$0xff]
    %v2184 = vld [vmem:[#allocation20 + $0xed8] sm:$0xff]
    %v2185 = vld [vmem:[#allocation20 + $0xee0] sm:$0xff]
    %v2186 = vld [vmem:[#allocation20 + $0xee8] sm:$0xff]
    %v2187 = vld [vmem:[#allocation20 + $0xef0] sm:$0xff]
    %v2188 = vld [vmem:[#allocation20 + $0xef8] sm:$0xff]
    %v2189 = vld [vmem:[#allocation20 + $0xf00] sm:$0xff]
    %v2190 = vld [vmem:[#allocation20 + $0xf08] sm:$0xff]
    %v2191 = vld [vmem:[#allocation20 + $0xf10] sm:$0xff]
    %v2192 = vld [vmem:[#allocation20 + $0xf18] sm:$0xff]
    %v2193 = vld [vmem:[#allocation20 + $0xf20] sm:$0xff]
    %v2194 = vld [vmem:[#allocation20 + $0xf28] sm:$0xff]
    %v2195 = vld [vmem:[#allocation20 + $0xf30] sm:$0xff]
    %v2196 = vld [vmem:[#allocation20 + $0xf38] sm:$0xff]
    %v2197 = vld [vmem:[#allocation20 + $0xf40] sm:$0xff]
    %v2198 = vld [vmem:[#allocation20 + $0xf48] sm:$0xff]
    %v2199 = vld [vmem:[#allocation20 + $0xf50] sm:$0xff]
    %v2200 = vld [vmem:[#allocation20 + $0xf58] sm:$0xff]
    %v2201 = vld [vmem:[#allocation20 + $0xf60] sm:$0xff]
    %v2202 = vld [vmem:[#allocation20 + $0xf68] sm:$0xff]
    %v2203 = vld [vmem:[#allocation20 + $0xf70] sm:$0xff]
    %v2204 = vld [vmem:[#allocation20 + $0xf78] sm:$0xff]
    %v2205 = vld [vmem:[#allocation20 + $0xf80] sm:$0xff]
    %v2206 = vld [vmem:[#allocation20 + $0xf88] sm:$0xff]
    %v2207 = vld [vmem:[#allocation20 + $0xf90] sm:$0xff]
    %v2208 = vld [vmem:[#allocation20 + $0xf98] sm:$0xff]
    %v2209 = vld [vmem:[#allocation20 + $0xfa0] sm:$0xff]
    %v2210 = vld [vmem:[#allocation20 + $0xfa8] sm:$0xff]
    %v2211 = vld [vmem:[#allocation20 + $0xfb0] sm:$0xff]
    %v2212 = vld [vmem:[#allocation20 + $0xfb8] sm:$0xff]
    %v2213 = vld [vmem:[#allocation20 + $0xfc0] sm:$0xff]
    %v2214 = vld [vmem:[#allocation20 + $0xfc8] sm:$0xff]
    %v2215 = vld [vmem:[#allocation20 + $0xfd0] sm:$0xff]
    %v2216 = vld [vmem:[#allocation20 + $0xfd8] sm:$0xff]
    %v2217 = vld [vmem:[#allocation20 + $0xfe0] sm:$0xff]
    %v2218 = vld [vmem:[#allocation20 + $0xfe8] sm:$0xff]
    %v2219 = vld [vmem:[#allocation20 + $0xff0] sm:$0xff]
    %v2220 = vld [vmem:[#allocation20 + $0xff8] sm:$0xff]
    %v2221 = vld [vmem:[#allocation20 + $0x1000] sm:$0xff]
    %v2222 = vld [vmem:[#allocation20 + $0x1008] sm:$0xff]
    %v2223 = vld [vmem:[#allocation20 + $0x1010] sm:$0xff]
    %v2224 = vld [vmem:[#allocation20 + $0x1018] sm:$0xff]
    %v2225 = vld [vmem:[#allocation20 + $0x1020] sm:$0xff]
    %v2226 = vld [vmem:[#allocation20 + $0x1028] sm:$0xff]
    %v2227 = vld [vmem:[#allocation20 + $0x1030] sm:$0xff]
    %v2228 = vld [vmem:[#allocation20 + $0x1038] sm:$0xff]
    %v2229 = vld [vmem:[#allocation20 + $0x1040] sm:$0xff]
    %v2230 = vld [vmem:[#allocation20 + $0x1048] sm:$0xff]
    %v2231 = vld [vmem:[#allocation20 + $0x1050] sm:$0xff]
    %v2232 = vld [vmem:[#allocation20 + $0x1058] sm:$0xff]
    %v2233 = vld [vmem:[#allocation20 + $0x1060] sm:$0xff]
    %v2234 = vld [vmem:[#allocation20 + $0x1068] sm:$0xff]
    %v2235 = vld [vmem:[#allocation20 + $0x1070] sm:$0xff]
    %v2236 = vld [vmem:[#allocation20 + $0x1078] sm:$0xff]
    %v2237 = vld [vmem:[#allocation20 + $0x1080] sm:$0xff]
    %v2238 = vld [vmem:[#allocation20 + $0x1088] sm:$0xff]
    %v2239 = vld [vmem:[#allocation20 + $0x1090] sm:$0xff]
    %v2240 = vld [vmem:[#allocation20 + $0x1098] sm:$0xff]
    %v2241 = vld [vmem:[#allocation20 + $0x10a0] sm:$0xff]
    %v2242 = vld [vmem:[#allocation20 + $0x10a8] sm:$0xff]
    %v2243 = vld [vmem:[#allocation20 + $0x10b0] sm:$0xff]
    %v2244 = vld [vmem:[#allocation20 + $0x10b8] sm:$0xff]
    %v2245 = vld [vmem:[#allocation20 + $0x10c0] sm:$0xff]
    %v2246 = vld [vmem:[#allocation20 + $0x10c8] sm:$0xff]
    %v2247 = vld [vmem:[#allocation20 + $0x10d0] sm:$0xff]
    %v2248 = vld [vmem:[#allocation20 + $0x10d8] sm:$0xff]
    %v2249 = vld [vmem:[#allocation20 + $0x10e0] sm:$0xff]
    %v2250 = vld [vmem:[#allocation20 + $0x10e8] sm:$0xff]
    %v2251 = vld [vmem:[#allocation20 + $0x10f0] sm:$0xff]
    %v2252 = vld [vmem:[#allocation20 + $0x10f8] sm:$0xff]
    %v2253 = vld [vmem:[#allocation20 + $0x1100] sm:$0xff]
    %v2254 = vld [vmem:[#allocation20 + $0x1108] sm:$0xff]
    %v2255 = vld [vmem:[#allocation20 + $0x1110] sm:$0xff]
    %v2256 = vld [vmem:[#allocation20 + $0x1118] sm:$0xff]
    %v2257 = vld [vmem:[#allocation20 + $0x1120] sm:$0xff]
    %v2258 = vld [vmem:[#allocation20 + $0x1128] sm:$0xff]
    %v2259 = vld [vmem:[#allocation20 + $0x1130] sm:$0xff]
    %v2260 = vld [vmem:[#allocation20 + $0x1138] sm:$0xff]
    %v2261 = vld [vmem:[#allocation20 + $0x1140] sm:$0xff]
    %v2262 = vld [vmem:[#allocation20 + $0x1148] sm:$0xff]
    %v2263 = vld [vmem:[#allocation20 + $0x1150] sm:$0xff]
    %v2264 = vld [vmem:[#allocation20 + $0x1158] sm:$0xff]
    %v2265 = vld [vmem:[#allocation20 + $0x1160] sm:$0xff]
    %v2266 = vld [vmem:[#allocation20 + $0x1168] sm:$0xff]
    %v2267 = vld [vmem:[#allocation20 + $0x1170] sm:$0xff]
    %v2268 = vld [vmem:[#allocation20 + $0x1178] sm:$0xff]
    %v2269 = vld [vmem:[#allocation20 + $0x1180] sm:$0xff]
    %v2270 = vld [vmem:[#allocation20 + $0x1188] sm:$0xff]
    %v2271 = vld [vmem:[#allocation20 + $0x1190] sm:$0xff]
    %v2272 = vld [vmem:[#allocation20 + $0x1198] sm:$0xff]
    %v2273 = vld [vmem:[#allocation20 + $0x11a0] sm:$0xff]
    %v2274 = vld [vmem:[#allocation20 + $0x11a8] sm:$0xff]
    %v2275 = vld [vmem:[#allocation20 + $0x11b0] sm:$0xff]
    %v2276 = vld [vmem:[#allocation20 + $0x11b8] sm:$0xff]
    %v2277 = vld [vmem:[#allocation20 + $0x11c0] sm:$0xff]
    %v2278 = vld [vmem:[#allocation20 + $0x11c8] sm:$0xff]
    %v2279 = vld [vmem:[#allocation20 + $0x11d0] sm:$0xff]
    %v2280 = vld [vmem:[#allocation20 + $0x11d8] sm:$0xff]
    %v2281 = vld [vmem:[#allocation20 + $0x11e0] sm:$0xff]
    %v2282 = vld [vmem:[#allocation20 + $0x11e8] sm:$0xff]
    %v2283 = vld [vmem:[#allocation20 + $0x11f0] sm:$0xff]
    %v2284 = vld [vmem:[#allocation20 + $0x11f8] sm:$0xff]
    %v2285 = vld [vmem:[#allocation20 + $0x1200] sm:$0xff]
    %v2286 = vld [vmem:[#allocation20 + $0x1208] sm:$0xff]
    %v2287 = vld [vmem:[#allocation20 + $0x1210] sm:$0xff]
    %v2288 = vld [vmem:[#allocation20 + $0x1218] sm:$0xff]
    %v2289 = vld [vmem:[#allocation20 + $0x1220] sm:$0xff]
    %v2290 = vld [vmem:[#allocation20 + $0x1228] sm:$0xff]
    %v2291 = vld [vmem:[#allocation20 + $0x1230] sm:$0xff]
    %v2292 = vld [vmem:[#allocation20 + $0x1238] sm:$0xff]
    %v2293 = vld [vmem:[#allocation20 + $0x1240] sm:$0xff]
    %v2294 = vld [vmem:[#allocation20 + $0x1248] sm:$0xff]
    %v2295 = vld [vmem:[#allocation20 + $0x1250] sm:$0xff]
    %v2296 = vld [vmem:[#allocation20 + $0x1258] sm:$0xff]
    %v2297 = vld [vmem:[#allocation20 + $0x1260] sm:$0xff]
    %v2298 = vld [vmem:[#allocation20 + $0x1268] sm:$0xff]
    %v2299 = vld [vmem:[#allocation20 + $0x1270] sm:$0xff]
    %v2300 = vld [vmem:[#allocation20 + $0x1278] sm:$0xff]
    %v2301 = vld [vmem:[#allocation20 + $0x1280] sm:$0xff]
    %v2302 = vld [vmem:[#allocation20 + $0x1288] sm:$0xff]
    %v2303 = vld [vmem:[#allocation20 + $0x1290] sm:$0xff]
    %v2304 = vld [vmem:[#allocation20 + $0x1298] sm:$0xff]
    %v2305 = vld [vmem:[#allocation20 + $0x12a0] sm:$0xff]
    %v2306 = vld [vmem:[#allocation20 + $0x12a8] sm:$0xff]
    %v2307 = vld [vmem:[#allocation20 + $0x12b0] sm:$0xff]
    %v2308 = vld [vmem:[#allocation20 + $0x12b8] sm:$0xff]
    %v2309 = vld [vmem:[#allocation20 + $0x12c0] sm:$0xff]
    %v2310 = vld [vmem:[#allocation20 + $0x12c8] sm:$0xff]
    %v2311 = vld [vmem:[#allocation20 + $0x12d0] sm:$0xff]
    %v2312 = vld [vmem:[#allocation20 + $0x12d8] sm:$0xff]
    %v2313 = vld [vmem:[#allocation20 + $0x12e0] sm:$0xff]
    %v2314 = vld [vmem:[#allocation20 + $0x12e8] sm:$0xff]
    %v2315 = vld [vmem:[#allocation20 + $0x12f0] sm:$0xff]
    %v2316 = vld [vmem:[#allocation20 + $0x12f8] sm:$0xff]
    %v2317 = vld [vmem:[#allocation20 + $0x1300] sm:$0xff]
    %v2318 = vld [vmem:[#allocation20 + $0x1308] sm:$0xff]
    %v2319 = vld [vmem:[#allocation20 + $0x1310] sm:$0xff]
    %v2320 = vld [vmem:[#allocation20 + $0x1318] sm:$0xff]
    %v2321 = vld [vmem:[#allocation20 + $0x1320] sm:$0xff]
    %v2322 = vld [vmem:[#allocation20 + $0x1328] sm:$0xff]
    %v2323 = vld [vmem:[#allocation20 + $0x1330] sm:$0xff]
    %v2324 = vld [vmem:[#allocation20 + $0x1338] sm:$0xff]
    %v2325 = vld [vmem:[#allocation20 + $0x1340] sm:$0xff]
    %v2326 = vld [vmem:[#allocation20 + $0x1348] sm:$0xff]
    %v2327 = vld [vmem:[#allocation20 + $0x1350] sm:$0xff]
    %v2328 = vld [vmem:[#allocation20 + $0x1358] sm:$0xff]
    %v2329 = vld [vmem:[#allocation20 + $0x1360] sm:$0xff]
    %v2330 = vld [vmem:[#allocation20 + $0x1368] sm:$0xff]
    %v2331 = vld [vmem:[#allocation20 + $0x1370] sm:$0xff]
    %v2332 = vld [vmem:[#allocation20 + $0x1378] sm:$0xff]
    %v2333 = vld [vmem:[#allocation20 + $0x1380] sm:$0xff]
    %v2334 = vld [vmem:[#allocation20 + $0x1388] sm:$0xff]
    %v2335 = vld [vmem:[#allocation20 + $0x1390] sm:$0xff]
    %v2336 = vld [vmem:[#allocation20 + $0x1398] sm:$0xff]
    %v2337 = vld [vmem:[#allocation20 + $0x13a0] sm:$0xff]
    %v2338 = vld [vmem:[#allocation20 + $0x13a8] sm:$0xff]
    %v2339 = vld [vmem:[#allocation20 + $0x13b0] sm:$0xff]
    %v2340 = vld [vmem:[#allocation20 + $0x13b8] sm:$0xff]
    %v2341 = vld [vmem:[#allocation20 + $0x13c0] sm:$0xff]
    %v2342 = vld [vmem:[#allocation20 + $0x13c8] sm:$0xff]
    %v2343 = vld [vmem:[#allocation20 + $0x13d0] sm:$0xff]
    %v2344 = vld [vmem:[#allocation20 + $0x13d8] sm:$0xff]
    %v2345 = vld [vmem:[#allocation20 + $0x13e0] sm:$0xff]
    %v2346 = vld [vmem:[#allocation20 + $0x13e8] sm:$0xff]
    %v2347 = vld [vmem:[#allocation20 + $0x13f0] sm:$0xff]
    %v2348 = vld [vmem:[#allocation20 + $0x13f8] sm:$0xff]
    %v2349 = vld [vmem:[#allocation20 + $0x1400] sm:$0xff]
    %v2350 = vld [vmem:[#allocation20 + $0x1408] sm:$0xff]
    %v2351 = vld [vmem:[#allocation20 + $0x1410] sm:$0xff]
    %v2352 = vld [vmem:[#allocation20 + $0x1418] sm:$0xff]
    %v2353 = vld [vmem:[#allocation20 + $0x1420] sm:$0xff]
    %v2354 = vld [vmem:[#allocation20 + $0x1428] sm:$0xff]
    %v2355 = vld [vmem:[#allocation20 + $0x1430] sm:$0xff]
    %v2356 = vld [vmem:[#allocation20 + $0x1438] sm:$0xff]
    %v2357 = vld [vmem:[#allocation20 + $0x1440] sm:$0xff]
    %v2358 = vld [vmem:[#allocation20 + $0x1448] sm:$0xff]
    %v2359 = vld [vmem:[#allocation20 + $0x1450] sm:$0xff]
    %v2360 = vld [vmem:[#allocation20 + $0x1458] sm:$0xff]
    %v2361 = vld [vmem:[#allocation20 + $0x1460] sm:$0xff]
    %v2362 = vld [vmem:[#allocation20 + $0x1468] sm:$0xff]
    %v2363 = vld [vmem:[#allocation20 + $0x1470] sm:$0xff]
    %v2364 = vld [vmem:[#allocation20 + $0x1478] sm:$0xff]
    %v2365 = vld [vmem:[#allocation20 + $0x1480] sm:$0xff]
    %v2366 = vld [vmem:[#allocation20 + $0x1488] sm:$0xff]
    %v2367 = vld [vmem:[#allocation20 + $0x1490] sm:$0xff]
    %v2368 = vld [vmem:[#allocation20 + $0x1498] sm:$0xff]
    %v2369 = vld [vmem:[#allocation20 + $0x14a0] sm:$0xff]
    %v2370 = vld [vmem:[#allocation20 + $0x14a8] sm:$0xff]
    %v2371 = vld [vmem:[#allocation20 + $0x14b0] sm:$0xff]
    %v2372 = vld [vmem:[#allocation20 + $0x14b8] sm:$0xff]
    %v2373 = vld [vmem:[#allocation20 + $0x14c0] sm:$0xff]
    %v2374 = vld [vmem:[#allocation20 + $0x14c8] sm:$0xff]
    %v2375 = vld [vmem:[#allocation20 + $0x14d0] sm:$0xff]
    %v2376 = vld [vmem:[#allocation20 + $0x14d8] sm:$0xff]
    %v2377 = vld [vmem:[#allocation20 + $0x14e0] sm:$0xff]
    %v2378 = vld [vmem:[#allocation20 + $0x14e8] sm:$0xff]
    %v2379 = vld [vmem:[#allocation20 + $0x14f0] sm:$0xff]
    %v2380 = vld [vmem:[#allocation20 + $0x14f8] sm:$0xff]
    %v2381 = vld [vmem:[#allocation20 + $0x1500] sm:$0xff]
    %v2382 = vld [vmem:[#allocation20 + $0x1508] sm:$0xff]
    %v2383 = vld [vmem:[#allocation20 + $0x1510] sm:$0xff]
    %v2384 = vld [vmem:[#allocation20 + $0x1518] sm:$0xff]
    %v2385 = vld [vmem:[#allocation20 + $0x1520] sm:$0xff]
    %v2386 = vld [vmem:[#allocation20 + $0x1528] sm:$0xff]
    %v2387 = vld [vmem:[#allocation20 + $0x1530] sm:$0xff]
    %v2388 = vld [vmem:[#allocation20 + $0x1538] sm:$0xff]
    %v2389 = vld [vmem:[#allocation20 + $0x1540] sm:$0xff]
    %v2390 = vld [vmem:[#allocation20 + $0x1548] sm:$0xff]
    %v2391 = vld [vmem:[#allocation20 + $0x1550] sm:$0xff]
    %v2392 = vld [vmem:[#allocation20 + $0x1558] sm:$0xff]
    %v2393 = vld [vmem:[#allocation20 + $0x1560] sm:$0xff]
    %v2394 = vld [vmem:[#allocation20 + $0x1568] sm:$0xff]
    %v2395 = vld [vmem:[#allocation20 + $0x1570] sm:$0xff]
    %v2396 = vld [vmem:[#allocation20 + $0x1578] sm:$0xff]
    %v2397 = vld [vmem:[#allocation20 + $0x1580] sm:$0xff]
    %v2398 = vld [vmem:[#allocation20 + $0x1588] sm:$0xff]
    %v2399 = vld [vmem:[#allocation20 + $0x1590] sm:$0xff]
    %v2400 = vld [vmem:[#allocation20 + $0x1598] sm:$0xff]
    %v2401 = vld [vmem:[#allocation20 + $0x15a0] sm:$0xff]
    %v2402 = vld [vmem:[#allocation20 + $0x15a8] sm:$0xff]
    %v2403 = vld [vmem:[#allocation20 + $0x15b0] sm:$0xff]
    %v2404 = vld [vmem:[#allocation20 + $0x15b8] sm:$0xff]
    %v2405 = vld [vmem:[#allocation20 + $0x15c0] sm:$0xff]
    %v2406 = vld [vmem:[#allocation20 + $0x15c8] sm:$0xff]
    %v2407 = vld [vmem:[#allocation20 + $0x15d0] sm:$0xff]
    %v2408 = vld [vmem:[#allocation20 + $0x15d8] sm:$0xff]
    %v2409 = vld [vmem:[#allocation20 + $0x15e0] sm:$0xff]
    %v2410 = vld [vmem:[#allocation20 + $0x15e8] sm:$0xff]
    %v2411 = vld [vmem:[#allocation20 + $0x15f0] sm:$0xff]
    %v2412 = vld [vmem:[#allocation20 + $0x15f8] sm:$0xff]
    %v2413 = vld [vmem:[#allocation20 + $0x1600] sm:$0xff]
    %v2414 = vld [vmem:[#allocation20 + $0x1608] sm:$0xff]
    %v2415 = vld [vmem:[#allocation20 + $0x1610] sm:$0xff]
    %v2416 = vld [vmem:[#allocation20 + $0x1618] sm:$0xff]
    %v2417 = vld [vmem:[#allocation20 + $0x1620] sm:$0xff]
    %v2418 = vld [vmem:[#allocation20 + $0x1628] sm:$0xff]
    %v2419 = vld [vmem:[#allocation20 + $0x1630] sm:$0xff]
    %v2420 = vld [vmem:[#allocation20 + $0x1638] sm:$0xff]
    %v2421 = vld [vmem:[#allocation20 + $0x1640] sm:$0xff]
    %v2422 = vld [vmem:[#allocation20 + $0x1648] sm:$0xff]
    %v2423 = vld [vmem:[#allocation20 + $0x1650] sm:$0xff]
    %v2424 = vld [vmem:[#allocation20 + $0x1658] sm:$0xff]
    %v2425 = vld [vmem:[#allocation20 + $0x1660] sm:$0xff]
    %v2426 = vld [vmem:[#allocation20 + $0x1668] sm:$0xff]
    %v2427 = vld [vmem:[#allocation20 + $0x1670] sm:$0xff]
    %v2428 = vld [vmem:[#allocation20 + $0x1678] sm:$0xff]
    %v2429 = vld [vmem:[#allocation20 + $0x1680] sm:$0xff]
    %v2430 = vld [vmem:[#allocation20 + $0x1688] sm:$0xff]
    %v2431 = vld [vmem:[#allocation20 + $0x1690] sm:$0xff]
    %v2432 = vld [vmem:[#allocation20 + $0x1698] sm:$0xff]
    %v2433 = vld [vmem:[#allocation20 + $0x16a0] sm:$0xff]
    %v2434 = vld [vmem:[#allocation20 + $0x16a8] sm:$0xff]
    %v2435 = vld [vmem:[#allocation20 + $0x16b0] sm:$0xff]
    %v2436 = vld [vmem:[#allocation20 + $0x16b8] sm:$0xff]
    %v2437 = vld [vmem:[#allocation20 + $0x16c0] sm:$0xff]
    %v2438 = vld [vmem:[#allocation20 + $0x16c8] sm:$0xff]
    %v2439 = vld [vmem:[#allocation20 + $0x16d0] sm:$0xff]
    %v2440 = vld [vmem:[#allocation20 + $0x16d8] sm:$0xff]
    %v2441 = vld [vmem:[#allocation20 + $0x16e0] sm:$0xff]
    %v2442 = vld [vmem:[#allocation20 + $0x16e8] sm:$0xff]
    %v2443 = vld [vmem:[#allocation20 + $0x16f0] sm:$0xff]
    %v2444 = vld [vmem:[#allocation20 + $0x16f8] sm:$0xff]
    %v2445 = vld [vmem:[#allocation20 + $0x1700] sm:$0xff]
    %v2446 = vld [vmem:[#allocation20 + $0x1708] sm:$0xff]
    %v2447 = vld [vmem:[#allocation20 + $0x1710] sm:$0xff]
    %v2448 = vld [vmem:[#allocation20 + $0x1718] sm:$0xff]
    %v2449 = vld [vmem:[#allocation20 + $0x1720] sm:$0xff]
    %v2450 = vld [vmem:[#allocation20 + $0x1728] sm:$0xff]
    %v2451 = vld [vmem:[#allocation20 + $0x1730] sm:$0xff]
    %v2452 = vld [vmem:[#allocation20 + $0x1738] sm:$0xff]
    %v2453 = vld [vmem:[#allocation20 + $0x1740] sm:$0xff]
    %v2454 = vld [vmem:[#allocation20 + $0x1748] sm:$0xff]
    %v2455 = vld [vmem:[#allocation20 + $0x1750] sm:$0xff]
    %v2456 = vld [vmem:[#allocation20 + $0x1758] sm:$0xff]
    %v2457 = vld [vmem:[#allocation20 + $0x1760] sm:$0xff]
    %v2458 = vld [vmem:[#allocation20 + $0x1768] sm:$0xff]
    %v2459 = vld [vmem:[#allocation20 + $0x1770] sm:$0xff]
    %v2460 = vld [vmem:[#allocation20 + $0x1778] sm:$0xff]
    %v2461 = vld [vmem:[#allocation20 + $0x1780] sm:$0xff]
    %v2462 = vld [vmem:[#allocation20 + $0x1788] sm:$0xff]
    %v2463 = vld [vmem:[#allocation20 + $0x1790] sm:$0xff]
    %v2464 = vld [vmem:[#allocation20 + $0x1798] sm:$0xff]
    %v2465 = vld [vmem:[#allocation20 + $0x17a0] sm:$0xff]
    %v2466 = vld [vmem:[#allocation20 + $0x17a8] sm:$0xff]
    %v2467 = vld [vmem:[#allocation20 + $0x17b0] sm:$0xff]
    %v2468 = vld [vmem:[#allocation20 + $0x17b8] sm:$0xff]
    %v2469 = vld [vmem:[#allocation20 + $0x17c0] sm:$0xff]
    %v2470 = vld [vmem:[#allocation20 + $0x17c8] sm:$0xff]
    %v2471 = vld [vmem:[#allocation20 + $0x17d0] sm:$0xff]
    %v2472 = vld [vmem:[#allocation20 + $0x17d8] sm:$0xff]
    %v2473 = vld [vmem:[#allocation20 + $0x17e0] sm:$0xff]
    %v2474 = vld [vmem:[#allocation20 + $0x17e8] sm:$0xff]
    %v2475 = vld [vmem:[#allocation20 + $0x17f0] sm:$0xff]
    %v2476 = vld [vmem:[#allocation20 + $0x17f8] sm:$0xff]
    %v2477 = vld [vmem:[#allocation22] sm:$0x3f]
    %v2479 = vlaneseq
    %v2480 = vshrl.u32 %v2479, 7
    %v2481 = vsub.s32 0, %v2480
    %v2482 = vrot.slane %v2477, %v2481
    %v2483 = vlaneseq
    %v2484 = vshrl.u32 %v2483, 7
    %v2485 = vsub.s32 1, %v2484
    %v2486 = vrot.slane %v2477, %v2485
    %v2487 = vlaneseq
    %v2488 = vshrl.u32 %v2487, 7
    %v2489 = vsub.s32 2, %v2488
    %v2490 = vrot.slane %v2477, %v2489
    %v2491 = vlaneseq
    %v2492 = vshrl.u32 %v2491, 7
    %v2493 = vsub.s32 3, %v2492
    %v2494 = vrot.slane %v2477, %v2493
    %v2495 = vlaneseq
    %v2496 = vshrl.u32 %v2495, 7
    %v2497 = vsub.s32 4, %v2496
    %v2498 = vrot.slane %v2477, %v2497
    %v2499 = vlaneseq
    %v2500 = vshrl.u32 %v2499, 7
    %v2501 = vsub.s32 5, %v2500
    %v2502 = vrot.slane %v2477, %v2501
    %2509 = vmatprep.subr.mxu0 %v1710
    %2510 = vmatpush1.msra.mxu0 %v1709
    %2511 = vmatprep.subr.mxu0 %v1716
    %2512 = vmatpush1.msra.mxu0 %v1715
    %2513 = vmatprep.subr.mxu0 %v1722
    %2514 = vmatpush1.msra.mxu0 %v1721
    %2515 = vmatprep.subr.mxu0 %v1728
    %2516 = vmatpush1.msra.mxu0 %v1727
    %2517 = vmatprep.subr.mxu0 %v1734
    %2518 = vmatpush1.msra.mxu0 %v1733
    %2519 = vmatprep.subr.mxu0 %v1740
    %2520 = vmatpush1.msra.mxu0 %v1739
    %2521 = vmatprep.subr.mxu0 %v1746
    %2522 = vmatpush1.msra.mxu0 %v1745
    %2523 = vmatprep.subr.mxu0 %v1752
    %2524 = vmatpush1.msra.mxu0 %v1751
    %2525 = vmatprep.subr.mxu0 %v1758
    %2526 = vmatpush1.msra.mxu0 %v1757
    %2527 = vmatprep.subr.mxu0 %v1764
    %2528 = vmatpush1.msra.mxu0 %v1763
    %2529 = vmatprep.subr.mxu0 %v1770
    %2530 = vmatpush1.msra.mxu0 %v1769
    %2531 = vmatprep.subr.mxu0 %v1776
    %2532 = vmatpush1.msra.mxu0 %v1775
    %2533 = vmatprep.subr.mxu0 %v1782
    %2534 = vmatpush1.msra.mxu0 %v1781
    %2535 = vmatprep.subr.mxu0 %v1788
    %2536 = vmatpush1.msra.mxu0 %v1787
    %2537 = vmatprep.subr.mxu0 %v1794
    %2538 = vmatpush1.msra.mxu0 %v1793
    %2539 = vmatprep.subr.mxu0 %v1800
    %2540 = vmatpush1.msra.mxu0 %v1799
    %2541 = vmatprep.subr.mxu0 %v1806
    %2542 = vmatpush1.msra.mxu0 %v1805
    %2543 = vmatprep.subr.mxu0 %v1812
    %2544 = vmatpush1.msra.mxu0 %v1811
    %2545 = vmatprep.subr.mxu0 %v1818
    %2546 = vmatpush1.msra.mxu0 %v1817
    %2547 = vmatprep.subr.mxu0 %v1824
    %2548 = vmatpush1.msra.mxu0 %v1823
    %2549 = vmatprep.subr.mxu0 %v1830
    %2550 = vmatpush1.msra.mxu0 %v1829
    %2551 = vmatprep.subr.mxu0 %v1836
    %2552 = vmatpush1.msra.mxu0 %v1835
    %2553 = vmatprep.subr.mxu0 %v1842
    %2554 = vmatpush1.msra.mxu0 %v1841
    %2555 = vmatprep.subr.mxu0 %v1848
    %2556 = vmatpush1.msra.mxu0 %v1847
    %2557 = vmatprep.subr.mxu0 %v1854
    %2558 = vmatpush1.msra.mxu0 %v1853
    %2559 = vmatprep.subr.mxu0 %v1860
    %2560 = vmatpush1.msra.mxu0 %v1859
    %2561 = vmatprep.subr.mxu0 %v1866
    %2562 = vmatpush1.msra.mxu0 %v1865
    %2563 = vmatprep.subr.mxu0 %v1872
    %2564 = vmatpush1.msra.mxu0 %v1871
    %2565 = vmatprep.subr.mxu0 %v1878
    %2566 = vmatpush1.msra.mxu0 %v1877
    %2567 = vmatprep.subr.mxu0 %v1884
    %2568 = vmatpush1.msra.mxu0 %v1883
    %2569 = vmatprep.subr.mxu0 %v1890
    %2570 = vmatpush1.msra.mxu0 %v1889
    %2571 = vmatprep.subr.mxu0 %v1896
    %2572 = vmatpush1.msra.mxu0 %v1895
    %2573 = vmatprep.mubr.f32.mxu0 %v1702
    %2574 = vmatmul.mubr.f32.gmra.mrb[0].mxu0 %v1701
    %v2575 = vpop.f32.mrb[0].mxu0
    %v2576 = vadd.f32 %v2482, %v2575
    %v2577 = vpop.f32.mrb[0].mxu0
    %v2578 = vadd.f32 %v2486, %v2577
    %2579 = vdwg.mxu0
    %2580 = vmatprep.subr.mxu0 %v1902
    %2581 = vmatpush1.msra.mxu0 %v1901
    %2582 = vmatprep.subr.mxu0 %v1908
    %2583 = vmatpush1.msra.mxu0 %v1907
    %2584 = vmatprep.subr.mxu0 %v1914
    %2585 = vmatpush1.msra.mxu0 %v1913
    %2586 = vmatprep.subr.mxu0 %v1920
    %2587 = vmatpush1.msra.mxu0 %v1919
    %2588 = vmatprep.subr.mxu0 %v1926
    %2589 = vmatpush1.msra.mxu0 %v1925
    %2590 = vmatprep.subr.mxu0 %v1932
    %2591 = vmatpush1.msra.mxu0 %v1931
    %2592 = vmatprep.subr.mxu0 %v1938
    %2593 = vmatpush1.msra.mxu0 %v1937
    %2594 = vmatprep.subr.mxu0 %v1944
    %2595 = vmatpush1.msra.mxu0 %v1943
    %2596 = vmatprep.subr.mxu0 %v1950
    %2597 = vmatpush1.msra.mxu0 %v1949
    %2598 = vmatprep.subr.mxu0 %v1956
    %2599 = vmatpush1.msra.mxu0 %v1955
    %2600 = vmatprep.subr.mxu0 %v1962
    %2601 = vmatpush1.msra.mxu0 %v1961
    %2602 = vmatprep.subr.mxu0 %v1968
    %2603 = vmatpush1.msra.mxu0 %v1967
    %2604 = vmatprep.subr.mxu0 %v1974
    %2605 = vmatpush1.msra.mxu0 %v1973
    %2606 = vmatprep.subr.mxu0 %v1980
    %2607 = vmatpush1.msra.mxu0 %v1979
    %2608 = vmatprep.subr.mxu0 %v1986
    %2609 = vmatpush1.msra.mxu0 %v1985
    %2610 = vmatprep.subr.mxu0 %v1992
    %2611 = vmatpush1.msra.mxu0 %v1991
    %2612 = vmatprep.subr.mxu0 %v1998
    %2613 = vmatpush1.msra.mxu0 %v1997
    %2614 = vmatprep.subr.mxu0 %v2004
    %2615 = vmatpush1.msra.mxu0 %v2003
    %2616 = vmatprep.subr.mxu0 %v2010
    %2617 = vmatpush1.msra.mxu0 %v2009
    %2618 = vmatprep.subr.mxu0 %v2016
    %2619 = vmatpush1.msra.mxu0 %v2015
    %2620 = vmatprep.subr.mxu0 %v2022
    %2621 = vmatpush1.msra.mxu0 %v2021
    %2622 = vmatprep.subr.mxu0 %v2028
    %2623 = vmatpush1.msra.mxu0 %v2027
    %2624 = vmatprep.subr.mxu0 %v2034
    %2625 = vmatpush1.msra.mxu0 %v2033
    %2626 = vmatprep.subr.mxu0 %v2040
    %2627 = vmatpush1.msra.mxu0 %v2039
    %2628 = vmatprep.subr.mxu0 %v2046
    %2629 = vmatpush1.msra.mxu0 %v2045
    %2630 = vmatprep.subr.mxu0 %v2052
    %2631 = vmatpush1.msra.mxu0 %v2051
    %2632 = vmatprep.subr.mxu0 %v2058
    %2633 = vmatpush1.msra.mxu0 %v2057
    %2634 = vmatprep.subr.mxu0 %v2064
    %2635 = vmatpush1.msra.mxu0 %v2063
    %2636 = vmatprep.subr.mxu0 %v2070
    %2637 = vmatpush1.msra.mxu0 %v2069
    %2638 = vmatprep.subr.mxu0 %v2076
    %2639 = vmatpush1.msra.mxu0 %v2075
    %2640 = vmatprep.subr.mxu0 %v2082
    %2641 = vmatpush1.msra.mxu0 %v2081
    %2642 = vmatprep.subr.mxu0 %v2088
    %2643 = vmatpush1.msra.mxu0 %v2087
    %2644 = vmatprep.mubr.f32.mxu0 %v1704
    %2645 = vmatmul.mubr.f32.gmra.mrb[0].mxu0 %v1703
    %v2646 = vpop.f32.mrb[0].mxu0
    %v2647 = vadd.f32 %v2576, %v2646
    %v2648 = vpop.f32.mrb[0].mxu0
    %v2649 = vadd.f32 %v2578, %v2648
    %2650 = vdwg.mxu0
    %2651 = vmatprep.subr.mxu0 %v2094
    %2652 = vmatpush1.msra.mxu0 %v2093
    %2653 = vmatprep.subr.mxu0 %v2100
    %2654 = vmatpush1.msra.mxu0 %v2099
    %2655 = vmatprep.subr.mxu0 %v2106
    %2656 = vmatpush1.msra.mxu0 %v2105
    %2657 = vmatprep.subr.mxu0 %v2112
    %2658 = vmatpush1.msra.mxu0 %v2111
    %2659 = vmatprep.subr.mxu0 %v2118
    %2660 = vmatpush1.msra.mxu0 %v2117
    %2661 = vmatprep.subr.mxu0 %v2124
    %2662 = vmatpush1.msra.mxu0 %v2123
    %2663 = vmatprep.subr.mxu0 %v2130
    %2664 = vmatpush1.msra.mxu0 %v2129
    %2665 = vmatprep.subr.mxu0 %v2136
    %2666 = vmatpush1.msra.mxu0 %v2135
    %2667 = vmatprep.subr.mxu0 %v2142
    %2668 = vmatpush1.msra.mxu0 %v2141
    %2669 = vmatprep.subr.mxu0 %v2148
    %2670 = vmatpush1.msra.mxu0 %v2147
    %2671 = vmatprep.subr.mxu0 %v2154
    %2672 = vmatpush1.msra.mxu0 %v2153
    %2673 = vmatprep.subr.mxu0 %v2160
    %2674 = vmatpush1.msra.mxu0 %v2159
    %2675 = vmatprep.subr.mxu0 %v2166
    %2676 = vmatpush1.msra.mxu0 %v2165
    %2677 = vmatprep.subr.mxu0 %v2172
    %2678 = vmatpush1.msra.mxu0 %v2171
    %2679 = vmatprep.subr.mxu0 %v2178
    %2680 = vmatpush1.msra.mxu0 %v2177
    %2681 = vmatprep.subr.mxu0 %v2184
    %2682 = vmatpush1.msra.mxu0 %v2183
    %2683 = vmatprep.subr.mxu0 %v2190
    %2684 = vmatpush1.msra.mxu0 %v2189
    %2685 = vmatprep.subr.mxu0 %v2196
    %2686 = vmatpush1.msra.mxu0 %v2195
    %2687 = vmatprep.subr.mxu0 %v2202
    %2688 = vmatpush1.msra.mxu0 %v2201
    %2689 = vmatprep.subr.mxu0 %v2208
    %2690 = vmatpush1.msra.mxu0 %v2207
    %2691 = vmatprep.subr.mxu0 %v2214
    %2692 = vmatpush1.msra.mxu0 %v2213
    %2693 = vmatprep.subr.mxu0 %v2220
    %2694 = vmatpush1.msra.mxu0 %v2219
    %2695 = vmatprep.subr.mxu0 %v2226
    %2696 = vmatpush1.msra.mxu0 %v2225
    %2697 = vmatprep.subr.mxu0 %v2232
    %2698 = vmatpush1.msra.mxu0 %v2231
    %2699 = vmatprep.subr.mxu0 %v2238
    %2700 = vmatpush1.msra.mxu0 %v2237
    %2701 = vmatprep.subr.mxu0 %v2244
    %2702 = vmatpush1.msra.mxu0 %v2243
    %2703 = vmatprep.subr.mxu0 %v2250
    %2704 = vmatpush1.msra.mxu0 %v2249
    %2705 = vmatprep.subr.mxu0 %v2256
    %2706 = vmatpush1.msra.mxu0 %v2255
    %2707 = vmatprep.subr.mxu0 %v2262
    %2708 = vmatpush1.msra.mxu0 %v2261
    %2709 = vmatprep.subr.mxu0 %v2268
    %2710 = vmatpush1.msra.mxu0 %v2267
    %2711 = vmatprep.subr.mxu0 %v2274
    %2712 = vmatpush1.msra.mxu0 %v2273
    %2713 = vmatprep.subr.mxu0 %v2280
    %2714 = vmatpush1.msra.mxu0 %v2279
    %2715 = vmatprep.mubr.f32.mxu0 %v1706
    %2716 = vmatmul.mubr.f32.gmra.mrb[0].mxu0 %v1705
    %v2717 = vpop.f32.mrb[0].mxu0
    %v2718 = vadd.f32 %v2647, %v2717
    %v2719 = vpop.f32.mrb[0].mxu0
    %v2720 = vadd.f32 %v2649, %v2719
    %2721 = vdwg.mxu0
    %2722 = vmatprep.subr.mxu0 %v2286
    %2723 = vmatpush1.msra.mxu0 %v2285
    %2724 = vmatprep.subr.mxu0 %v2292
    %2725 = vmatpush1.msra.mxu0 %v2291
    %2726 = vmatprep.subr.mxu0 %v2298
    %2727 = vmatpush1.msra.mxu0 %v2297
    %2728 = vmatprep.subr.mxu0 %v2304
    %2729 = vmatpush1.msra.mxu0 %v2303
    %2730 = vmatprep.subr.mxu0 %v2310
    %2731 = vmatpush1.msra.mxu0 %v2309
    %2732 = vmatprep.subr.mxu0 %v2316
    %2733 = vmatpush1.msra.mxu0 %v2315
    %2734 = vmatprep.subr.mxu0 %v2322
    %2735 = vmatpush1.msra.mxu0 %v2321
    %2736 = vmatprep.subr.mxu0 %v2328
    %2737 = vmatpush1.msra.mxu0 %v2327
    %2738 = vmatprep.subr.mxu0 %v2334
    %2739 = vmatpush1.msra.mxu0 %v2333
    %2740 = vmatprep.subr.mxu0 %v2340
    %2741 = vmatpush1.msra.mxu0 %v2339
    %2742 = vmatprep.subr.mxu0 %v2346
    %2743 = vmatpush1.msra.mxu0 %v2345
    %2744 = vmatprep.subr.mxu0 %v2352
    %2745 = vmatpush1.msra.mxu0 %v2351
    %2746 = vmatprep.subr.mxu0 %v2358
    %2747 = vmatpush1.msra.mxu0 %v2357
    %2748 = vmatprep.subr.mxu0 %v2364
    %2749 = vmatpush1.msra.mxu0 %v2363
    %2750 = vmatprep.subr.mxu0 %v2370
    %2751 = vmatpush1.msra.mxu0 %v2369
    %2752 = vmatprep.subr.mxu0 %v2376
    %2753 = vmatpush1.msra.mxu0 %v2375
    %2754 = vmatprep.subr.mxu0 %v2382
    %2755 = vmatpush1.msra.mxu0 %v2381
    %2756 = vmatprep.subr.mxu0 %v2388
    %2757 = vmatpush1.msra.mxu0 %v2387
    %2758 = vmatprep.subr.mxu0 %v2394
    %2759 = vmatpush1.msra.mxu0 %v2393
    %2760 = vmatprep.subr.mxu0 %v2400
    %2761 = vmatpush1.msra.mxu0 %v2399
    %2762 = vmatprep.subr.mxu0 %v2406
    %2763 = vmatpush1.msra.mxu0 %v2405
    %2764 = vmatprep.subr.mxu0 %v2412
    %2765 = vmatpush1.msra.mxu0 %v2411
    %2766 = vmatprep.subr.mxu0 %v2418
    %2767 = vmatpush1.msra.mxu0 %v2417
    %2768 = vmatprep.subr.mxu0 %v2424
    %2769 = vmatpush1.msra.mxu0 %v2423
    %2770 = vmatprep.subr.mxu0 %v2430
    %2771 = vmatpush1.msra.mxu0 %v2429
    %2772 = vmatprep.subr.mxu0 %v2436
    %2773 = vmatpush1.msra.mxu0 %v2435
    %2774 = vmatprep.subr.mxu0 %v2442
    %2775 = vmatpush1.msra.mxu0 %v2441
    %2776 = vmatprep.subr.mxu0 %v2448
    %2777 = vmatpush1.msra.mxu0 %v2447
    %2778 = vmatprep.subr.mxu0 %v2454
    %2779 = vmatpush1.msra.mxu0 %v2453
    %2780 = vmatprep.subr.mxu0 %v2460
    %2781 = vmatpush1.msra.mxu0 %v2459
    %2782 = vmatprep.subr.mxu0 %v2466
    %2783 = vmatpush1.msra.mxu0 %v2465
    %2784 = vmatprep.subr.mxu0 %v2472
    %2785 = vmatpush1.msra.mxu0 %v2471
    %2786 = vmatprep.mubr.f32.mxu0 %v1708
    %2787 = vmatmul.mubr.f32.gmra.mrb[0].mxu0 %v1707
    %v2788 = vpop.f32.mrb[0].mxu0
    %v2789 = vadd.f32 %v2718, %v2788
    %v2790 = vpop.f32.mrb[0].mxu0
    %v2791 = vadd.f32 %v2720, %v2790
    %2792 = vdwg.mxu0
    %2793 = vmatprep.subr.mxu0 %v1712
    %2794 = vmatpush1.msra.mxu0 %v1711
    %2795 = vmatprep.subr.mxu0 %v1718
    %2796 = vmatpush1.msra.mxu0 %v1717
    %2797 = vmatprep.subr.mxu0 %v1724
    %2798 = vmatpush1.msra.mxu0 %v1723
    %2799 = vmatprep.subr.mxu0 %v1730
    %2800 = vmatpush1.msra.mxu0 %v1729
    %2801 = vmatprep.subr.mxu0 %v1736
    %2802 = vmatpush1.msra.mxu0 %v1735
    %2803 = vmatprep.subr.mxu0 %v1742
    %2804 = vmatpush1.msra.mxu0 %v1741
    %2805 = vmatprep.subr.mxu0 %v1748
    %2806 = vmatpush1.msra.mxu0 %v1747
    %2807 = vmatprep.subr.mxu0 %v1754
    %2808 = vmatpush1.msra.mxu0 %v1753
    %2809 = vmatprep.subr.mxu0 %v1760
    %2810 = vmatpush1.msra.mxu0 %v1759
    %2811 = vmatprep.subr.mxu0 %v1766
    %2812 = vmatpush1.msra.mxu0 %v1765
    %2813 = vmatprep.subr.mxu0 %v1772
    %2814 = vmatpush1.msra.mxu0 %v1771
    %2815 = vmatprep.subr.mxu0 %v1778
    %2816 = vmatpush1.msra.mxu0 %v1777
    %2817 = vmatprep.subr.mxu0 %v1784
    %2818 = vmatpush1.msra.mxu0 %v1783
    %2819 = vmatprep.subr.mxu0 %v1790
    %2820 = vmatpush1.msra.mxu0 %v1789
    %2821 = vmatprep.subr.mxu0 %v1796
    %2822 = vmatpush1.msra.mxu0 %v1795
    %2823 = vmatprep.subr.mxu0 %v1802
    %2824 = vmatpush1.msra.mxu0 %v1801
    %2825 = vmatprep.subr.mxu0 %v1808
    %2826 = vmatpush1.msra.mxu0 %v1807
    %2827 = vmatprep.subr.mxu0 %v1814
    %2828 = vmatpush1.msra.mxu0 %v1813
    %2829 = vmatprep.subr.mxu0 %v1820
    %2830 = vmatpush1.msra.mxu0 %v1819
    %2831 = vmatprep.subr.mxu0 %v1826
    %2832 = vmatpush1.msra.mxu0 %v1825
    %2833 = vmatprep.subr.mxu0 %v1832
    %2834 = vmatpush1.msra.mxu0 %v1831
    %2835 = vmatprep.subr.mxu0 %v1838
    %2836 = vmatpush1.msra.mxu0 %v1837
    %2837 = vmatprep.subr.mxu0 %v1844
    %2838 = vmatpush1.msra.mxu0 %v1843
    %2839 = vmatprep.subr.mxu0 %v1850
    %2840 = vmatpush1.msra.mxu0 %v1849
    %2841 = vmatprep.subr.mxu0 %v1856
    %2842 = vmatpush1.msra.mxu0 %v1855
    %2843 = vmatprep.subr.mxu0 %v1862
    %2844 = vmatpush1.msra.mxu0 %v1861
    %2845 = vmatprep.subr.mxu0 %v1868
    %2846 = vmatpush1.msra.mxu0 %v1867
    %2847 = vmatprep.subr.mxu0 %v1874
    %2848 = vmatpush1.msra.mxu0 %v1873
    %2849 = vmatprep.subr.mxu0 %v1880
    %2850 = vmatpush1.msra.mxu0 %v1879
    %2851 = vmatprep.subr.mxu0 %v1886
    %2852 = vmatpush1.msra.mxu0 %v1885
    %2853 = vmatprep.subr.mxu0 %v1892
    %2854 = vmatpush1.msra.mxu0 %v1891
    %2855 = vmatprep.subr.mxu0 %v1898
    %2856 = vmatpush1.msra.mxu0 %v1897
    %2857 = vmatprep.mubr.f32.mxu0 %v1702
    %2858 = vmatmul.mubr.f32.gmra.mrb[0].mxu0 %v1701
    %v2859 = vpop.f32.mrb[0].mxu0
    %v2860 = vadd.f32 %v2490, %v2859
    %v2861 = vpop.f32.mrb[0].mxu0
    %v2862 = vadd.f32 %v2494, %v2861
    %2863 = vdwg.mxu0
    %2864 = vmatprep.subr.mxu0 %v1904
    %2865 = vmatpush1.msra.mxu0 %v1903
    %2866 = vmatprep.subr.mxu0 %v1910
    %2867 = vmatpush1.msra.mxu0 %v1909
    %2868 = vmatprep.subr.mxu0 %v1916
    %2869 = vmatpush1.msra.mxu0 %v1915
    %2870 = vmatprep.subr.mxu0 %v1922
    %2871 = vmatpush1.msra.mxu0 %v1921
    %2872 = vmatprep.subr.mxu0 %v1928
    %2873 = vmatpush1.msra.mxu0 %v1927
    %2874 = vmatprep.subr.mxu0 %v1934
    %2875 = vmatpush1.msra.mxu0 %v1933
    %2876 = vmatprep.subr.mxu0 %v1940
    %2877 = vmatpush1.msra.mxu0 %v1939
    %2878 = vmatprep.subr.mxu0 %v1946
    %2879 = vmatpush1.msra.mxu0 %v1945
    %2880 = vmatprep.subr.mxu0 %v1952
    %2881 = vmatpush1.msra.mxu0 %v1951
    %2882 = vmatprep.subr.mxu0 %v1958
    %2883 = vmatpush1.msra.mxu0 %v1957
    %2884 = vmatprep.subr.mxu0 %v1964
    %2885 = vmatpush1.msra.mxu0 %v1963
    %2886 = vmatprep.subr.mxu0 %v1970
    %2887 = vmatpush1.msra.mxu0 %v1969
    %2888 = vmatprep.subr.mxu0 %v1976
    %2889 = vmatpush1.msra.mxu0 %v1975
    %2890 = vmatprep.subr.mxu0 %v1982
    %2891 = vmatpush1.msra.mxu0 %v1981
    %2892 = vmatprep.subr.mxu0 %v1988
    %2893 = vmatpush1.msra.mxu0 %v1987
    %2894 = vmatprep.subr.mxu0 %v1994
    %2895 = vmatpush1.msra.mxu0 %v1993
    %2896 = vmatprep.subr.mxu0 %v2000
    %2897 = vmatpush1.msra.mxu0 %v1999
    %2898 = vmatprep.subr.mxu0 %v2006
    %2899 = vmatpush1.msra.mxu0 %v2005
    %2900 = vmatprep.subr.mxu0 %v2012
    %2901 = vmatpush1.msra.mxu0 %v2011
    %2902 = vmatprep.subr.mxu0 %v2018
    %2903 = vmatpush1.msra.mxu0 %v2017
    %2904 = vmatprep.subr.mxu0 %v2024
    %2905 = vmatpush1.msra.mxu0 %v2023
    %2906 = vmatprep.subr.mxu0 %v2030
    %2907 = vmatpush1.msra.mxu0 %v2029
    %2908 = vmatprep.subr.mxu0 %v2036
    %2909 = vmatpush1.msra.mxu0 %v2035
    %2910 = vmatprep.subr.mxu0 %v2042
    %2911 = vmatpush1.msra.mxu0 %v2041
    %2912 = vmatprep.subr.mxu0 %v2048
    %2913 = vmatpush1.msra.mxu0 %v2047
    %2914 = vmatprep.subr.mxu0 %v2054
    %2915 = vmatpush1.msra.mxu0 %v2053
    %2916 = vmatprep.subr.mxu0 %v2060
    %2917 = vmatpush1.msra.mxu0 %v2059
    %2918 = vmatprep.subr.mxu0 %v2066
    %2919 = vmatpush1.msra.mxu0 %v2065
    %2920 = vmatprep.subr.mxu0 %v2072
    %2921 = vmatpush1.msra.mxu0 %v2071
    %2922 = vmatprep.subr.mxu0 %v2078
    %2923 = vmatpush1.msra.mxu0 %v2077
    %2924 = vmatprep.subr.mxu0 %v2084
    %2925 = vmatpush1.msra.mxu0 %v2083
    %2926 = vmatprep.subr.mxu0 %v2090
    %2927 = vmatpush1.msra.mxu0 %v2089
    %2928 = vmatprep.mubr.f32.mxu0 %v1704
    %2929 = vmatmul.mubr.f32.gmra.mrb[0].mxu0 %v1703
    %v2930 = vpop.f32.mrb[0].mxu0
    %v2931 = vadd.f32 %v2860, %v2930
    %v2932 = vpop.f32.mrb[0].mxu0
    %v2933 = vadd.f32 %v2862, %v2932
    %2934 = vdwg.mxu0
    %2935 = vmatprep.subr.mxu0 %v2096
    %2936 = vmatpush1.msra.mxu0 %v2095
    %2937 = vmatprep.subr.mxu0 %v2102
    %2938 = vmatpush1.msra.mxu0 %v2101
    %2939 = vmatprep.subr.mxu0 %v2108
    %2940 = vmatpush1.msra.mxu0 %v2107
    %2941 = vmatprep.subr.mxu0 %v2114
    %2942 = vmatpush1.msra.mxu0 %v2113
    %2943 = vmatprep.subr.mxu0 %v2120
    %2944 = vmatpush1.msra.mxu0 %v2119
    %2945 = vmatprep.subr.mxu0 %v2126
    %2946 = vmatpush1.msra.mxu0 %v2125
    %2947 = vmatprep.subr.mxu0 %v2132
    %2948 = vmatpush1.msra.mxu0 %v2131
    %2949 = vmatprep.subr.mxu0 %v2138
    %2950 = vmatpush1.msra.mxu0 %v2137
    %2951 = vmatprep.subr.mxu0 %v2144
    %2952 = vmatpush1.msra.mxu0 %v2143
    %2953 = vmatprep.subr.mxu0 %v2150
    %2954 = vmatpush1.msra.mxu0 %v2149
    %2955 = vmatprep.subr.mxu0 %v2156
    %2956 = vmatpush1.msra.mxu0 %v2155
    %2957 = vmatprep.subr.mxu0 %v2162
    %2958 = vmatpush1.msra.mxu0 %v2161
    %2959 = vmatprep.subr.mxu0 %v2168
    %2960 = vmatpush1.msra.mxu0 %v2167
    %2961 = vmatprep.subr.mxu0 %v2174
    %2962 = vmatpush1.msra.mxu0 %v2173
    %2963 = vmatprep.subr.mxu0 %v2180
    %2964 = vmatpush1.msra.mxu0 %v2179
    %2965 = vmatprep.subr.mxu0 %v2186
    %2966 = vmatpush1.msra.mxu0 %v2185
    %2967 = vmatprep.subr.mxu0 %v2192
    %2968 = vmatpush1.msra.mxu0 %v2191
    %2969 = vmatprep.subr.mxu0 %v2198
    %2970 = vmatpush1.msra.mxu0 %v2197
    %2971 = vmatprep.subr.mxu0 %v2204
    %2972 = vmatpush1.msra.mxu0 %v2203
    %2973 = vmatprep.subr.mxu0 %v2210
    %2974 = vmatpush1.msra.mxu0 %v2209
    %2975 = vmatprep.subr.mxu0 %v2216
    %2976 = vmatpush1.msra.mxu0 %v2215
    %2977 = vmatprep.subr.mxu0 %v2222
    %2978 = vmatpush1.msra.mxu0 %v2221
    %2979 = vmatprep.subr.mxu0 %v2228
    %2980 = vmatpush1.msra.mxu0 %v2227
    %2981 = vmatprep.subr.mxu0 %v2234
    %2982 = vmatpush1.msra.mxu0 %v2233
    %2983 = vmatprep.subr.mxu0 %v2240
    %2984 = vmatpush1.msra.mxu0 %v2239
    %2985 = vmatprep.subr.mxu0 %v2246
    %2986 = vmatpush1.msra.mxu0 %v2245
    %2987 = vmatprep.subr.mxu0 %v2252
    %2988 = vmatpush1.msra.mxu0 %v2251
    %2989 = vmatprep.subr.mxu0 %v2258
    %2990 = vmatpush1.msra.mxu0 %v2257
    %2991 = vmatprep.subr.mxu0 %v2264
    %2992 = vmatpush1.msra.mxu0 %v2263
    %2993 = vmatprep.subr.mxu0 %v2270
    %2994 = vmatpush1.msra.mxu0 %v2269
    %2995 = vmatprep.subr.mxu0 %v2276
    %2996 = vmatpush1.msra.mxu0 %v2275
    %2997 = vmatprep.subr.mxu0 %v2282
    %2998 = vmatpush1.msra.mxu0 %v2281
    %2999 = vmatprep.mubr.f32.mxu0 %v1706
    %3000 = vmatmul.mubr.f32.gmra.mrb[0].mxu0 %v1705
    %v3001 = vpop.f32.mrb[0].mxu0
    %v3002 = vadd.f32 %v2931, %v3001
    %v3003 = vpop.f32.mrb[0].mxu0
    %v3004 = vadd.f32 %v2933, %v3003
    %3005 = vdwg.mxu0
    %3006 = vmatprep.subr.mxu0 %v2288
    %3007 = vmatpush1.msra.mxu0 %v2287
    %3008 = vmatprep.subr.mxu0 %v2294
    %3009 = vmatpush1.msra.mxu0 %v2293
    %3010 = vmatprep.subr.mxu0 %v2300
    %3011 = vmatpush1.msra.mxu0 %v2299
    %3012 = vmatprep.subr.mxu0 %v2306
    %3013 = vmatpush1.msra.mxu0 %v2305
    %3014 = vmatprep.subr.mxu0 %v2312
    %3015 = vmatpush1.msra.mxu0 %v2311
    %3016 = vmatprep.subr.mxu0 %v2318
    %3017 = vmatpush1.msra.mxu0 %v2317
    %3018 = vmatprep.subr.mxu0 %v2324
    %3019 = vmatpush1.msra.mxu0 %v2323
    %3020 = vmatprep.subr.mxu0 %v2330
    %3021 = vmatpush1.msra.mxu0 %v2329
    %3022 = vmatprep.subr.mxu0 %v2336
    %3023 = vmatpush1.msra.mxu0 %v2335
    %3024 = vmatprep.subr.mxu0 %v2342
    %3025 = vmatpush1.msra.mxu0 %v2341
    %3026 = vmatprep.subr.mxu0 %v2348
    %3027 = vmatpush1.msra.mxu0 %v2347
    %3028 = vmatprep.subr.mxu0 %v2354
    %3029 = vmatpush1.msra.mxu0 %v2353
    %3030 = vmatprep.subr.mxu0 %v2360
    %3031 = vmatpush1.msra.mxu0 %v2359
    %3032 = vmatprep.subr.mxu0 %v2366
    %3033 = vmatpush1.msra.mxu0 %v2365
    %3034 = vmatprep.subr.mxu0 %v2372
    %3035 = vmatpush1.msra.mxu0 %v2371
    %3036 = vmatprep.subr.mxu0 %v2378
    %3037 = vmatpush1.msra.mxu0 %v2377
    %3038 = vmatprep.subr.mxu0 %v2384
    %3039 = vmatpush1.msra.mxu0 %v2383
    %3040 = vmatprep.subr.mxu0 %v2390
    %3041 = vmatpush1.msra.mxu0 %v2389
    %3042 = vmatprep.subr.mxu0 %v2396
    %3043 = vmatpush1.msra.mxu0 %v2395
    %3044 = vmatprep.subr.mxu0 %v2402
    %3045 = vmatpush1.msra.mxu0 %v2401
    %3046 = vmatprep.subr.mxu0 %v2408
    %3047 = vmatpush1.msra.mxu0 %v2407
    %3048 = vmatprep.subr.mxu0 %v2414
    %3049 = vmatpush1.msra.mxu0 %v2413
    %3050 = vmatprep.subr.mxu0 %v2420
    %3051 = vmatpush1.msra.mxu0 %v2419
    %3052 = vmatprep.subr.mxu0 %v2426
    %3053 = vmatpush1.msra.mxu0 %v2425
    %3054 = vmatprep.subr.mxu0 %v2432
    %3055 = vmatpush1.msra.mxu0 %v2431
    %3056 = vmatprep.subr.mxu0 %v2438
    %3057 = vmatpush1.msra.mxu0 %v2437
    %3058 = vmatprep.subr.mxu0 %v2444
    %3059 = vmatpush1.msra.mxu0 %v2443
    %3060 = vmatprep.subr.mxu0 %v2450
    %3061 = vmatpush1.msra.mxu0 %v2449
    %3062 = vmatprep.subr.mxu0 %v2456
    %3063 = vmatpush1.msra.mxu0 %v2455
    %3064 = vmatprep.subr.mxu0 %v2462
    %3065 = vmatpush1.msra.mxu0 %v2461
    %3066 = vmatprep.subr.mxu0 %v2468
    %3067 = vmatpush1.msra.mxu0 %v2467
    %3068 = vmatprep.subr.mxu0 %v2474
    %3069 = vmatpush1.msra.mxu0 %v2473
    %3070 = vmatprep.mubr.f32.mxu0 %v1708
    %3071 = vmatmul.mubr.f32.gmra.mrb[0].mxu0 %v1707
    %v3072 = vpop.f32.mrb[0].mxu0
    %v3073 = vadd.f32 %v3002, %v3072
    %v3074 = vpop.f32.mrb[0].mxu0
    %v3075 = vadd.f32 %v3004, %v3074
    %3076 = vdwg.mxu0
    %3077 = vmatprep.subr.mxu0 %v1714
    %3078 = vmatpush1.msra.mxu0 %v1713
    %3079 = vmatprep.subr.mxu0 %v1720
    %3080 = vmatpush1.msra.mxu0 %v1719
    %3081 = vmatprep.subr.mxu0 %v1726
    %3082 = vmatpush1.msra.mxu0 %v1725
    %3083 = vmatprep.subr.mxu0 %v1732
    %3084 = vmatpush1.msra.mxu0 %v1731
    %3085 = vmatprep.subr.mxu0 %v1738
    %3086 = vmatpush1.msra.mxu0 %v1737
    %3087 = vmatprep.subr.mxu0 %v1744
    %3088 = vmatpush1.msra.mxu0 %v1743
    %3089 = vmatprep.subr.mxu0 %v1750
    %3090 = vmatpush1.msra.mxu0 %v1749
    %3091 = vmatprep.subr.mxu0 %v1756
    %3092 = vmatpush1.msra.mxu0 %v1755
    %3093 = vmatprep.subr.mxu0 %v1762
    %3094 = vmatpush1.msra.mxu0 %v1761
    %3095 = vmatprep.subr.mxu0 %v1768
    %3096 = vmatpush1.msra.mxu0 %v1767
    %3097 = vmatprep.subr.mxu0 %v1774
    %3098 = vmatpush1.msra.mxu0 %v1773
    %3099 = vmatprep.subr.mxu0 %v1780
    %3100 = vmatpush1.msra.mxu0 %v1779
    %3101 = vmatprep.subr.mxu0 %v1786
    %3102 = vmatpush1.msra.mxu0 %v1785
    %3103 = vmatprep.subr.mxu0 %v1792
    %3104 = vmatpush1.msra.mxu0 %v1791
    %3105 = vmatprep.subr.mxu0 %v1798
    %3106 = vmatpush1.msra.mxu0 %v1797
    %3107 = vmatprep.subr.mxu0 %v1804
    %3108 = vmatpush1.msra.mxu0 %v1803
    %3109 = vmatprep.subr.mxu0 %v1810
    %3110 = vmatpush1.msra.mxu0 %v1809
    %3111 = vmatprep.subr.mxu0 %v1816
    %3112 = vmatpush1.msra.mxu0 %v1815
    %3113 = vmatprep.subr.mxu0 %v1822
    %3114 = vmatpush1.msra.mxu0 %v1821
    %3115 = vmatprep.subr.mxu0 %v1828
    %3116 = vmatpush1.msra.mxu0 %v1827
    %3117 = vmatprep.subr.mxu0 %v1834
    %3118 = vmatpush1.msra.mxu0 %v1833
    %3119 = vmatprep.subr.mxu0 %v1840
    %3120 = vmatpush1.msra.mxu0 %v1839
    %3121 = vmatprep.subr.mxu0 %v1846
    %3122 = vmatpush1.msra.mxu0 %v1845
    %3123 = vmatprep.subr.mxu0 %v1852
    %3124 = vmatpush1.msra.mxu0 %v1851
    %3125 = vmatprep.subr.mxu0 %v1858
    %3126 = vmatpush1.msra.mxu0 %v1857
    %3127 = vmatprep.subr.mxu0 %v1864
    %3128 = vmatpush1.msra.mxu0 %v1863
    %3129 = vmatprep.subr.mxu0 %v1870
    %3130 = vmatpush1.msra.mxu0 %v1869
    %3131 = vmatprep.subr.mxu0 %v1876
    %3132 = vmatpush1.msra.mxu0 %v1875
    %3133 = vmatprep.subr.mxu0 %v1882
    %3134 = vmatpush1.msra.mxu0 %v1881
    %3135 = vmatprep.subr.mxu0 %v1888
    %3136 = vmatpush1.msra.mxu0 %v1887
    %3137 = vmatprep.subr.mxu0 %v1894
    %3138 = vmatpush1.msra.mxu0 %v1893
    %3139 = vmatprep.subr.mxu0 %v1900
    %3140 = vmatpush1.msra.mxu0 %v1899
    %3141 = vmatprep.mubr.f32.mxu0 %v1702
    %3142 = vmatmul.mubr.f32.gmra.mrb[0].mxu0 %v1701
    %v3143 = vpop.f32.mrb[0].mxu0
    %v3144 = vadd.f32 %v2498, %v3143
    %v3145 = vpop.f32.mrb[0].mxu0
    %v3146 = vadd.f32 %v2502, %v3145
    %3147 = vdwg.mxu0
    %3148 = vmatprep.subr.mxu0 %v1906
    %3149 = vmatpush1.msra.mxu0 %v1905
    %3150 = vmatprep.subr.mxu0 %v1912
    %3151 = vmatpush1.msra.mxu0 %v1911
    %3152 = vmatprep.subr.mxu0 %v1918
    %3153 = vmatpush1.msra.mxu0 %v1917
    %3154 = vmatprep.subr.mxu0 %v1924
    %3155 = vmatpush1.msra.mxu0 %v1923
    %3156 = vmatprep.subr.mxu0 %v1930
    %3157 = vmatpush1.msra.mxu0 %v1929
    %3158 = vmatprep.subr.mxu0 %v1936
    %3159 = vmatpush1.msra.mxu0 %v1935
    %3160 = vmatprep.subr.mxu0 %v1942
    %3161 = vmatpush1.msra.mxu0 %v1941
    %3162 = vmatprep.subr.mxu0 %v1948
    %3163 = vmatpush1.msra.mxu0 %v1947
    %3164 = vmatprep.subr.mxu0 %v1954
    %3165 = vmatpush1.msra.mxu0 %v1953
    %3166 = vmatprep.subr.mxu0 %v1960
    %3167 = vmatpush1.msra.mxu0 %v1959
    %3168 = vmatprep.subr.mxu0 %v1966
    %3169 = vmatpush1.msra.mxu0 %v1965
    %3170 = vmatprep.subr.mxu0 %v1972
    %3171 = vmatpush1.msra.mxu0 %v1971
    %3172 = vmatprep.subr.mxu0 %v1978
    %3173 = vmatpush1.msra.mxu0 %v1977
    %3174 = vmatprep.subr.mxu0 %v1984
    %3175 = vmatpush1.msra.mxu0 %v1983
    %3176 = vmatprep.subr.mxu0 %v1990
    %3177 = vmatpush1.msra.mxu0 %v1989
    %3178 = vmatprep.subr.mxu0 %v1996
    %3179 = vmatpush1.msra.mxu0 %v1995
    %3180 = vmatprep.subr.mxu0 %v2002
    %3181 = vmatpush1.msra.mxu0 %v2001
    %3182 = vmatprep.subr.mxu0 %v2008
    %3183 = vmatpush1.msra.mxu0 %v2007
    %3184 = vmatprep.subr.mxu0 %v2014
    %3185 = vmatpush1.msra.mxu0 %v2013
    %3186 = vmatprep.subr.mxu0 %v2020
    %3187 = vmatpush1.msra.mxu0 %v2019
    %3188 = vmatprep.subr.mxu0 %v2026
    %3189 = vmatpush1.msra.mxu0 %v2025
    %3190 = vmatprep.subr.mxu0 %v2032
    %3191 = vmatpush1.msra.mxu0 %v2031
    %3192 = vmatprep.subr.mxu0 %v2038
    %3193 = vmatpush1.msra.mxu0 %v2037
    %3194 = vmatprep.subr.mxu0 %v2044
    %3195 = vmatpush1.msra.mxu0 %v2043
    %3196 = vmatprep.subr.mxu0 %v2050
    %3197 = vmatpush1.msra.mxu0 %v2049
    %3198 = vmatprep.subr.mxu0 %v2056
    %3199 = vmatpush1.msra.mxu0 %v2055
    %3200 = vmatprep.subr.mxu0 %v2062
    %3201 = vmatpush1.msra.mxu0 %v2061
    %3202 = vmatprep.subr.mxu0 %v2068
    %3203 = vmatpush1.msra.mxu0 %v2067
    %3204 = vmatprep.subr.mxu0 %v2074
    %3205 = vmatpush1.msra.mxu0 %v2073
    %3206 = vmatprep.subr.mxu0 %v2080
    %3207 = vmatpush1.msra.mxu0 %v2079
    %3208 = vmatprep.subr.mxu0 %v2086
    %3209 = vmatpush1.msra.mxu0 %v2085
    %3210 = vmatprep.subr.mxu0 %v2092
    %3211 = vmatpush1.msra.mxu0 %v2091
    %3212 = vmatprep.mubr.f32.mxu0 %v1704
    %3213 = vmatmul.mubr.f32.gmra.mrb[0].mxu0 %v1703
    %v3214 = vpop.f32.mrb[0].mxu0
    %v3215 = vadd.f32 %v3144, %v3214
    %v3216 = vpop.f32.mrb[0].mxu0
    %v3217 = vadd.f32 %v3146, %v3216
    %3218 = vdwg.mxu0
    %3219 = vmatprep.subr.mxu0 %v2098
    %3220 = vmatpush1.msra.mxu0 %v2097
    %3221 = vmatprep.subr.mxu0 %v2104
    %3222 = vmatpush1.msra.mxu0 %v2103
    %3223 = vmatprep.subr.mxu0 %v2110
    %3224 = vmatpush1.msra.mxu0 %v2109
    %3225 = vmatprep.subr.mxu0 %v2116
    %3226 = vmatpush1.msra.mxu0 %v2115
    %3227 = vmatprep.subr.mxu0 %v2122
    %3228 = vmatpush1.msra.mxu0 %v2121
    %3229 = vmatprep.subr.mxu0 %v2128
    %3230 = vmatpush1.msra.mxu0 %v2127
    %3231 = vmatprep.subr.mxu0 %v2134
    %3232 = vmatpush1.msra.mxu0 %v2133
    %3233 = vmatprep.subr.mxu0 %v2140
    %3234 = vmatpush1.msra.mxu0 %v2139
    %3235 = vmatprep.subr.mxu0 %v2146
    %3236 = vmatpush1.msra.mxu0 %v2145
    %3237 = vmatprep.subr.mxu0 %v2152
    %3238 = vmatpush1.msra.mxu0 %v2151
    %3239 = vmatprep.subr.mxu0 %v2158
    %3240 = vmatpush1.msra.mxu0 %v2157
    %3241 = vmatprep.subr.mxu0 %v2164
    %3242 = vmatpush1.msra.mxu0 %v2163
    %3243 = vmatprep.subr.mxu0 %v2170
    %3244 = vmatpush1.msra.mxu0 %v2169
    %3245 = vmatprep.subr.mxu0 %v2176
    %3246 = vmatpush1.msra.mxu0 %v2175
    %3247 = vmatprep.subr.mxu0 %v2182
    %3248 = vmatpush1.msra.mxu0 %v2181
    %3249 = vmatprep.subr.mxu0 %v2188
    %3250 = vmatpush1.msra.mxu0 %v2187
    %3251 = vmatprep.subr.mxu0 %v2194
    %3252 = vmatpush1.msra.mxu0 %v2193
    %3253 = vmatprep.subr.mxu0 %v2200
    %3254 = vmatpush1.msra.mxu0 %v2199
    %3255 = vmatprep.subr.mxu0 %v2206
    %3256 = vmatpush1.msra.mxu0 %v2205
    %3257 = vmatprep.subr.mxu0 %v2212
    %3258 = vmatpush1.msra.mxu0 %v2211
    %3259 = vmatprep.subr.mxu0 %v2218
    %3260 = vmatpush1.msra.mxu0 %v2217
    %3261 = vmatprep.subr.mxu0 %v2224
    %3262 = vmatpush1.msra.mxu0 %v2223
    %3263 = vmatprep.subr.mxu0 %v2230
    %3264 = vmatpush1.msra.mxu0 %v2229
    %3265 = vmatprep.subr.mxu0 %v2236
    %3266 = vmatpush1.msra.mxu0 %v2235
    %3267 = vmatprep.subr.mxu0 %v2242
    %3268 = vmatpush1.msra.mxu0 %v2241
    %3269 = vmatprep.subr.mxu0 %v2248
    %3270 = vmatpush1.msra.mxu0 %v2247
    %3271 = vmatprep.subr.mxu0 %v2254
    %3272 = vmatpush1.msra.mxu0 %v2253
    %3273 = vmatprep.subr.mxu0 %v2260
    %3274 = vmatpush1.msra.mxu0 %v2259
    %3275 = vmatprep.subr.mxu0 %v2266
    %3276 = vmatpush1.msra.mxu0 %v2265
    %3277 = vmatprep.subr.mxu0 %v2272
    %3278 = vmatpush1.msra.mxu0 %v2271
    %3279 = vmatprep.subr.mxu0 %v2278
    %3280 = vmatpush1.msra.mxu0 %v2277
    %3281 = vmatprep.subr.mxu0 %v2284
    %3282 = vmatpush1.msra.mxu0 %v2283
    %3283 = vmatprep.mubr.f32.mxu0 %v1706
    %3284 = vmatmul.mubr.f32.gmra.mrb[0].mxu0 %v1705
    %v3285 = vpop.f32.mrb[0].mxu0
    %v3286 = vadd.f32 %v3215, %v3285
    %v3287 = vpop.f32.mrb[0].mxu0
    %v3288 = vadd.f32 %v3217, %v3287
    %3289 = vdwg.mxu0
    %3290 = vmatprep.subr.mxu0 %v2290
    %3291 = vmatpush1.msra.mxu0 %v2289
    %3292 = vmatprep.subr.mxu0 %v2296
    %3293 = vmatpush1.msra.mxu0 %v2295
    %3294 = vmatprep.subr.mxu0 %v2302
    %3295 = vmatpush1.msra.mxu0 %v2301
    %3296 = vmatprep.subr.mxu0 %v2308
    %3297 = vmatpush1.msra.mxu0 %v2307
    %3298 = vmatprep.subr.mxu0 %v2314
    %3299 = vmatpush1.msra.mxu0 %v2313
    %3300 = vmatprep.subr.mxu0 %v2320
    %3301 = vmatpush1.msra.mxu0 %v2319
    %3302 = vmatprep.subr.mxu0 %v2326
    %3303 = vmatpush1.msra.mxu0 %v2325
    %3304 = vmatprep.subr.mxu0 %v2332
    %3305 = vmatpush1.msra.mxu0 %v2331
    %3306 = vmatprep.subr.mxu0 %v2338
    %3307 = vmatpush1.msra.mxu0 %v2337
    %3308 = vmatprep.subr.mxu0 %v2344
    %3309 = vmatpush1.msra.mxu0 %v2343
    %3310 = vmatprep.subr.mxu0 %v2350
    %3311 = vmatpush1.msra.mxu0 %v2349
    %3312 = vmatprep.subr.mxu0 %v2356
    %3313 = vmatpush1.msra.mxu0 %v2355
    %3314 = vmatprep.subr.mxu0 %v2362
    %3315 = vmatpush1.msra.mxu0 %v2361
    %3316 = vmatprep.subr.mxu0 %v2368
    %3317 = vmatpush1.msra.mxu0 %v2367
    %3318 = vmatprep.subr.mxu0 %v2374
    %3319 = vmatpush1.msra.mxu0 %v2373
    %3320 = vmatprep.subr.mxu0 %v2380
    %3321 = vmatpush1.msra.mxu0 %v2379
    %3322 = vmatprep.subr.mxu0 %v2386
    %3323 = vmatpush1.msra.mxu0 %v2385
    %3324 = vmatprep.subr.mxu0 %v2392
    %3325 = vmatpush1.msra.mxu0 %v2391
    %3326 = vmatprep.subr.mxu0 %v2398
    %3327 = vmatpush1.msra.mxu0 %v2397
    %3328 = vmatprep.subr.mxu0 %v2404
    %3329 = vmatpush1.msra.mxu0 %v2403
    %3330 = vmatprep.subr.mxu0 %v2410
    %3331 = vmatpush1.msra.mxu0 %v2409
    %3332 = vmatprep.subr.mxu0 %v2416
    %3333 = vmatpush1.msra.mxu0 %v2415
    %3334 = vmatprep.subr.mxu0 %v2422
    %3335 = vmatpush1.msra.mxu0 %v2421
    %3336 = vmatprep.subr.mxu0 %v2428
    %3337 = vmatpush1.msra.mxu0 %v2427
    %3338 = vmatprep.subr.mxu0 %v2434
    %3339 = vmatpush1.msra.mxu0 %v2433
    %3340 = vmatprep.subr.mxu0 %v2440
    %3341 = vmatpush1.msra.mxu0 %v2439
    %3342 = vmatprep.subr.mxu0 %v2446
    %3343 = vmatpush1.msra.mxu0 %v2445
    %3344 = vmatprep.subr.mxu0 %v2452
    %3345 = vmatpush1.msra.mxu0 %v2451
    %3346 = vmatprep.subr.mxu0 %v2458
    %3347 = vmatpush1.msra.mxu0 %v2457
    %3348 = vmatprep.subr.mxu0 %v2464
    %3349 = vmatpush1.msra.mxu0 %v2463
    %3350 = vmatprep.subr.mxu0 %v2470
    %3351 = vmatpush1.msra.mxu0 %v2469
    %3352 = vmatprep.subr.mxu0 %v2476
    %3353 = vmatpush1.msra.mxu0 %v2475
    %3354 = vmatprep.mubr.f32.mxu0 %v1708
    %3355 = vmatmul.mubr.f32.gmra.mrb[0].mxu0 %v1707
    %v3356 = vpop.f32.mrb[0].mxu0
    %v3357 = vadd.f32 %v3286, %v3356
    %v3358 = vpop.f32.mrb[0].mxu0
    %v3359 = vadd.f32 %v3288, %v3358
    %3360 = vdwg.mxu0
    %v3361 = vtanh.pop %v2789
    %v3362 = vtanh.pop %v2791
    %v3363 = vtanh.pop %v3073
    %v3364 = vtanh.pop %v3075
    %v3365 = vtanh.pop %v3357
    %v3366 = vtanh.pop %v3359
    %v3373 = vcombine.low %v3361, %v3362
    %v3374 = vcombine.low %v3363, %v3364
    %v3376 = vunpack.c.l.s4 1983009808
    %v3377 = vunpack.c.0.s8 %v3376
    %v3378 = vlaneseq
    %v3379 = vshrl.u32 %v3378, 7
    %v3380 = vsub.s32 %v3377, %v3379
    %v3381 = vrot.slane %v3373, %v3380
    %v3383 = vunpack.c.l.s4 1983009808
    %v3384 = vunpack.c.0.s8 %v3383
    %v3385 = vlaneseq
    %v3386 = vshrl.u32 %v3385, 7
    %v3387 = vsub.s32 %v3384, %v3386
    %v3388 = vrot.slane %v3374, %v3387
    %v3389 = vcombine.low %v3381, %v3388
    %v3390 = vcombine.low %v3365, %v3366
    %v3392 = vunpack.c.l.s4 1983009808
    %v3393 = vunpack.c.0.s8 %v3392
    %v3394 = vlaneseq
    %v3395 = vshrl.u32 %v3394, 7
    %v3396 = vsub.s32 %v3393, %v3395
    %v3397 = vrot.slane %v3390, %v3396
    %3400 = vst [vmem:[%s16] sm:$0xff] %v3389
    %3401 = vst [vmem:[%s16 + $0x8] sm:$0xf] %v3397
    // Predicated region
    $region118: #{vae_forward.1} parent=1 // pred_check
      _
    $region119: #{vae_forward.1} parent=1 // pred_check_branch
      %3403 = sbr.rel (0) target = $region121
    $region120: #{vae_forward.1} parent=1 // pred_region
      _
    $region121: #{vae_forward.1} parent=1 // pred_fallthru
      _
    // Predicated region
    $region122: #{vae_forward.1} parent=1 // pred_check
      _
    $region123: #{vae_forward.1} parent=1 // pred_check_branch
      %3405 = sbr.rel (0) target = $region125
    $region124: #{vae_forward.1} parent=1 // pred_region
      %s3407 = ssub.s32 32, 32
      %3408 = vsyncadd [#allocation4], %s3407
      %s3410 = sshll.u32 [#allocation23], 4
      %s3411 = int_to_ptr.vmem [resolvable:$true] %s3410
      %3413 = dma.vmem_to_hbm [thread:$0]  %s3411, 32, %s17, [#allocation4]
    $region125: #{vae_forward.1} parent=1 // pred_fallthru
      _
    // Predicated region
    $region126: #{vae_forward.1} parent=1 // pred_check
      _
    $region127: #{vae_forward.1} parent=1 // pred_check_branch
      %3415 = sbr.rel (0) target = $region129
    $region128: #{vae_forward.1} parent=1 // pred_region
      %s3417 = ssub.s32 32, 32
      %3418 = vsyncadd [#allocation25], %s3417
      %s3420 = sshll.u32 [#allocation24], 4
      %s3421 = int_to_ptr.vmem [resolvable:$true] %s3420
      %3423 = dma.vmem_to_hbm [thread:$0]  %s3421, 32, %s18, [#allocation25]
    $region129: #{vae_forward.1} parent=1 // pred_fallthru
      _
    // Predicated region
    $region130: #{vae_forward.1} parent=1 // pred_check
      _
    $region131: #{vae_forward.1} parent=1 // pred_check_branch
      %3425 = sbr.rel (0) target = $region133
    $region132: #{vae_forward.1} parent=1 // pred_region
      %s3427 = ssub.s32 32, 32
      %3428 = vsyncadd [#allocation25], %s3427
      %s3430 = sshll.u32 [#allocation26], 4
      %s3431 = int_to_ptr.vmem [resolvable:$true] %s3430
      %3433 = dma.vmem_to_hbm [thread:$0]  %s3431, 32, %s19, [#allocation25]
    $region133: #{vae_forward.1} parent=1 // pred_fallthru
      _
    // Predicated region
    $region134: #{vae_forward.1} parent=1 // pred_check
      _
    $region135: #{vae_forward.1} parent=1 // pred_check_branch
      %3435 = sbr.rel (0) target = $region137
    $region136: #{vae_forward.1} parent=1 // pred_region
      _
    $region137: #{vae_forward.1} parent=1 // pred_fallthru
      _
    // Predicated region
    $region138: #{vae_forward.1} parent=1 // pred_check
      _
    $region139: #{vae_forward.1} parent=1 // pred_check_branch
      %3437 = sbr.rel (0) target = $region141
    $region140: #{vae_forward.1} parent=1 // pred_region
      %3438 = dma.done [#allocation4], 32
    $region141: #{vae_forward.1} parent=1 // pred_fallthru
      _
    // Predicated region
    $region142: #{vae_forward.1} parent=1 // pred_check
      _
    $region143: #{vae_forward.1} parent=1 // pred_check_branch
      %3440 = sbr.rel (0) target = $region145
    $region144: #{vae_forward.1} parent=1 // pred_region
      %3441 = dma.done [#allocation25], 32
    $region145: #{vae_forward.1} parent=1 // pred_fallthru
      _
    // Predicated region
    $region146: #{vae_forward.1} parent=1 // pred_check
      _
    $region147: #{vae_forward.1} parent=1 // pred_check_branch
      %3443 = sbr.rel (0) target = $region149
    $region148: #{vae_forward.1} parent=1 // pred_region
      %3444 = dma.done [#allocation25], 32
    $region149: #{vae_forward.1} parent=1 // pred_fallthru
      _
    %3445 = vsyncpa [#allocation3], 1
    %3446 = vsyncpa [#allocation6], 1
    %3447 = vsyncpa [#allocation9], 1
    %3448 = vsyncpa [#allocation12], 1
    %3449 = vsyncpa [#allocation15], 1
    %3450 = vsyncpa [#allocation18], 1
    %3451 = vsyncpa [#allocation21], 1
    %3452 = vsyncpa [#allocation4], 1
    %3453 = vsyncpa [#allocation25], 1

</llo_original>
